<compile_context>
chip_gen: v7x
topology: tpu7x:2x2x1
jax: 0.10.0
libtpu: 0.0.40
codegen_flags: <defaults>
</compile_context>

<pallas_src>
import functools

import jax
import jax.numpy as jnp
import numpy as np
from jax import lax
from jax.experimental import pallas as pl
from jax.experimental.pallas import tpu as pltpu

EPS = 1e-5


# ----------------------------- Pallas kernels ------------------------------ #

def _conv1x1_bn_relu_kernel(x_ref, w_ref, b_ref, o_ref):
    """1x1 conv as channel matmul (BN scale pre-folded into W) + shift + ReLU."""
    acc = jnp.dot(x_ref[...], w_ref[...], preferred_element_type=jnp.float32)
    o_ref[...] = jnp.maximum(acc + b_ref[...], 0.0).astype(o_ref.dtype)


def _tail_ds_kernel(p_ref, w2_ref, b2_ref, w3_ref, b3_ref,
                    xs_ref, wds_ref, bds_ref, o_ref):
    """Fused conv2(3x3, K=9*Cn) + bn2 + relu + conv3 + bn3 + downsample + add + relu."""
    t = jnp.dot(p_ref[...], w2_ref[...], preferred_element_type=jnp.float32) + b2_ref[...]
    t = jnp.maximum(t, 0.0).astype(w3_ref.dtype)          # stays in VMEM/vregs
    main = jnp.dot(t, w3_ref[...], preferred_element_type=jnp.float32) + b3_ref[...]
    ident = jnp.dot(xs_ref[...], wds_ref[...],
                    preferred_element_type=jnp.float32) + bds_ref[...]
    o_ref[...] = jnp.maximum(main + ident, 0.0).astype(o_ref.dtype)


def _tail_id_kernel(p_ref, w2_ref, b2_ref, w3_ref, b3_ref, id_ref, o_ref):
    """Fused conv2 + bn2 + relu + conv3 + bn3 + residual add (identity) + relu."""
    t = jnp.dot(p_ref[...], w2_ref[...], preferred_element_type=jnp.float32) + b2_ref[...]
    t = jnp.maximum(t, 0.0).astype(w3_ref.dtype)
    main = jnp.dot(t, w3_ref[...], preferred_element_type=jnp.float32) + b3_ref[...]
    o_ref[...] = jnp.maximum(main + id_ref[...].astype(jnp.float32), 0.0).astype(o_ref.dtype)


# ------------------------------ host helpers ------------------------------- #

def _fold_bn(bn):
    scale = bn["weight"] / jnp.sqrt(bn["running_var"] + EPS)
    shift = bn["bias"] - bn["running_mean"] * scale
    return scale, shift


def _row_tile(m, target):
    """Largest row tile <= target (multiple of 8), or the full extent if small."""
    target = max(8, (int(target) // 8) * 8)
    return m if m <= target else target


def _compiler_params(step_bytes):
    """Parallel row grid + explicit VMEM budget (double-buffered tiles + margin)."""
    need = 2 * int(step_bytes) + (4 << 20)
    return pltpu.CompilerParams(
        dimension_semantics=("parallel",),
        vmem_limit_bytes=int(min(max(need, 16 << 20), 64 << 20)),  # 64 MiB cap for v7x
    )


def _conv1x1_bn_relu(x2d, w, shift, *, out_dtype, row_tile):
    m, cin = x2d.shape
    cout = w.shape[1]
    tile = _row_tile(m, row_tile)
    isz = x2d.dtype.itemsize
    step = (tile * cin * isz + tile * cout * jnp.dtype(out_dtype).itemsize
            + cin * cout * isz + cout * 4)
    return pl.pallas_call(
        _conv1x1_bn_relu_kernel,
        out_shape=jax.ShapeDtypeStruct((m, cout), out_dtype),
        grid=(pl.cdiv(m, tile),),
        in_specs=[pl.BlockSpec((tile, cin), lambda i: (i, 0)),
                  pl.BlockSpec((cin, cout), lambda i: (0, 0)),
                  pl.BlockSpec((1, cout), lambda i: (0, 0))],
        out_specs=pl.BlockSpec((tile, cout), lambda i: (i, 0)),
        compiler_params=_compiler_params(step),
    )(x2d, w, shift.reshape(1, cout))


# ------------------------------ public wrapper ------------------------------ #

def bottleneck_pallas(x_nchw, params, stride, *,
                      compute_dtype=jnp.float32, row_tile=512):
    N, Cin, H, W = x_nchw.shape
    x_nhwc = jnp.transpose(x_nchw, (0, 2, 3, 1))
    M = N * H * W
    isz = jnp.dtype(compute_dtype).itemsize

    # ---- conv1 (1x1) + bn1 + relu (BN scale folded into W) ----
    s1, b1 = _fold_bn(params["bn1"])
    w1 = (params["conv1_w"][:, :, 0, 0].T * s1[None, :]).astype(compute_dtype)
    Cn = w1.shape[1]
    x1 = _conv1x1_bn_relu(x_nhwc.reshape(M, Cin).astype(compute_dtype),
                          w1, b1, out_dtype=compute_dtype, row_tile=row_tile)
    x1 = x1.reshape(N, H, W, Cn)

    # ---- im2col for conv2: single (M2, 9*Cn) slab, one K=9*Cn matmul ----
    Ho = (H + 2 - 3) // stride + 1
    Wo = (W + 2 - 3) // stride + 1
    M2 = N * Ho * Wo
    x1p = jnp.pad(x1, ((0, 0), (1, 1), (1, 1), (0, 0)))
    taps = [x1p[:, dy:dy + Ho * stride:stride, dx:dx + Wo * stride:stride, :]
            for dy in range(3) for dx in range(3)]
    patches = jnp.concatenate(taps, axis=-1).reshape(M2, 9 * Cn)

    s2, b2 = _fold_bn(params["bn2"])
    w2 = (jnp.transpose(params["conv2_w"], (2, 3, 1, 0)).reshape(9 * Cn, Cn)
          * s2[None, :]).astype(compute_dtype)

    s3, b3 = _fold_bn(params["bn3"])
    Cout = params["conv3_w"].shape[0]
    w3 = (params["conv3_w"][:, :, 0, 0].T * s3[None, :]).astype(compute_dtype)

    tile2 = _row_tile(M2, row_tile)
    grid2 = (pl.cdiv(M2, tile2),)

    def row_spec(c):
        return pl.BlockSpec((tile2, c), lambda i: (i, 0))

    def const_spec(shape):
        return pl.BlockSpec(shape, lambda i: (0, 0))

    out_shape = jax.ShapeDtypeStruct((M2, Cout), jnp.float32)

    base_step = (tile2 * 9 * Cn * isz + tile2 * Cout * 4
                 + (9 * Cn * Cn + Cn * Cout) * isz + (Cn + 2 * Cout) * 4)

    if params.get("ds_w") is not None:
        # ---- fused conv2+bn2+relu + conv3+bn3 + downsample(1x1, stride)+bn + add + relu ----
        sds, bds = _fold_bn(params["bn_ds"])
        wds = (params["ds_w"][:, :, 0, 0].T * sds[None, :]).astype(compute_dtype)
        # TODO(synk): express the stride-2 subsample via the BlockSpec index_map instead
        # of a wrapper-side strided slice to avoid one extra HBM pass.
        xs = x_nhwc[:, ::stride, ::stride, :].reshape(M2, Cin).astype(compute_dtype)
        step = base_step + tile2 * Cin * isz + Cin * Cout * isz
        y = pl.pallas_call(
            _tail_ds_kernel,
            out_shape=out_shape,
            grid=grid2,
            in_specs=[row_spec(9 * Cn), const_spec((9 * Cn, Cn)), const_spec((1, Cn)),
                      const_spec((Cn, Cout)), const_spec((1, Cout)),
                      row_spec(Cin), const_spec((Cin, Cout)), const_spec((1, Cout))],
            out_specs=row_spec(Cout),
            compiler_params=_compiler_params(step),
        )(patches, w2, b2.reshape(1, Cn), w3, b3.reshape(1, Cout),
          xs, wds, bds.reshape(1, Cout))
    else:
        assert stride == 1 and Cin == Cout, \
            "identity (no-downsample) path requires stride == 1 and Cin == Cout"
        identity = x_nhwc.reshape(M2, Cout)  # kept f32 for the residual add
        step = base_step + tile2 * Cout * 4
        y = pl.pallas_call(
            _tail_id_kernel,
            out_shape=out_shape,
            grid=grid2,
            in_specs=[row_spec(9 * Cn), const_spec((9 * Cn, Cn)), const_spec((1, Cn)),
                      const_spec((Cn, Cout)), const_spec((1, Cout)),
                      row_spec(Cout)],
            out_specs=row_spec(Cout),
            input_output_aliases={5: 0},   # residual buffer reused in place
            compiler_params=_compiler_params(step),
        )(patches, w2, b2.reshape(1, Cn), w3, b3.reshape(1, Cout), identity)

    y = y.reshape(N, Ho, Wo, Cout)
    return jnp.transpose(y, (0, 3, 1, 2)).astype(x_nchw.dtype)


# --------------------------- pure-JAX reference ----------------------------- #

def _conv2d_ref(x, w, stride, padding):
    return lax.conv_general_dilated(
        x, w, (stride, stride), [(padding, padding)] * 2,
        dimension_numbers=("NCHW", "OIHW", "NCHW"))


def _fbn_ref(x, bn):
    scale = bn["weight"] / jnp.sqrt(bn["running_var"] + EPS)
    shift = bn["bias"] - bn["running_mean"] * scale
    return x * scale[None, :, None, None] + shift[None, :, None, None]


def bottleneck_ref(x, params, stride):
    identity = x
    y = _fbn_ref(_conv2d_ref(x, params["conv1_w"], 1, 0), params["bn1"])
    y = jnp.maximum(y, 0.0)
    y = _fbn_ref(_conv2d_ref(y, params["conv2_w"], stride, 1), params["bn2"])
    y = jnp.maximum(y, 0.0)
    y = _fbn_ref(_conv2d_ref(y, params["conv3_w"], 1, 0), params["bn3"])
    if params.get("ds_w") is not None:
        identity = _fbn_ref(_conv2d_ref(x, params["ds_w"], stride, 0), params["bn_ds"])
    return jnp.maximum(y + identity, 0.0)


# ----------------------------------- main ----------------------------------- #

def _init_params(key, in_cha, neck_cha, out_cha, stride):
    ks = jax.random.split(key, 16)

    def bn(k, c):
        k1, k2, k3, k4 = jax.random.split(k, 4)
        return {
            "weight": 1.0 + 0.1 * jax.random.normal(k1, (c,), jnp.float32),
            "bias": 0.1 * jax.random.normal(k2, (c,), jnp.float32),
            "running_mean": 0.1 * jax.random.normal(k3, (c,), jnp.float32),
            "running_var": 0.5 + jnp.abs(jax.random.normal(k4, (c,), jnp.float32)),
        }

    params = {
        "conv1_w": 0.1 * jax.random.normal(ks[0], (neck_cha, in_cha, 1, 1), jnp.float32),
        "bn1": bn(ks[1], neck_cha),
        "conv2_w": 0.1 * jax.random.normal(ks[2], (neck_cha, neck_cha, 3, 3), jnp.float32),
        "bn2": bn(ks[3], neck_cha),
        "conv3_w": 0.1 * jax.random.normal(ks[4], (out_cha, neck_cha, 1, 1), jnp.float32),
        "bn3": bn(ks[5], out_cha),
        "ds_w": None,
    }
    if in_cha != out_cha or stride != 1:
        params["ds_w"] = 0.1 * jax.random.normal(ks[6], (out_cha, in_cha, 1, 1), jnp.float32)
        params["bn_ds"] = bn(ks[7], out_cha)
    return params


if __name__ == "__main__":
    key = jax.random.PRNGKey(0)
    kx1, kp1, kx2, kp2 = jax.random.split(key, 4)

    # --- case 1: stride-2 bottleneck with downsample branch (f32 compute) ---
    N, in_cha, neck_cha, out_cha = 2, 16, 8, 32
    H = W = 32
    stride = 2
    x = jax.random.normal(kx1, (N, in_cha, H, W), jnp.float32)   # NCHW like PyTorch
    params = _init_params(kp1, in_cha, neck_cha, out_cha, stride)

    fwd = jax.jit(functools.partial(bottleneck_pallas, stride=stride))
    out = jax.block_until_ready(fwd(x, params))
    ref = jax.block_until_ready(bottleneck_ref(x, params, stride))
    assert out.shape == ref.shape == (N, out_cha, H // stride, W // stride), out.shape
    np.testing.assert_allclose(np.asarray(out), np.asarray(ref), rtol=1e-4, atol=1e-4)

    # --- case 1b: bf16 MXU inputs (v6e/v7x path), f32 accumulation/epilogue ---
    fwd_bf16 = jax.jit(functools.partial(
        bottleneck_pallas, stride=stride, compute_dtype=jnp.bfloat16))
    out_bf16 = jax.block_until_ready(fwd_bf16(x, params))
    np.testing.assert_allclose(np.asarray(out_bf16), np.asarray(ref), rtol=1e-1, atol=1e-1)

    # --- case 2: stride-1 identity path (no downsample), residual aliased in place ---
    N2, cha2, neck2 = 2, 32, 8
    H2 = W2 = 16
    x2 = jax.random.normal(kx2, (N2, cha2, H2, W2), jnp.float32)
    params2 = _init_params(kp2, cha2, neck2, cha2, 1)
    fwd2 = jax.jit(functools.partial(bottleneck_pallas, stride=1))
    out2 = jax.block_until_ready(fwd2(x2, params2))
    ref2 = jax.block_until_ready(bottleneck_ref(x2, params2, 1))
    np.testing.assert_allclose(np.asarray(out2), np.asarray(ref2), rtol=1e-4, atol=1e-4)

    print("KERNEL_OK")
</pallas_src>

<mosaic_0001>
module attributes {stable_mosaic.version = 11 : i64} {
  func.func @_conv1x1_bn_relu_kernel(%arg0: i32, %arg1: memref<512x16xf32, #tpu.memory_space<vmem>>, %arg2: memref<16x8xf32, #tpu.memory_space<vmem>>, %arg3: memref<1x8xf32, #tpu.memory_space<vmem>>, %arg4: memref<512x8xf32, #tpu.memory_space<vmem>>) attributes {dimension_semantics = [#tpu.dimension_semantics<parallel>], iteration_bounds = array<i64: 4>, scalar_prefetch = 0 : i64, scratch_operands = 0 : i64, tpu.core_type = #tpu.core_type<tc>, window_params = [{transform_indices = @transform_0, window_bounds = array<i64: 512, 16>}, {pipeline_mode = #tpu.pipeline_mode<synchronous>, transform_indices = @transform_1, window_bounds = array<i64: 16, 8>}, {pipeline_mode = #tpu.pipeline_mode<synchronous>, transform_indices = @transform_2, window_bounds = array<i64: 1, 8>}, {transform_indices = @transform_3, window_bounds = array<i64: 512, 8>}]} {
    %c0 = arith.constant 0 : index
    %c0_0 = arith.constant 0 : index
    %0 = vector.load %arg1[%c0, %c0_0] : memref<512x16xf32, #tpu.memory_space<vmem>>, vector<512x16xf32>
    %c0_1 = arith.constant 0 : index
    %c0_2 = arith.constant 0 : index
    %1 = vector.load %arg2[%c0_1, %c0_2] : memref<16x8xf32, #tpu.memory_space<vmem>>, vector<16x8xf32>
    %cst = arith.constant dense<0.000000e+00> : vector<512x8xf32>
    %2 = tpu.matmul %0, %1, %cst {dimension_numbers = #tpu.dot_dimension_numbers<[1], [0], [0], [1], [0, 0, 1, 1], [], []>} : vector<512x16xf32>, vector<16x8xf32>, vector<512x8xf32> -> vector<512x8xf32>
    %c0_3 = arith.constant 0 : index
    %c0_4 = arith.constant 0 : index
    %3 = vector.load %arg3[%c0_3, %c0_4] : memref<1x8xf32, #tpu.memory_space<vmem>>, vector<1x8xf32>
    %4 = vector.broadcast %3 : vector<1x8xf32> to vector<512x8xf32>
    %5 = arith.addf %2, %4 : vector<512x8xf32>
    %cst_5 = arith.constant 0.000000e+00 : f32
    %6 = vector.broadcast %cst_5 : f32 to vector<512x8xf32>
    %7 = arith.maximumf %5, %6 : vector<512x8xf32>
    %c0_6 = arith.constant 0 : index
    %c0_7 = arith.constant 0 : index
    %8 = vector.load %arg4[%c0_6, %c0_7] : memref<512x8xf32, #tpu.memory_space<vmem>>, vector<512x8xf32>
    tpu.vector_store %arg4[%c0_6, %c0_7], %7 {strides = array<i32>} : memref<512x8xf32, #tpu.memory_space<vmem>>, vector<512x8xf32>,
    return
  }
  func.func @transform_0(%arg0: i32) -> (i32, i32) {
    %c0_i32 = arith.constant 0 : i32
    %c0_i32_0 = arith.constant 0 : i32
    return %arg0, %c0_i32 : i32, i32
  }
  func.func @transform_1(%arg0: i32) -> (i32, i32) {
    %c0_i32 = arith.constant 0 : i32
    %c0_i32_0 = arith.constant 0 : i32
    %c0_i32_1 = arith.constant 0 : i32
    return %c0_i32, %c0_i32_0 : i32, i32
  }
  func.func @transform_2(%arg0: i32) -> (i32, i32) {
    %c0_i32 = arith.constant 0 : i32
    %c0_i32_0 = arith.constant 0 : i32
    %c0_i32_1 = arith.constant 0 : i32
    return %c0_i32, %c0_i32_0 : i32, i32
  }
  func.func @transform_3(%arg0: i32) -> (i32, i32) {
    %c0_i32 = arith.constant 0 : i32
    %c0_i32_0 = arith.constant 0 : i32
    return %arg0, %c0_i32 : i32, i32
  }
}

module attributes {stable_mosaic.version = 11 : i64} {
  func.func @_tail_ds_kernel(%arg0: i32, %arg1: memref<512x72xf32, #tpu.memory_space<vmem>>, %arg2: memref<72x8xf32, #tpu.memory_space<vmem>>, %arg3: memref<1x8xf32, #tpu.memory_space<vmem>>, %arg4: memref<8x32xf32, #tpu.memory_space<vmem>>, %arg5: memref<1x32xf32, #tpu.memory_space<vmem>>, %arg6: memref<512x16xf32, #tpu.memory_space<vmem>>, %arg7: memref<16x32xf32, #tpu.memory_space<vmem>>, %arg8: memref<1x32xf32, #tpu.memory_space<vmem>>, %arg9: memref<512x32xf32, #tpu.memory_space<vmem>>) attributes {dimension_semantics = [#tpu.dimension_semantics<parallel>], iteration_bounds = array<i64: 1>, scalar_prefetch = 0 : i64, scratch_operands = 0 : i64, tpu.core_type = #tpu.core_type<tc>, window_params = [{transform_indices = @transform_0, window_bounds = array<i64: 512, 72>}, {pipeline_mode = #tpu.pipeline_mode<synchronous>, transform_indices = @transform_1, window_bounds = array<i64: 72, 8>}, {pipeline_mode = #tpu.pipeline_mode<synchronous>, transform_indices = @transform_2, window_bounds = array<i64: 1, 8>}, {pipeline_mode = #tpu.pipeline_mode<synchronous>, transform_indices = @transform_3, window_bounds = array<i64: 8, 32>}, {pipeline_mode = #tpu.pipeline_mode<synchronous>, transform_indices = @transform_4, window_bounds = array<i64: 1, 32>}, {transform_indices = @transform_5, window_bounds = array<i64: 512, 16>}, {pipeline_mode = #tpu.pipeline_mode<synchronous>, transform_indices = @transform_6, window_bounds = array<i64: 16, 32>}, {pipeline_mode = #tpu.pipeline_mode<synchronous>, transform_indices = @transform_7, window_bounds = array<i64: 1, 32>}, {transform_indices = @transform_8, window_bounds = array<i64: 512, 32>}]} {
    %c0 = arith.constant 0 : index
    %c0_0 = arith.constant 0 : index
    %0 = vector.load %arg1[%c0, %c0_0] : memref<512x72xf32, #tpu.memory_space<vmem>>, vector<512x72xf32>
    %c0_1 = arith.constant 0 : index
    %c0_2 = arith.constant 0 : index
    %1 = vector.load %arg2[%c0_1, %c0_2] : memref<72x8xf32, #tpu.memory_space<vmem>>, vector<72x8xf32>
    %cst = arith.constant dense<0.000000e+00> : vector<512x8xf32>
    %2 = tpu.matmul %0, %1, %cst {dimension_numbers = #tpu.dot_dimension_numbers<[1], [0], [0], [1], [0, 0, 1, 1], [], []>} : vector<512x72xf32>, vector<72x8xf32>, vector<512x8xf32> -> vector<512x8xf32>
    %c0_3 = arith.constant 0 : index
    %c0_4 = arith.constant 0 : index
    %3 = vector.load %arg3[%c0_3, %c0_4] : memref<1x8xf32, #tpu.memory_space<vmem>>, vector<1x8xf32>
    %4 = vector.broadcast %3 : vector<1x8xf32> to vector<512x8xf32>
    %5 = arith.addf %2, %4 : vector<512x8xf32>
    %cst_5 = arith.constant 0.000000e+00 : f32
    %6 = vector.broadcast %cst_5 : f32 to vector<512x8xf32>
    %7 = arith.maximumf %5, %6 : vector<512x8xf32>
    %c0_6 = arith.constant 0 : index
    %c0_7 = arith.constant 0 : index
    %8 = vector.load %arg4[%c0_6, %c0_7] : memref<8x32xf32, #tpu.memory_space<vmem>>, vector<8x32xf32>
    %cst_8 = arith.constant dense<0.000000e+00> : vector<512x32xf32>
    %9 = tpu.matmul %7, %8, %cst_8 {dimension_numbers = #tpu.dot_dimension_numbers<[1], [0], [0], [1], [0, 0, 1, 1], [], []>} : vector<512x8xf32>, vector<8x32xf32>, vector<512x32xf32> -> vector<512x32xf32>
    %c0_9 = arith.constant 0 : index
    %c0_10 = arith.constant 0 : index
    %10 = vector.load %arg5[%c0_9, %c0_10] : memref<1x32xf32, #tpu.memory_space<vmem>>, vector<1x32xf32>
    %11 = vector.broadcast %10 : vector<1x32xf32> to vector<512x32xf32>
    %12 = arith.addf %9, %11 : vector<512x32xf32>
    %c0_11 = arith.constant 0 : index
    %c0_12 = arith.constant 0 : index
    %13 = vector.load %arg6[%c0_11, %c0_12] : memref<512x16xf32, #tpu.memory_space<vmem>>, vector<512x16xf32>
    %c0_13 = arith.constant 0 : index
    %c0_14 = arith.constant 0 : index
    %14 = vector.load %arg7[%c0_13, %c0_14] : memref<16x32xf32, #tpu.memory_space<vmem>>, vector<16x32xf32>
    %cst_15 = arith.constant dense<0.000000e+00> : vector<512x32xf32>
    %15 = tpu.matmul %13, %14, %cst_15 {dimension_numbers = #tpu.dot_dimension_numbers<[1], [0], [0], [1], [0, 0, 1, 1], [], []>} : vector<512x16xf32>, vector<16x32xf32>, vector<512x32xf32> -> vector<512x32xf32>
    %c0_16 = arith.constant 0 : index
    %c0_17 = arith.constant 0 : index
    %16 = vector.load %arg8[%c0_16, %c0_17] : memref<1x32xf32, #tpu.memory_space<vmem>>, vector<1x32xf32>
    %17 = vector.broadcast %16 : vector<1x32xf32> to vector<512x32xf32>
    %18 = arith.addf %15, %17 : vector<512x32xf32>
    %19 = arith.addf %12, %18 : vector<512x32xf32>
    %cst_18 = arith.constant 0.000000e+00 : f32
    %20 = vector.broadcast %cst_18 : f32 to vector<512x32xf32>
    %21 = arith.maximumf %19, %20 : vector<512x32xf32>
    %c0_19 = arith.constant 0 : index
    %c0_20 = arith.constant 0 : index
    %22 = vector.load %arg9[%c0_19, %c0_20] : memref<512x32xf32, #tpu.memory_space<vmem>>, vector<512x32xf32>
    tpu.vector_store %arg9[%c0_19, %c0_20], %21 {strides = array<i32>} : memref<512x32xf32, #tpu.memory_space<vmem>>, vector<512x32xf32>,
    return
  }
  func.func @transform_0(%arg0: i32) -> (i32, i32) {
    %c0_i32 = arith.constant 0 : i32
    %c0_i32_0 = arith.constant 0 : i32
    return %arg0, %c0_i32 : i32, i32
  }
  func.func @transform_1(%arg0: i32) -> (i32, i32) {
    %c0_i32 = arith.constant 0 : i32
    %c0_i32_0 = arith.constant 0 : i32
    %c0_i32_1 = arith.constant 0 : i32
    return %c0_i32, %c0_i32_0 : i32, i32
  }
  func.func @transform_2(%arg0: i32) -> (i32, i32) {
    %c0_i32 = arith.constant 0 : i32
    %c0_i32_0 = arith.constant 0 : i32
    %c0_i32_1 = arith.constant 0 : i32
    return %c0_i32, %c0_i32_0 : i32, i32
  }
  func.func @transform_3(%arg0: i32) -> (i32, i32) {
    %c0_i32 = arith.constant 0 : i32
    %c0_i32_0 = arith.constant 0 : i32
    %c0_i32_1 = arith.constant 0 : i32
    return %c0_i32, %c0_i32_0 : i32, i32
  }
  func.func @transform_4(%arg0: i32) -> (i32, i32) {
    %c0_i32 = arith.constant 0 : i32
    %c0_i32_0 = arith.constant 0 : i32
    %c0_i32_1 = arith.constant 0 : i32
    return %c0_i32, %c0_i32_0 : i32, i32
  }
  func.func @transform_5(%arg0: i32) -> (i32, i32) {
    %c0_i32 = arith.constant 0 : i32
    %c0_i32_0 = arith.constant 0 : i32
    return %arg0, %c0_i32 : i32, i32
  }
  func.func @transform_6(%arg0: i32) -> (i32, i32) {
    %c0_i32 = arith.constant 0 : i32
    %c0_i32_0 = arith.constant 0 : i32
    %c0_i32_1 = arith.constant 0 : i32
    return %c0_i32, %c0_i32_0 : i32, i32
  }
  func.func @transform_7(%arg0: i32) -> (i32, i32) {
    %c0_i32 = arith.constant 0 : i32
    %c0_i32_0 = arith.constant 0 : i32
    %c0_i32_1 = arith.constant 0 : i32
    return %c0_i32, %c0_i32_0 : i32, i32
  }
  func.func @transform_8(%arg0: i32) -> (i32, i32) {
    %c0_i32 = arith.constant 0 : i32
    %c0_i32_0 = arith.constant 0 : i32
    return %arg0, %c0_i32 : i32, i32
  }
}

</mosaic_0001>

<llo_original>
// kernel: bottleneck_pallas.2
$region0: #{bottleneck_pallas.2}
  #allocation0 [shape = 'u32[]', space=smem, size = 0x4, offset = 0x4, fixed_abs, tag = 'smem constant byte address 0x4 - core index']
  #allocation1 [shape = 'u32[144,128]{1,0:T(1,128)}', space=vmem, size = 0x12000, scoped, tag = 'internal scratch']
  %s0 = inlined_call_operand.vmem [shape: f32[2048,16], index: 0, kind: input, shape index: {}]
  %s1 = inlined_call_operand.vmem [shape: f32[16,8], index: 1, kind: input, shape index: {}]
  %s2 = inlined_call_operand.vmem [shape: f32[1,8], index: 2, kind: input, shape index: {}]
  %s3 = inlined_call_operand.vmem [shape: f32[2048,8], index: 3, kind: output, shape index: {}]
  %s4 = sld [smem:[#allocation0]]
  $region45: #{bottleneck_pallas.2} parent=0
    _
  %s6 = ssub.s32 1, %s4
  %s7 = scalar_select 0, %s6, %s4
  loop: start=0, step=1, limit=6
  $region2: #{bottleneck_pallas.2} parent=0 // loop_pre_header
    _
  $region3: #{bottleneck_pallas.2} parent=0 // loop_header
    %s9 = sphi 0, %s13
    %p10 = scmp.ge.s32.totalorder %s9, 6
    %s19 = sphi 0, %s21
    %s22 = sphi 0, %s19
    %s23 = sphi 0, %s22
    %s39 = sphi 0, %s23
    %s43 = sphi 0, %s43
    %s45 = sphi 0, %s43
    %s46 = sphi 0, %s45
    %s60 = sphi 0, %s46
    %s64 = sphi 0, %s64
    %s66 = sphi 0, %s64
    %s67 = sphi 0, %s66
    %s81 = sphi 0, %s67
    %s87 = sphi 0, %s89
    %s90 = sphi 0, %s87
    %s91 = sphi 0, %s90
    %s107 = sphi 0, %s91
  $region4: #{bottleneck_pallas.2} parent=0 // loop_header_branch
    %12 = sbr.rel (%p10) target = $region8
  $region5: #{bottleneck_pallas.2} parent=0 // loop_body
    %s14 = ssub.s32 %s9, 1
    %s15 = ssub.s32 %s9, 2
    %s16 = sadd.s32 %s9, 1
    %s17 = ssub.s32 %s9, %s16
    %p18 = scmp.eq.s32.totalorder %s17, 0
    %s20 = sadd.s32 %s19, 1
    %s21 = scalar_select %p18, %s19, %s20
    %p24 = pneg %p18
    %p25 = scmp.eq.s32.totalorder %s9, 3
    %p26 = por %p24, %p25
    %p27 = scmp.ne.s32.totalorder %s19, %s22
    %p28 = scmp.eq.s32.totalorder %s9, 0
    %p29 = por %p27, %p28
    %p30 = scmp.ne.s32.totalorder %s19, %s22
    %p31 = scmp.eq.s32.totalorder %s14, 3
    %p32 = por %p30, %p31
    %p33 = scmp.ne.s32.totalorder %s22, %s23
    %p34 = scmp.eq.s32.totalorder %s14, 0
    %p35 = por %p33, %p34
    %p36 = scmp.ne.s32.totalorder %s22, %s23
    %p37 = scmp.eq.s32.totalorder %s15, 3
    %p38 = por %p36, %p37
    %p40 = scmp.ne.s32.totalorder %s23, %s39
    %p41 = scmp.eq.s32.totalorder %s15, 0
    %p42 = por %p40, %p41
    %s44 = sadd.s32 %s43, 1
    %p47 = scmp.eq.s32.totalorder %s9, 3
    %p48 = scmp.ne.s32.totalorder %s43, %s45
    %p49 = scmp.eq.s32.totalorder %s9, 0
    %p50 = por %p48, %p49
    %p51 = scmp.ne.s32.totalorder %s43, %s45
    %p52 = scmp.eq.s32.totalorder %s14, 3
    %p53 = por %p51, %p52
    %p54 = scmp.ne.s32.totalorder %s45, %s46
    %p55 = scmp.eq.s32.totalorder %s14, 0
    %p56 = por %p54, %p55
    %p57 = scmp.ne.s32.totalorder %s45, %s46
    %p58 = scmp.eq.s32.totalorder %s15, 3
    %p59 = por %p57, %p58
    %p61 = scmp.ne.s32.totalorder %s46, %s60
    %p62 = scmp.eq.s32.totalorder %s15, 0
    %p63 = por %p61, %p62
    %s65 = sadd.s32 %s64, 1
    %p68 = scmp.eq.s32.totalorder %s9, 3
    %p69 = scmp.ne.s32.totalorder %s64, %s66
    %p70 = scmp.eq.s32.totalorder %s9, 0
    %p71 = por %p69, %p70
    %p72 = scmp.ne.s32.totalorder %s64, %s66
    %p73 = scmp.eq.s32.totalorder %s14, 3
    %p74 = por %p72, %p73
    %p75 = scmp.ne.s32.totalorder %s66, %s67
    %p76 = scmp.eq.s32.totalorder %s14, 0
    %p77 = por %p75, %p76
    %p78 = scmp.ne.s32.totalorder %s66, %s67
    %p79 = scmp.eq.s32.totalorder %s15, 3
    %p80 = por %p78, %p79
    %p82 = scmp.ne.s32.totalorder %s67, %s81
    %p83 = scmp.eq.s32.totalorder %s15, 0
    %p84 = por %p82, %p83
    %s85 = ssub.s32 %s9, %s16
    %p86 = scmp.eq.s32.totalorder %s85, 0
    %s88 = sadd.s32 %s87, 1
    %s89 = scalar_select %p86, %s87, %s88
    %p92 = pneg %p86
    %p93 = scmp.eq.s32.totalorder %s9, 3
    %p94 = por %p92, %p93
    %p95 = scmp.ne.s32.totalorder %s87, %s90
    %p96 = scmp.eq.s32.totalorder %s9, 0
    %p97 = por %p95, %p96
    %p98 = scmp.ne.s32.totalorder %s87, %s90
    %p99 = scmp.eq.s32.totalorder %s14, 3
    %p100 = por %p98, %p99
    %p101 = scmp.ne.s32.totalorder %s90, %s91
    %p102 = scmp.eq.s32.totalorder %s14, 0
    %p103 = por %p101, %p102
    %p104 = scmp.ne.s32.totalorder %s90, %s91
    %p105 = scmp.eq.s32.totalorder %s15, 3
    %p106 = por %p104, %p105
    %p108 = scmp.ne.s32.totalorder %s91, %s107
    %p109 = scmp.eq.s32.totalorder %s15, 0
    %p110 = por %p108, %p109
    %p111 = scmp.le.s32.totalorder 1, %s9
    %p112 = scmp.lt.s32.totalorder %s9, 5
    %p113 = pnand %p111, %p112
    %p114 = pneg %p113
    // Predicated region
    $region9: #{bottleneck_pallas.2} parent=5 // pred_check
      _
    $region10: #{bottleneck_pallas.2} parent=5 // pred_check_branch
      %116 = sbr.rel (%p113) target = $region12
    $region11: #{bottleneck_pallas.2} parent=5 // pred_region
      %s117 = ssub.s32 %s9, 1
      // Predicated region
      $region13: #{bottleneck_pallas.2} parent=11 // pred_check
        %p118 = pneg %p56
      $region14: #{bottleneck_pallas.2} parent=11 // pred_check_branch
        %120 = sbr.rel (%p118) target = $region16
      $region15: #{bottleneck_pallas.2} parent=11 // pred_region
        _
      $region16: #{bottleneck_pallas.2} parent=11 // pred_fallthru
        _
      // Predicated region
      $region17: #{bottleneck_pallas.2} parent=11 // pred_check
        %p121 = pneg %p77
      $region18: #{bottleneck_pallas.2} parent=11 // pred_check_branch
        %123 = sbr.rel (%p121) target = $region20
      $region19: #{bottleneck_pallas.2} parent=11 // pred_region
        _
      $region20: #{bottleneck_pallas.2} parent=11 // pred_fallthru
        _
    $region12: #{bottleneck_pallas.2} parent=5 // pred_fallthru
      _
    %p124 = scmp.lt.s32.totalorder %s9, 4
    // Predicated region
    $region21: #{bottleneck_pallas.2} parent=5 // pred_check
      %p125 = pneg %p124
    $region22: #{bottleneck_pallas.2} parent=5 // pred_check_branch
      %127 = sbr.rel (%p125) target = $region24
    $region23: #{bottleneck_pallas.2} parent=5 // pred_region
      // Predicated region
      $region25: #{bottleneck_pallas.2} parent=23 // pred_check
        %p128 = pneg %p29
      $region26: #{bottleneck_pallas.2} parent=23 // pred_check_branch
        %130 = sbr.rel (%p128) target = $region28
      $region27: #{bottleneck_pallas.2} parent=23 // pred_region
        %s131 = smul.u32 64, %s9
        %p132 = scmp.lt.s32.totalorder %s131, 255
        %s133 = scalar_select %p132, %s131, 255
        %s134 = smul.addr %s133, 8
        %s135 = scalar_lea.vmem %s0, %s134
        %s136 = smul.u32 64, %s9
      $region28: #{bottleneck_pallas.2} parent=23 // pred_fallthru
        _
    $region24: #{bottleneck_pallas.2} parent=5 // pred_fallthru
      _
    %p137 = scmp.le.s32.totalorder 1, %s9
    %p138 = scmp.lt.s32.totalorder %s9, 5
    %p139 = pnand %p137, %p138
    %p140 = pneg %p139
    // Predicated region
    $region29: #{bottleneck_pallas.2} parent=5 // pred_check
      _
    $region30: #{bottleneck_pallas.2} parent=5 // pred_check_branch
      %142 = sbr.rel (%p139) target = $region32
    $region31: #{bottleneck_pallas.2} parent=5 // pred_region
      %s143 = ssub.s32 %s9, 1
      %s144 = smul.u32 64, %s14
      %p145 = scmp.lt.s32.totalorder %s144, 255
      %s146 = scalar_select %p145, %s144, 255
      %s147 = smul.addr %s146, 8
      %s148 = scalar_lea.vmem %s0, %s147
      %p149 = pneg %p35
      %p150 = pneg %p32
      %p151 = pneg %p56
      %p152 = pneg %p53
      %p153 = pneg %p77
      %p154 = pneg %p74
      %p155 = pneg %p103
      %p156 = pneg %p100
      %s157 = smul.u32 64, %s14
      %p158 = scmp.lt.s32.totalorder %s157, 255
      %s159 = scalar_select %p158, %s157, 255
      %s160 = smul.addr %s159, 8
      %s161 = scalar_lea.vmem %s3, %s160
      %s162 = smul.u32 64, %s14
      %p163 = scmp.lt.s32.totalorder %s162, 255
      %s164 = scalar_select %p163, %s162, 255
      %s165 = smul.addr %s164, 8
      %s166 = scalar_lea.vmem %s0, %s165
      %s167 = smul.u32 64, %s14
      %s168 = smul.u32 64, %s14
      %p169 = scmp.lt.s32.totalorder %s168, 255
      %s170 = scalar_select %p169, %s168, 255
      %s171 = smul.addr %s170, 8
      %s172 = scalar_lea.vmem %s3, %s171
      %s173 = smul.u32 64, %s14
      %v174 = vld [vmem:[%s166] sm:$0xff]
      %v175 = vld [vmem:[%s166 + $0x8] sm:$0xff]
      %v176 = vld [vmem:[%s166 + $0x10] sm:$0xff]
      %v177 = vld [vmem:[%s166 + $0x18] sm:$0xff]
      %v178 = vld [vmem:[%s166 + $0x20] sm:$0xff]
      %v179 = vld [vmem:[%s166 + $0x28] sm:$0xff]
      %v180 = vld [vmem:[%s166 + $0x30] sm:$0xff]
      %v181 = vld [vmem:[%s166 + $0x38] sm:$0xff]
      %v182 = vld [vmem:[%s166 + $0x40] sm:$0xff]
      %v183 = vld [vmem:[%s166 + $0x48] sm:$0xff]
      %v184 = vld [vmem:[%s166 + $0x50] sm:$0xff]
      %v185 = vld [vmem:[%s166 + $0x58] sm:$0xff]
      %v186 = vld [vmem:[%s166 + $0x60] sm:$0xff]
      %v187 = vld [vmem:[%s166 + $0x68] sm:$0xff]
      %v188 = vld [vmem:[%s166 + $0x70] sm:$0xff]
      %v189 = vld [vmem:[%s166 + $0x78] sm:$0xff]
      %v190 = vld [vmem:[%s166 + $0x80] sm:$0xff]
      %v191 = vld [vmem:[%s166 + $0x88] sm:$0xff]
      %v192 = vld [vmem:[%s166 + $0x90] sm:$0xff]
      %v193 = vld [vmem:[%s166 + $0x98] sm:$0xff]
      %v194 = vld [vmem:[%s166 + $0xa0] sm:$0xff]
      %v195 = vld [vmem:[%s166 + $0xa8] sm:$0xff]
      %v196 = vld [vmem:[%s166 + $0xb0] sm:$0xff]
      %v197 = vld [vmem:[%s166 + $0xb8] sm:$0xff]
      %v198 = vld [vmem:[%s166 + $0xc0] sm:$0xff]
      %v199 = vld [vmem:[%s166 + $0xc8] sm:$0xff]
      %v200 = vld [vmem:[%s166 + $0xd0] sm:$0xff]
      %v201 = vld [vmem:[%s166 + $0xd8] sm:$0xff]
      %v202 = vld [vmem:[%s166 + $0xe0] sm:$0xff]
      %v203 = vld [vmem:[%s166 + $0xe8] sm:$0xff]
      %v204 = vld [vmem:[%s166 + $0xf0] sm:$0xff]
      %v205 = vld [vmem:[%s166 + $0xf8] sm:$0xff]
      %v206 = vld [vmem:[%s166 + $0x100] sm:$0xff]
      %v207 = vld [vmem:[%s166 + $0x108] sm:$0xff]
      %v208 = vld [vmem:[%s166 + $0x110] sm:$0xff]
      %v209 = vld [vmem:[%s166 + $0x118] sm:$0xff]
      %v210 = vld [vmem:[%s166 + $0x120] sm:$0xff]
      %v211 = vld [vmem:[%s166 + $0x128] sm:$0xff]
      %v212 = vld [vmem:[%s166 + $0x130] sm:$0xff]
      %v213 = vld [vmem:[%s166 + $0x138] sm:$0xff]
      %v214 = vld [vmem:[%s166 + $0x140] sm:$0xff]
      %v215 = vld [vmem:[%s166 + $0x148] sm:$0xff]
      %v216 = vld [vmem:[%s166 + $0x150] sm:$0xff]
      %v217 = vld [vmem:[%s166 + $0x158] sm:$0xff]
      %v218 = vld [vmem:[%s166 + $0x160] sm:$0xff]
      %v219 = vld [vmem:[%s166 + $0x168] sm:$0xff]
      %v220 = vld [vmem:[%s166 + $0x170] sm:$0xff]
      %v221 = vld [vmem:[%s166 + $0x178] sm:$0xff]
      %v222 = vld [vmem:[%s166 + $0x180] sm:$0xff]
      %v223 = vld [vmem:[%s166 + $0x188] sm:$0xff]
      %v224 = vld [vmem:[%s166 + $0x190] sm:$0xff]
      %v225 = vld [vmem:[%s166 + $0x198] sm:$0xff]
      %v226 = vld [vmem:[%s166 + $0x1a0] sm:$0xff]
      %v227 = vld [vmem:[%s166 + $0x1a8] sm:$0xff]
      %v228 = vld [vmem:[%s166 + $0x1b0] sm:$0xff]
      %v229 = vld [vmem:[%s166 + $0x1b8] sm:$0xff]
      %v230 = vld [vmem:[%s166 + $0x1c0] sm:$0xff]
      %v231 = vld [vmem:[%s166 + $0x1c8] sm:$0xff]
      %v232 = vld [vmem:[%s166 + $0x1d0] sm:$0xff]
      %v233 = vld [vmem:[%s166 + $0x1d8] sm:$0xff]
      %v234 = vld [vmem:[%s166 + $0x1e0] sm:$0xff]
      %v235 = vld [vmem:[%s166 + $0x1e8] sm:$0xff]
      %v236 = vld [vmem:[%s166 + $0x1f0] sm:$0xff]
      %v237 = vld [vmem:[%s166 + $0x1f8] sm:$0xff]
      %v238 = vld [vmem:[%s1] sm:$0xff]
      %v239 = vld [vmem:[%s1 + $0x8] sm:$0xff]
      %v240 = vld [vmem:[%s2] sm:$0x1]
      %v242 = vlaneseq
      %v243 = vshrl.u32 %v242, 7
      %v244 = vsub.s32 0, %v243
      %v245 = vrot.slane %v240, %v244
      %vm247 = vcmask 130048
      %v249 = vsel %vm247, %v174, 0
      %v252 = vsel %vm247, %v175, 0
      %v255 = vsel %vm247, %v176, 0
      %v258 = vsel %vm247, %v177, 0
      %v261 = vsel %vm247, %v178, 0
      %v264 = vsel %vm247, %v179, 0
      %v267 = vsel %vm247, %v180, 0
      %v270 = vsel %vm247, %v181, 0
      %v273 = vsel %vm247, %v182, 0
      %v276 = vsel %vm247, %v183, 0
      %v279 = vsel %vm247, %v184, 0
      %v282 = vsel %vm247, %v185, 0
      %v285 = vsel %vm247, %v186, 0
      %v288 = vsel %vm247, %v187, 0
      %v291 = vsel %vm247, %v188, 0
      %v294 = vsel %vm247, %v189, 0
      %v297 = vsel %vm247, %v190, 0
      %v300 = vsel %vm247, %v191, 0
      %v303 = vsel %vm247, %v192, 0
      %v306 = vsel %vm247, %v193, 0
      %v309 = vsel %vm247, %v194, 0
      %v312 = vsel %vm247, %v195, 0
      %v315 = vsel %vm247, %v196, 0
      %v318 = vsel %vm247, %v197, 0
      %v321 = vsel %vm247, %v198, 0
      %v324 = vsel %vm247, %v199, 0
      %v327 = vsel %vm247, %v200, 0
      %v330 = vsel %vm247, %v201, 0
      %v333 = vsel %vm247, %v202, 0
      %v336 = vsel %vm247, %v203, 0
      %v339 = vsel %vm247, %v204, 0
      %v342 = vsel %vm247, %v205, 0
      %v345 = vsel %vm247, %v206, 0
      %v348 = vsel %vm247, %v207, 0
      %v351 = vsel %vm247, %v208, 0
      %v354 = vsel %vm247, %v209, 0
      %v357 = vsel %vm247, %v210, 0
      %v360 = vsel %vm247, %v211, 0
      %v363 = vsel %vm247, %v212, 0
      %v366 = vsel %vm247, %v213, 0
      %v369 = vsel %vm247, %v214, 0
      %v372 = vsel %vm247, %v215, 0
      %v375 = vsel %vm247, %v216, 0
      %v378 = vsel %vm247, %v217, 0
      %v381 = vsel %vm247, %v218, 0
      %v384 = vsel %vm247, %v219, 0
      %v387 = vsel %vm247, %v220, 0
      %v390 = vsel %vm247, %v221, 0
      %v393 = vsel %vm247, %v222, 0
      %v396 = vsel %vm247, %v223, 0
      %v399 = vsel %vm247, %v224, 0
      %v402 = vsel %vm247, %v225, 0
      %v405 = vsel %vm247, %v226, 0
      %v408 = vsel %vm247, %v227, 0
      %v411 = vsel %vm247, %v228, 0
      %v414 = vsel %vm247, %v229, 0
      %v417 = vsel %vm247, %v230, 0
      %v420 = vsel %vm247, %v231, 0
      %v423 = vsel %vm247, %v232, 0
      %v426 = vsel %vm247, %v233, 0
      %v429 = vsel %vm247, %v234, 0
      %v432 = vsel %vm247, %v235, 0
      %v435 = vsel %vm247, %v236, 0
      %v438 = vsel %vm247, %v237, 0
      %440 = vmatprep.subr.mxu0 0.0
      %441 = vmatpush1.msra.mxu0 %v238
      %442 = vmatprep.subr.mxu0 0.0
      %443 = vmatpush1.msra.mxu0 %v239
      %444 = vmatprep.subr.mxu0 0.0
      %445 = vmatpush1.msra.mxu0 0.0
      %446 = vmatprep.subr.mxu0 0.0
      %447 = vmatpush1.msra.mxu0 0.0
      %448 = vmatprep.subr.mxu0 0.0
      %449 = vmatpush1.msra.mxu0 0.0
      %450 = vmatprep.subr.mxu0 0.0
      %451 = vmatpush1.msra.mxu0 0.0
      %452 = vmatprep.subr.mxu0 0.0
      %453 = vmatpush1.msra.mxu0 0.0
      %454 = vmatprep.subr.mxu0 0.0
      %455 = vmatpush1.msra.mxu0 0.0
      %456 = vmatprep.subr.mxu0 0.0
      %457 = vmatpush1.msra.mxu0 0.0
      %458 = vmatprep.subr.mxu0 0.0
      %459 = vmatpush1.msra.mxu0 0.0
      %460 = vmatprep.subr.mxu0 0.0
      %461 = vmatpush1.msra.mxu0 0.0
      %462 = vmatprep.subr.mxu0 0.0
      %463 = vmatpush1.msra.mxu0 0.0
      %464 = vmatprep.subr.mxu0 0.0
      %465 = vmatpush1.msra.mxu0 0.0
      %466 = vmatprep.subr.mxu0 0.0
      %467 = vmatpush1.msra.mxu0 0.0
      %468 = vmatprep.subr.mxu0 0.0
      %469 = vmatpush1.msra.mxu0 0.0
      %470 = vmatprep.subr.mxu0 0.0
      %471 = vmatpush1.msra.mxu0 0.0
      %472 = vmatprep.subr.mxu0 0.0
      %473 = vmatpush1.msra.mxu0 0.0
      %474 = vmatprep.subr.mxu0 0.0
      %475 = vmatpush1.msra.mxu0 0.0
      %476 = vmatprep.subr.mxu0 0.0
      %477 = vmatpush1.msra.mxu0 0.0
      %478 = vmatprep.subr.mxu0 0.0
      %479 = vmatpush1.msra.mxu0 0.0
      %480 = vmatprep.subr.mxu0 0.0
      %481 = vmatpush1.msra.mxu0 0.0
      %482 = vmatprep.subr.mxu0 0.0
      %483 = vmatpush1.msra.mxu0 0.0
      %484 = vmatprep.subr.mxu0 0.0
      %485 = vmatpush1.msra.mxu0 0.0
      %486 = vmatprep.subr.mxu0 0.0
      %487 = vmatpush1.msra.mxu0 0.0
      %488 = vmatprep.subr.mxu0 0.0
      %489 = vmatpush1.msra.mxu0 0.0
      %490 = vmatprep.subr.mxu0 0.0
      %491 = vmatpush1.msra.mxu0 0.0
      %492 = vmatprep.subr.mxu0 0.0
      %493 = vmatpush1.msra.mxu0 0.0
      %494 = vmatprep.subr.mxu0 0.0
      %495 = vmatpush1.msra.mxu0 0.0
      %496 = vmatprep.subr.mxu0 0.0
      %497 = vmatpush1.msra.mxu0 0.0
      %498 = vmatprep.subr.mxu0 0.0
      %499 = vmatpush1.msra.mxu0 0.0
      %500 = vmatprep.subr.mxu0 0.0
      %501 = vmatpush1.msra.mxu0 0.0
      %502 = vmatprep.subr.mxu0 0.0
      %503 = vmatpush1.msra.mxu0 0.0
      %504 = vmatprep.mubr.f32.mxu0 0.0
      %505 = vmatmul.mubr.f32.gmra.mrb[0].mxu0 %v249
      %v506 = vpop.f32.mrb[0].mxu0
      %v507 = vadd.f32 %v245, %v506
      %v508 = vpop.f32.mrb[0].mxu0
      %509 = vmatprep.mubr.f32.mxu0 0.0
      %510 = vmatmul.mubr.f32.gmra.mrb[0].mxu0 %v252
      %v511 = vpop.f32.mrb[0].mxu0
      %v512 = vadd.f32 %v245, %v511
      %v513 = vpop.f32.mrb[0].mxu0
      %514 = vmatprep.mubr.f32.mxu0 0.0
      %515 = vmatmul.mubr.f32.gmra.mrb[0].mxu0 %v255
      %v516 = vpop.f32.mrb[0].mxu0
      %v517 = vadd.f32 %v245, %v516
      %v518 = vpop.f32.mrb[0].mxu0
      %519 = vmatprep.mubr.f32.mxu0 0.0
      %520 = vmatmul.mubr.f32.gmra.mrb[0].mxu0 %v258
      %v521 = vpop.f32.mrb[0].mxu0
      %v522 = vadd.f32 %v245, %v521
      %v523 = vpop.f32.mrb[0].mxu0
      %524 = vmatprep.mubr.f32.mxu0 0.0
      %525 = vmatmul.mubr.f32.gmra.mrb[0].mxu0 %v261
      %v526 = vpop.f32.mrb[0].mxu0
      %v527 = vadd.f32 %v245, %v526
      %v528 = vpop.f32.mrb[0].mxu0
      %529 = vmatprep.mubr.f32.mxu0 0.0
      %530 = vmatmul.mubr.f32.gmra.mrb[0].mxu0 %v264
      %v531 = vpop.f32.mrb[0].mxu0
      %v532 = vadd.f32 %v245, %v531
      %v533 = vpop.f32.mrb[0].mxu0
      %534 = vmatprep.mubr.f32.mxu0 0.0
      %535 = vmatmul.mubr.f32.gmra.mrb[0].mxu0 %v267
      %v536 = vpop.f32.mrb[0].mxu0
      %v537 = vadd.f32 %v245, %v536
      %v538 = vpop.f32.mrb[0].mxu0
      %539 = vmatprep.mubr.f32.mxu0 0.0
      %540 = vmatmul.mubr.f32.gmra.mrb[0].mxu0 %v270
      %v541 = vpop.f32.mrb[0].mxu0
      %v542 = vadd.f32 %v245, %v541
      %v543 = vpop.f32.mrb[0].mxu0
      %544 = vmatprep.mubr.f32.mxu0 0.0
      %545 = vmatmul.mubr.f32.gmra.mrb[0].mxu0 %v273
      %v546 = vpop.f32.mrb[0].mxu0
      %v547 = vadd.f32 %v245, %v546
      %v548 = vpop.f32.mrb[0].mxu0
      %549 = vmatprep.mubr.f32.mxu0 0.0
      %550 = vmatmul.mubr.f32.gmra.mrb[0].mxu0 %v276
      %v551 = vpop.f32.mrb[0].mxu0
      %v552 = vadd.f32 %v245, %v551
      %v553 = vpop.f32.mrb[0].mxu0
      %554 = vmatprep.mubr.f32.mxu0 0.0
      %555 = vmatmul.mubr.f32.gmra.mrb[0].mxu0 %v279
      %v556 = vpop.f32.mrb[0].mxu0
      %v557 = vadd.f32 %v245, %v556
      %v558 = vpop.f32.mrb[0].mxu0
      %559 = vmatprep.mubr.f32.mxu0 0.0
      %560 = vmatmul.mubr.f32.gmra.mrb[0].mxu0 %v282
      %v561 = vpop.f32.mrb[0].mxu0
      %v562 = vadd.f32 %v245, %v561
      %v563 = vpop.f32.mrb[0].mxu0
      %564 = vmatprep.mubr.f32.mxu0 0.0
      %565 = vmatmul.mubr.f32.gmra.mrb[0].mxu0 %v285
      %v566 = vpop.f32.mrb[0].mxu0
      %v567 = vadd.f32 %v245, %v566
      %v568 = vpop.f32.mrb[0].mxu0
      %569 = vmatprep.mubr.f32.mxu0 0.0
      %570 = vmatmul.mubr.f32.gmra.mrb[0].mxu0 %v288
      %v571 = vpop.f32.mrb[0].mxu0
      %v572 = vadd.f32 %v245, %v571
      %v573 = vpop.f32.mrb[0].mxu0
      %574 = vmatprep.mubr.f32.mxu0 0.0
      %575 = vmatmul.mubr.f32.gmra.mrb[0].mxu0 %v291
      %v576 = vpop.f32.mrb[0].mxu0
      %v577 = vadd.f32 %v245, %v576
      %v578 = vpop.f32.mrb[0].mxu0
      %579 = vmatprep.mubr.f32.mxu0 0.0
      %580 = vmatmul.mubr.f32.gmra.mrb[0].mxu0 %v294
      %v581 = vpop.f32.mrb[0].mxu0
      %v582 = vadd.f32 %v245, %v581
      %v583 = vpop.f32.mrb[0].mxu0
      %584 = vmatprep.mubr.f32.mxu0 0.0
      %585 = vmatmul.mubr.f32.gmra.mrb[0].mxu0 %v297
      %v586 = vpop.f32.mrb[0].mxu0
      %v587 = vadd.f32 %v245, %v586
      %v588 = vpop.f32.mrb[0].mxu0
      %589 = vmatprep.mubr.f32.mxu0 0.0
      %590 = vmatmul.mubr.f32.gmra.mrb[0].mxu0 %v300
      %v591 = vpop.f32.mrb[0].mxu0
      %v592 = vadd.f32 %v245, %v591
      %v593 = vpop.f32.mrb[0].mxu0
      %594 = vmatprep.mubr.f32.mxu0 0.0
      %595 = vmatmul.mubr.f32.gmra.mrb[0].mxu0 %v303
      %v596 = vpop.f32.mrb[0].mxu0
      %v597 = vadd.f32 %v245, %v596
      %v598 = vpop.f32.mrb[0].mxu0
      %599 = vmatprep.mubr.f32.mxu0 0.0
      %600 = vmatmul.mubr.f32.gmra.mrb[0].mxu0 %v306
      %v601 = vpop.f32.mrb[0].mxu0
      %v602 = vadd.f32 %v245, %v601
      %v603 = vpop.f32.mrb[0].mxu0
      %604 = vmatprep.mubr.f32.mxu0 0.0
      %605 = vmatmul.mubr.f32.gmra.mrb[0].mxu0 %v309
      %v606 = vpop.f32.mrb[0].mxu0
      %v607 = vadd.f32 %v245, %v606
      %v608 = vpop.f32.mrb[0].mxu0
      %609 = vmatprep.mubr.f32.mxu0 0.0
      %610 = vmatmul.mubr.f32.gmra.mrb[0].mxu0 %v312
      %v611 = vpop.f32.mrb[0].mxu0
      %v612 = vadd.f32 %v245, %v611
      %v613 = vpop.f32.mrb[0].mxu0
      %614 = vmatprep.mubr.f32.mxu0 0.0
      %615 = vmatmul.mubr.f32.gmra.mrb[0].mxu0 %v315
      %v616 = vpop.f32.mrb[0].mxu0
      %v617 = vadd.f32 %v245, %v616
      %v618 = vpop.f32.mrb[0].mxu0
      %619 = vmatprep.mubr.f32.mxu0 0.0
      %620 = vmatmul.mubr.f32.gmra.mrb[0].mxu0 %v318
      %v621 = vpop.f32.mrb[0].mxu0
      %v622 = vadd.f32 %v245, %v621
      %v623 = vpop.f32.mrb[0].mxu0
      %624 = vmatprep.mubr.f32.mxu0 0.0
      %625 = vmatmul.mubr.f32.gmra.mrb[0].mxu0 %v321
      %v626 = vpop.f32.mrb[0].mxu0
      %v627 = vadd.f32 %v245, %v626
      %v628 = vpop.f32.mrb[0].mxu0
      %629 = vmatprep.mubr.f32.mxu0 0.0
      %630 = vmatmul.mubr.f32.gmra.mrb[0].mxu0 %v324
      %v631 = vpop.f32.mrb[0].mxu0
      %v632 = vadd.f32 %v245, %v631
      %v633 = vpop.f32.mrb[0].mxu0
      %634 = vmatprep.mubr.f32.mxu0 0.0
      %635 = vmatmul.mubr.f32.gmra.mrb[0].mxu0 %v327
      %v636 = vpop.f32.mrb[0].mxu0
      %v637 = vadd.f32 %v245, %v636
      %v638 = vpop.f32.mrb[0].mxu0
      %639 = vmatprep.mubr.f32.mxu0 0.0
      %640 = vmatmul.mubr.f32.gmra.mrb[0].mxu0 %v330
      %v641 = vpop.f32.mrb[0].mxu0
      %v642 = vadd.f32 %v245, %v641
      %v643 = vpop.f32.mrb[0].mxu0
      %644 = vmatprep.mubr.f32.mxu0 0.0
      %645 = vmatmul.mubr.f32.gmra.mrb[0].mxu0 %v333
      %v646 = vpop.f32.mrb[0].mxu0
      %v647 = vadd.f32 %v245, %v646
      %v648 = vpop.f32.mrb[0].mxu0
      %649 = vmatprep.mubr.f32.mxu0 0.0
      %650 = vmatmul.mubr.f32.gmra.mrb[0].mxu0 %v336
      %v651 = vpop.f32.mrb[0].mxu0
      %v652 = vadd.f32 %v245, %v651
      %v653 = vpop.f32.mrb[0].mxu0
      %654 = vmatprep.mubr.f32.mxu0 0.0
      %655 = vmatmul.mubr.f32.gmra.mrb[0].mxu0 %v339
      %v656 = vpop.f32.mrb[0].mxu0
      %v657 = vadd.f32 %v245, %v656
      %v658 = vpop.f32.mrb[0].mxu0
      %659 = vmatprep.mubr.f32.mxu0 0.0
      %660 = vmatmul.mubr.f32.gmra.mrb[0].mxu0 %v342
      %v661 = vpop.f32.mrb[0].mxu0
      %v662 = vadd.f32 %v245, %v661
      %v663 = vpop.f32.mrb[0].mxu0
      %664 = vmatprep.mubr.f32.mxu0 0.0
      %665 = vmatmul.mubr.f32.gmra.mrb[0].mxu0 %v345
      %v666 = vpop.f32.mrb[0].mxu0
      %v667 = vadd.f32 %v245, %v666
      %v668 = vpop.f32.mrb[0].mxu0
      %669 = vmatprep.mubr.f32.mxu0 0.0
      %670 = vmatmul.mubr.f32.gmra.mrb[0].mxu0 %v348
      %v671 = vpop.f32.mrb[0].mxu0
      %v672 = vadd.f32 %v245, %v671
      %v673 = vpop.f32.mrb[0].mxu0
      %674 = vmatprep.mubr.f32.mxu0 0.0
      %675 = vmatmul.mubr.f32.gmra.mrb[0].mxu0 %v351
      %v676 = vpop.f32.mrb[0].mxu0
      %v677 = vadd.f32 %v245, %v676
      %v678 = vpop.f32.mrb[0].mxu0
      %679 = vmatprep.mubr.f32.mxu0 0.0
      %680 = vmatmul.mubr.f32.gmra.mrb[0].mxu0 %v354
      %v681 = vpop.f32.mrb[0].mxu0
      %v682 = vadd.f32 %v245, %v681
      %v683 = vpop.f32.mrb[0].mxu0
      %684 = vmatprep.mubr.f32.mxu0 0.0
      %685 = vmatmul.mubr.f32.gmra.mrb[0].mxu0 %v357
      %v686 = vpop.f32.mrb[0].mxu0
      %v687 = vadd.f32 %v245, %v686
      %v688 = vpop.f32.mrb[0].mxu0
      %689 = vmatprep.mubr.f32.mxu0 0.0
      %690 = vmatmul.mubr.f32.gmra.mrb[0].mxu0 %v360
      %v691 = vpop.f32.mrb[0].mxu0
      %v692 = vadd.f32 %v245, %v691
      %v693 = vpop.f32.mrb[0].mxu0
      %694 = vmatprep.mubr.f32.mxu0 0.0
      %695 = vmatmul.mubr.f32.gmra.mrb[0].mxu0 %v363
      %v696 = vpop.f32.mrb[0].mxu0
      %v697 = vadd.f32 %v245, %v696
      %v698 = vpop.f32.mrb[0].mxu0
      %699 = vmatprep.mubr.f32.mxu0 0.0
      %700 = vmatmul.mubr.f32.gmra.mrb[0].mxu0 %v366
      %v701 = vpop.f32.mrb[0].mxu0
      %v702 = vadd.f32 %v245, %v701
      %v703 = vpop.f32.mrb[0].mxu0
      %704 = vmatprep.mubr.f32.mxu0 0.0
      %705 = vmatmul.mubr.f32.gmra.mrb[0].mxu0 %v369
      %v706 = vpop.f32.mrb[0].mxu0
      %v707 = vadd.f32 %v245, %v706
      %v708 = vpop.f32.mrb[0].mxu0
      %709 = vmatprep.mubr.f32.mxu0 0.0
      %710 = vmatmul.mubr.f32.gmra.mrb[0].mxu0 %v372
      %v711 = vpop.f32.mrb[0].mxu0
      %v712 = vadd.f32 %v245, %v711
      %v713 = vpop.f32.mrb[0].mxu0
      %714 = vmatprep.mubr.f32.mxu0 0.0
      %715 = vmatmul.mubr.f32.gmra.mrb[0].mxu0 %v375
      %v716 = vpop.f32.mrb[0].mxu0
      %v717 = vadd.f32 %v245, %v716
      %v718 = vpop.f32.mrb[0].mxu0
      %719 = vmatprep.mubr.f32.mxu0 0.0
      %720 = vmatmul.mubr.f32.gmra.mrb[0].mxu0 %v378
      %v721 = vpop.f32.mrb[0].mxu0
      %v722 = vadd.f32 %v245, %v721
      %v723 = vpop.f32.mrb[0].mxu0
      %724 = vmatprep.mubr.f32.mxu0 0.0
      %725 = vmatmul.mubr.f32.gmra.mrb[0].mxu0 %v381
      %v726 = vpop.f32.mrb[0].mxu0
      %v727 = vadd.f32 %v245, %v726
      %v728 = vpop.f32.mrb[0].mxu0
      %729 = vmatprep.mubr.f32.mxu0 0.0
      %730 = vmatmul.mubr.f32.gmra.mrb[0].mxu0 %v384
      %v731 = vpop.f32.mrb[0].mxu0
      %v732 = vadd.f32 %v245, %v731
      %v733 = vpop.f32.mrb[0].mxu0
      %734 = vmatprep.mubr.f32.mxu0 0.0
      %735 = vmatmul.mubr.f32.gmra.mrb[0].mxu0 %v387
      %v736 = vpop.f32.mrb[0].mxu0
      %v737 = vadd.f32 %v245, %v736
      %v738 = vpop.f32.mrb[0].mxu0
      %739 = vmatprep.mubr.f32.mxu0 0.0
      %740 = vmatmul.mubr.f32.gmra.mrb[0].mxu0 %v390
      %v741 = vpop.f32.mrb[0].mxu0
      %v742 = vadd.f32 %v245, %v741
      %v743 = vpop.f32.mrb[0].mxu0
      %744 = vmatprep.mubr.f32.mxu0 0.0
      %745 = vmatmul.mubr.f32.gmra.mrb[0].mxu0 %v393
      %v746 = vpop.f32.mrb[0].mxu0
      %v747 = vadd.f32 %v245, %v746
      %v748 = vpop.f32.mrb[0].mxu0
      %749 = vmatprep.mubr.f32.mxu0 0.0
      %750 = vmatmul.mubr.f32.gmra.mrb[0].mxu0 %v396
      %v751 = vpop.f32.mrb[0].mxu0
      %v752 = vadd.f32 %v245, %v751
      %v753 = vpop.f32.mrb[0].mxu0
      %754 = vmatprep.mubr.f32.mxu0 0.0
      %755 = vmatmul.mubr.f32.gmra.mrb[0].mxu0 %v399
      %v756 = vpop.f32.mrb[0].mxu0
      %v757 = vadd.f32 %v245, %v756
      %v758 = vpop.f32.mrb[0].mxu0
      %759 = vmatprep.mubr.f32.mxu0 0.0
      %760 = vmatmul.mubr.f32.gmra.mrb[0].mxu0 %v402
      %v761 = vpop.f32.mrb[0].mxu0
      %v762 = vadd.f32 %v245, %v761
      %v763 = vpop.f32.mrb[0].mxu0
      %764 = vmatprep.mubr.f32.mxu0 0.0
      %765 = vmatmul.mubr.f32.gmra.mrb[0].mxu0 %v405
      %v766 = vpop.f32.mrb[0].mxu0
      %v767 = vadd.f32 %v245, %v766
      %v768 = vpop.f32.mrb[0].mxu0
      %769 = vmatprep.mubr.f32.mxu0 0.0
      %770 = vmatmul.mubr.f32.gmra.mrb[0].mxu0 %v408
      %v771 = vpop.f32.mrb[0].mxu0
      %v772 = vadd.f32 %v245, %v771
      %v773 = vpop.f32.mrb[0].mxu0
      %774 = vmatprep.mubr.f32.mxu0 0.0
      %775 = vmatmul.mubr.f32.gmra.mrb[0].mxu0 %v411
      %v776 = vpop.f32.mrb[0].mxu0
      %v777 = vadd.f32 %v245, %v776
      %v778 = vpop.f32.mrb[0].mxu0
      %779 = vmatprep.mubr.f32.mxu0 0.0
      %780 = vmatmul.mubr.f32.gmra.mrb[0].mxu0 %v414
      %v781 = vpop.f32.mrb[0].mxu0
      %v782 = vadd.f32 %v245, %v781
      %v783 = vpop.f32.mrb[0].mxu0
      %784 = vmatprep.mubr.f32.mxu0 0.0
      %785 = vmatmul.mubr.f32.gmra.mrb[0].mxu0 %v417
      %v786 = vpop.f32.mrb[0].mxu0
      %v787 = vadd.f32 %v245, %v786
      %v788 = vpop.f32.mrb[0].mxu0
      %789 = vmatprep.mubr.f32.mxu0 0.0
      %790 = vmatmul.mubr.f32.gmra.mrb[0].mxu0 %v420
      %v791 = vpop.f32.mrb[0].mxu0
      %v792 = vadd.f32 %v245, %v791
      %v793 = vpop.f32.mrb[0].mxu0
      %794 = vmatprep.mubr.f32.mxu0 0.0
      %795 = vmatmul.mubr.f32.gmra.mrb[0].mxu0 %v423
      %v796 = vpop.f32.mrb[0].mxu0
      %v797 = vadd.f32 %v245, %v796
      %v798 = vpop.f32.mrb[0].mxu0
      %799 = vmatprep.mubr.f32.mxu0 0.0
      %800 = vmatmul.mubr.f32.gmra.mrb[0].mxu0 %v426
      %v801 = vpop.f32.mrb[0].mxu0
      %v802 = vadd.f32 %v245, %v801
      %v803 = vpop.f32.mrb[0].mxu0
      %804 = vmatprep.mubr.f32.mxu0 0.0
      %805 = vmatmul.mubr.f32.gmra.mrb[0].mxu0 %v429
      %v806 = vpop.f32.mrb[0].mxu0
      %v807 = vadd.f32 %v245, %v806
      %v808 = vpop.f32.mrb[0].mxu0
      %809 = vmatprep.mubr.f32.mxu0 0.0
      %810 = vmatmul.mubr.f32.gmra.mrb[0].mxu0 %v432
      %v811 = vpop.f32.mrb[0].mxu0
      %v812 = vadd.f32 %v245, %v811
      %v813 = vpop.f32.mrb[0].mxu0
      %814 = vmatprep.mubr.f32.mxu0 0.0
      %815 = vmatmul.mubr.f32.gmra.mrb[0].mxu0 %v435
      %v816 = vpop.f32.mrb[0].mxu0
      %v817 = vadd.f32 %v245, %v816
      %v818 = vpop.f32.mrb[0].mxu0
      %819 = vmatprep.mubr.f32.mxu0 0.0
      %820 = vmatmul.mubr.f32.gmra.mrb[0].mxu0 %v438
      %v821 = vpop.f32.mrb[0].mxu0
      %v822 = vadd.f32 %v245, %v821
      %v823 = vpop.f32.mrb[0].mxu0
      %824 = vdwg.mxu0
      %v825 = vmax.f32 %v507, 0.0
      %v826 = vmax.f32 %v512, 0.0
      %v827 = vmax.f32 %v517, 0.0
      %v828 = vmax.f32 %v522, 0.0
      %v829 = vmax.f32 %v527, 0.0
      %v830 = vmax.f32 %v532, 0.0
      %v831 = vmax.f32 %v537, 0.0
      %v832 = vmax.f32 %v542, 0.0
      %v833 = vmax.f32 %v547, 0.0
      %v834 = vmax.f32 %v552, 0.0
      %v835 = vmax.f32 %v557, 0.0
      %v836 = vmax.f32 %v562, 0.0
      %v837 = vmax.f32 %v567, 0.0
      %v838 = vmax.f32 %v572, 0.0
      %v839 = vmax.f32 %v577, 0.0
      %v840 = vmax.f32 %v582, 0.0
      %v841 = vmax.f32 %v587, 0.0
      %v842 = vmax.f32 %v592, 0.0
      %v843 = vmax.f32 %v597, 0.0
      %v844 = vmax.f32 %v602, 0.0
      %v845 = vmax.f32 %v607, 0.0
      %v846 = vmax.f32 %v612, 0.0
      %v847 = vmax.f32 %v617, 0.0
      %v848 = vmax.f32 %v622, 0.0
      %v849 = vmax.f32 %v627, 0.0
      %v850 = vmax.f32 %v632, 0.0
      %v851 = vmax.f32 %v637, 0.0
      %v852 = vmax.f32 %v642, 0.0
      %v853 = vmax.f32 %v647, 0.0
      %v854 = vmax.f32 %v652, 0.0
      %v855 = vmax.f32 %v657, 0.0
      %v856 = vmax.f32 %v662, 0.0
      %v857 = vmax.f32 %v667, 0.0
      %v858 = vmax.f32 %v672, 0.0
      %v859 = vmax.f32 %v677, 0.0
      %v860 = vmax.f32 %v682, 0.0
      %v861 = vmax.f32 %v687, 0.0
      %v862 = vmax.f32 %v692, 0.0
      %v863 = vmax.f32 %v697, 0.0
      %v864 = vmax.f32 %v702, 0.0
      %v865 = vmax.f32 %v707, 0.0
      %v866 = vmax.f32 %v712, 0.0
      %v867 = vmax.f32 %v717, 0.0
      %v868 = vmax.f32 %v722, 0.0
      %v869 = vmax.f32 %v727, 0.0
      %v870 = vmax.f32 %v732, 0.0
      %v871 = vmax.f32 %v737, 0.0
      %v872 = vmax.f32 %v742, 0.0
      %v873 = vmax.f32 %v747, 0.0
      %v874 = vmax.f32 %v752, 0.0
      %v875 = vmax.f32 %v757, 0.0
      %v876 = vmax.f32 %v762, 0.0
      %v877 = vmax.f32 %v767, 0.0
      %v878 = vmax.f32 %v772, 0.0
      %v879 = vmax.f32 %v777, 0.0
      %v880 = vmax.f32 %v782, 0.0
      %v881 = vmax.f32 %v787, 0.0
      %v882 = vmax.f32 %v792, 0.0
      %v883 = vmax.f32 %v797, 0.0
      %v884 = vmax.f32 %v802, 0.0
      %v885 = vmax.f32 %v807, 0.0
      %v886 = vmax.f32 %v812, 0.0
      %v887 = vmax.f32 %v817, 0.0
      %v888 = vmax.f32 %v822, 0.0
      %vm889 = vcmask 64512
      %890 = vst.msk [vmem:[%s172] sm:$0xff] %vm889, %v825
      %891 = vst.msk [vmem:[%s172 + $0x8] sm:$0xff] %vm889, %v826
      %892 = vst.msk [vmem:[%s172 + $0x10] sm:$0xff] %vm889, %v827
      %893 = vst.msk [vmem:[%s172 + $0x18] sm:$0xff] %vm889, %v828
      %894 = vst.msk [vmem:[%s172 + $0x20] sm:$0xff] %vm889, %v829
      %895 = vst.msk [vmem:[%s172 + $0x28] sm:$0xff] %vm889, %v830
      %896 = vst.msk [vmem:[%s172 + $0x30] sm:$0xff] %vm889, %v831
      %897 = vst.msk [vmem:[%s172 + $0x38] sm:$0xff] %vm889, %v832
      %898 = vst.msk [vmem:[%s172 + $0x40] sm:$0xff] %vm889, %v833
      %899 = vst.msk [vmem:[%s172 + $0x48] sm:$0xff] %vm889, %v834
      %900 = vst.msk [vmem:[%s172 + $0x50] sm:$0xff] %vm889, %v835
      %901 = vst.msk [vmem:[%s172 + $0x58] sm:$0xff] %vm889, %v836
      %902 = vst.msk [vmem:[%s172 + $0x60] sm:$0xff] %vm889, %v837
      %903 = vst.msk [vmem:[%s172 + $0x68] sm:$0xff] %vm889, %v838
      %904 = vst.msk [vmem:[%s172 + $0x70] sm:$0xff] %vm889, %v839
      %905 = vst.msk [vmem:[%s172 + $0x78] sm:$0xff] %vm889, %v840
      %906 = vst.msk [vmem:[%s172 + $0x80] sm:$0xff] %vm889, %v841
      %907 = vst.msk [vmem:[%s172 + $0x88] sm:$0xff] %vm889, %v842
      %908 = vst.msk [vmem:[%s172 + $0x90] sm:$0xff] %vm889, %v843
      %909 = vst.msk [vmem:[%s172 + $0x98] sm:$0xff] %vm889, %v844
      %910 = vst.msk [vmem:[%s172 + $0xa0] sm:$0xff] %vm889, %v845
      %911 = vst.msk [vmem:[%s172 + $0xa8] sm:$0xff] %vm889, %v846
      %912 = vst.msk [vmem:[%s172 + $0xb0] sm:$0xff] %vm889, %v847
      %913 = vst.msk [vmem:[%s172 + $0xb8] sm:$0xff] %vm889, %v848
      %914 = vst.msk [vmem:[%s172 + $0xc0] sm:$0xff] %vm889, %v849
      %915 = vst.msk [vmem:[%s172 + $0xc8] sm:$0xff] %vm889, %v850
      %916 = vst.msk [vmem:[%s172 + $0xd0] sm:$0xff] %vm889, %v851
      %917 = vst.msk [vmem:[%s172 + $0xd8] sm:$0xff] %vm889, %v852
      %918 = vst.msk [vmem:[%s172 + $0xe0] sm:$0xff] %vm889, %v853
      %919 = vst.msk [vmem:[%s172 + $0xe8] sm:$0xff] %vm889, %v854
      %920 = vst.msk [vmem:[%s172 + $0xf0] sm:$0xff] %vm889, %v855
      %921 = vst.msk [vmem:[%s172 + $0xf8] sm:$0xff] %vm889, %v856
      %922 = vst.msk [vmem:[%s172 + $0x100] sm:$0xff] %vm889, %v857
      %923 = vst.msk [vmem:[%s172 + $0x108] sm:$0xff] %vm889, %v858
      %924 = vst.msk [vmem:[%s172 + $0x110] sm:$0xff] %vm889, %v859
      %925 = vst.msk [vmem:[%s172 + $0x118] sm:$0xff] %vm889, %v860
      %926 = vst.msk [vmem:[%s172 + $0x120] sm:$0xff] %vm889, %v861
      %927 = vst.msk [vmem:[%s172 + $0x128] sm:$0xff] %vm889, %v862
      %928 = vst.msk [vmem:[%s172 + $0x130] sm:$0xff] %vm889, %v863
      %929 = vst.msk [vmem:[%s172 + $0x138] sm:$0xff] %vm889, %v864
      %930 = vst.msk [vmem:[%s172 + $0x140] sm:$0xff] %vm889, %v865
      %931 = vst.msk [vmem:[%s172 + $0x148] sm:$0xff] %vm889, %v866
      %932 = vst.msk [vmem:[%s172 + $0x150] sm:$0xff] %vm889, %v867
      %933 = vst.msk [vmem:[%s172 + $0x158] sm:$0xff] %vm889, %v868
      %934 = vst.msk [vmem:[%s172 + $0x160] sm:$0xff] %vm889, %v869
      %935 = vst.msk [vmem:[%s172 + $0x168] sm:$0xff] %vm889, %v870
      %936 = vst.msk [vmem:[%s172 + $0x170] sm:$0xff] %vm889, %v871
      %937 = vst.msk [vmem:[%s172 + $0x178] sm:$0xff] %vm889, %v872
      %938 = vst.msk [vmem:[%s172 + $0x180] sm:$0xff] %vm889, %v873
      %939 = vst.msk [vmem:[%s172 + $0x188] sm:$0xff] %vm889, %v874
      %940 = vst.msk [vmem:[%s172 + $0x190] sm:$0xff] %vm889, %v875
      %941 = vst.msk [vmem:[%s172 + $0x198] sm:$0xff] %vm889, %v876
      %942 = vst.msk [vmem:[%s172 + $0x1a0] sm:$0xff] %vm889, %v877
      %943 = vst.msk [vmem:[%s172 + $0x1a8] sm:$0xff] %vm889, %v878
      %944 = vst.msk [vmem:[%s172 + $0x1b0] sm:$0xff] %vm889, %v879
      %945 = vst.msk [vmem:[%s172 + $0x1b8] sm:$0xff] %vm889, %v880
      %946 = vst.msk [vmem:[%s172 + $0x1c0] sm:$0xff] %vm889, %v881
      %947 = vst.msk [vmem:[%s172 + $0x1c8] sm:$0xff] %vm889, %v882
      %948 = vst.msk [vmem:[%s172 + $0x1d0] sm:$0xff] %vm889, %v883
      %949 = vst.msk [vmem:[%s172 + $0x1d8] sm:$0xff] %vm889, %v884
      %950 = vst.msk [vmem:[%s172 + $0x1e0] sm:$0xff] %vm889, %v885
      %951 = vst.msk [vmem:[%s172 + $0x1e8] sm:$0xff] %vm889, %v886
      %952 = vst.msk [vmem:[%s172 + $0x1f0] sm:$0xff] %vm889, %v887
      %953 = vst.msk [vmem:[%s172 + $0x1f8] sm:$0xff] %vm889, %v888
      %s954 = smul.u32 64, %s14
      %p955 = scmp.lt.s32.totalorder %s954, 255
      %s956 = scalar_select %p955, %s954, 255
      %s957 = smul.addr %s956, 8
      %s958 = scalar_lea.vmem %s3, %s957
      // Predicated region
      $region33: #{bottleneck_pallas.2} parent=31 // pred_check
        %p959 = pneg %p100
      $region34: #{bottleneck_pallas.2} parent=31 // pred_check_branch
        %961 = sbr.rel (%p959) target = $region36
      $region35: #{bottleneck_pallas.2} parent=31 // pred_region
        %s962 = smul.u32 64, %s14
      $region36: #{bottleneck_pallas.2} parent=31 // pred_fallthru
        _
    $region32: #{bottleneck_pallas.2} parent=5 // pred_fallthru
      _
    %p963 = scmp.le.s32.totalorder 2, %s9
    // Predicated region
    $region37: #{bottleneck_pallas.2} parent=5 // pred_check
      %p964 = pneg %p963
    $region38: #{bottleneck_pallas.2} parent=5 // pred_check_branch
      %966 = sbr.rel (%p964) target = $region40
    $region39: #{bottleneck_pallas.2} parent=5 // pred_region
      %s967 = ssub.s32 %s9, 2
      // Predicated region
      $region41: #{bottleneck_pallas.2} parent=39 // pred_check
        %p968 = pneg %p106
      $region42: #{bottleneck_pallas.2} parent=39 // pred_check_branch
        %970 = sbr.rel (%p968) target = $region44
      $region43: #{bottleneck_pallas.2} parent=39 // pred_region
        %s971 = smul.u32 64, %s15
        %p972 = scmp.lt.s32.totalorder %s971, 255
        %s973 = scalar_select %p972, %s971, 255
        %s974 = smul.addr %s973, 8
        %s975 = scalar_lea.vmem %s3, %s974
      $region44: #{bottleneck_pallas.2} parent=39 // pred_fallthru
        _
    $region40: #{bottleneck_pallas.2} parent=5 // pred_fallthru
      _
  $region6: #{bottleneck_pallas.2} parent=0 // loop_footer
    %s13 = sadd.s32 1, %s9
  $region7: #{bottleneck_pallas.2} parent=0 // loop_footer_branch
    %8 = sbr.rel target = $region3
  $region8: #{bottleneck_pallas.2} parent=0 // loop_exit
    _

// kernel: bottleneck_pallas.3
$region0: #{bottleneck_pallas.3}
  #allocation0 [shape = 'u32[]', space=smem, size = 0x4, offset = 0x4, fixed_abs, tag = 'smem constant byte address 0x4 - core index']
  #allocation1 [shape = 'u32[144,128]{1,0:T(1,128)}', space=vmem, size = 0x12000, scoped, tag = 'internal scratch']
  %s0 = inlined_call_operand.vmem [shape: f32[512,72], index: 0, kind: input, shape index: {}]
  %s1 = inlined_call_operand.vmem [shape: f32[72,8], index: 1, kind: input, shape index: {}]
  %s2 = inlined_call_operand.vmem [shape: f32[1,8], index: 2, kind: input, shape index: {}]
  %s3 = inlined_call_operand.vmem [shape: f32[8,32], index: 3, kind: input, shape index: {}]
  %s4 = inlined_call_operand.vmem [shape: f32[1,32], index: 4, kind: input, shape index: {}]
  %s5 = inlined_call_operand.vmem [shape: f32[512,16], index: 5, kind: input, shape index: {}]
  %s6 = inlined_call_operand.vmem [shape: f32[16,32], index: 6, kind: input, shape index: {}]
  %s7 = inlined_call_operand.vmem [shape: f32[1,32], index: 7, kind: input, shape index: {}]
  %s8 = inlined_call_operand.hbm [shape: f32[512,32], index: 8, kind: output, shape index: {}]
  %s9 = sld [smem:[#allocation0]]
  $region42: #{bottleneck_pallas.3} parent=0
    _
  %s11 = ssub.s32 1, %s9
  %s12 = scalar_select 0, %s11, %s9
  $region1: #{bottleneck_pallas.3} parent=0
    #allocation2 [shape = 'u8[262144]{0}', space=vmem, size = 0x40000, scoped, tag = 'output window, operand 0, single buffered']
    #allocation3 [shape = 's32[1]{0}', space=sflag, size = 0x4, scoped, tag = 'scoped memory for bottleneck_pallas.3']
    %13 = vsyncpa [#allocation3], 0
    // Predicated region
    $region2: #{bottleneck_pallas.3} parent=1 // pred_check
      _
    $region3: #{bottleneck_pallas.3} parent=1 // pred_check_branch
      %15 = sbr.rel (0) target = $region5
    $region4: #{bottleneck_pallas.3} parent=1 // pred_region
      _
    $region5: #{bottleneck_pallas.3} parent=1 // pred_fallthru
      _
    // Predicated region
    $region6: #{bottleneck_pallas.3} parent=1 // pred_check
      _
    $region7: #{bottleneck_pallas.3} parent=1 // pred_check_branch
      %17 = sbr.rel (0) target = $region9
    $region8: #{bottleneck_pallas.3} parent=1 // pred_region
      _
    $region9: #{bottleneck_pallas.3} parent=1 // pred_fallthru
      _
    // Predicated region
    $region10: #{bottleneck_pallas.3} parent=1 // pred_check
      _
    $region11: #{bottleneck_pallas.3} parent=1 // pred_check_branch
      %19 = sbr.rel (0) target = $region13
    $region12: #{bottleneck_pallas.3} parent=1 // pred_region
      _
    $region13: #{bottleneck_pallas.3} parent=1 // pred_fallthru
      _
    // Predicated region
    $region14: #{bottleneck_pallas.3} parent=1 // pred_check
      _
    $region15: #{bottleneck_pallas.3} parent=1 // pred_check_branch
      %21 = sbr.rel (0) target = $region17
    $region16: #{bottleneck_pallas.3} parent=1 // pred_region
      _
    $region17: #{bottleneck_pallas.3} parent=1 // pred_fallthru
      _
    // Predicated region
    $region18: #{bottleneck_pallas.3} parent=1 // pred_check
      _
    $region19: #{bottleneck_pallas.3} parent=1 // pred_check_branch
      %23 = sbr.rel (0) target = $region21
    $region20: #{bottleneck_pallas.3} parent=1 // pred_region
      _
    $region21: #{bottleneck_pallas.3} parent=1 // pred_fallthru
      _
    // Predicated region
    $region22: #{bottleneck_pallas.3} parent=1 // pred_check
      _
    $region23: #{bottleneck_pallas.3} parent=1 // pred_check_branch
      %25 = sbr.rel (0) target = $region25
    $region24: #{bottleneck_pallas.3} parent=1 // pred_region
      _
    $region25: #{bottleneck_pallas.3} parent=1 // pred_fallthru
      _
    // Predicated region
    $region26: #{bottleneck_pallas.3} parent=1 // pred_check
      _
    $region27: #{bottleneck_pallas.3} parent=1 // pred_check_branch
      %27 = sbr.rel (0) target = $region29
    $region28: #{bottleneck_pallas.3} parent=1 // pred_region
      _
    $region29: #{bottleneck_pallas.3} parent=1 // pred_fallthru
      _
    // Predicated region
    $region30: #{bottleneck_pallas.3} parent=1 // pred_check
      _
    $region31: #{bottleneck_pallas.3} parent=1 // pred_check_branch
      %29 = sbr.rel (0) target = $region33
    $region32: #{bottleneck_pallas.3} parent=1 // pred_region
      _
    $region33: #{bottleneck_pallas.3} parent=1 // pred_fallthru
      _
    %v30 = vld [vmem:[%s0] sm:$0xff]
    %v31 = vld [vmem:[%s0 + $0x8] sm:$0xff]
    %v32 = vld [vmem:[%s0 + $0x10] sm:$0xff]
    %v33 = vld [vmem:[%s0 + $0x18] sm:$0xff]
    %v34 = vld [vmem:[%s0 + $0x20] sm:$0xff]
    %v35 = vld [vmem:[%s0 + $0x28] sm:$0xff]
    %v36 = vld [vmem:[%s0 + $0x30] sm:$0xff]
    %v37 = vld [vmem:[%s0 + $0x38] sm:$0xff]
    %v38 = vld [vmem:[%s0 + $0x40] sm:$0xff]
    %v39 = vld [vmem:[%s0 + $0x48] sm:$0xff]
    %v40 = vld [vmem:[%s0 + $0x50] sm:$0xff]
    %v41 = vld [vmem:[%s0 + $0x58] sm:$0xff]
    %v42 = vld [vmem:[%s0 + $0x60] sm:$0xff]
    %v43 = vld [vmem:[%s0 + $0x68] sm:$0xff]
    %v44 = vld [vmem:[%s0 + $0x70] sm:$0xff]
    %v45 = vld [vmem:[%s0 + $0x78] sm:$0xff]
    %v46 = vld [vmem:[%s0 + $0x80] sm:$0xff]
    %v47 = vld [vmem:[%s0 + $0x88] sm:$0xff]
    %v48 = vld [vmem:[%s0 + $0x90] sm:$0xff]
    %v49 = vld [vmem:[%s0 + $0x98] sm:$0xff]
    %v50 = vld [vmem:[%s0 + $0xa0] sm:$0xff]
    %v51 = vld [vmem:[%s0 + $0xa8] sm:$0xff]
    %v52 = vld [vmem:[%s0 + $0xb0] sm:$0xff]
    %v53 = vld [vmem:[%s0 + $0xb8] sm:$0xff]
    %v54 = vld [vmem:[%s0 + $0xc0] sm:$0xff]
    %v55 = vld [vmem:[%s0 + $0xc8] sm:$0xff]
    %v56 = vld [vmem:[%s0 + $0xd0] sm:$0xff]
    %v57 = vld [vmem:[%s0 + $0xd8] sm:$0xff]
    %v58 = vld [vmem:[%s0 + $0xe0] sm:$0xff]
    %v59 = vld [vmem:[%s0 + $0xe8] sm:$0xff]
    %v60 = vld [vmem:[%s0 + $0xf0] sm:$0xff]
    %v61 = vld [vmem:[%s0 + $0xf8] sm:$0xff]
    %v62 = vld [vmem:[%s0 + $0x100] sm:$0xff]
    %v63 = vld [vmem:[%s0 + $0x108] sm:$0xff]
    %v64 = vld [vmem:[%s0 + $0x110] sm:$0xff]
    %v65 = vld [vmem:[%s0 + $0x118] sm:$0xff]
    %v66 = vld [vmem:[%s0 + $0x120] sm:$0xff]
    %v67 = vld [vmem:[%s0 + $0x128] sm:$0xff]
    %v68 = vld [vmem:[%s0 + $0x130] sm:$0xff]
    %v69 = vld [vmem:[%s0 + $0x138] sm:$0xff]
    %v70 = vld [vmem:[%s0 + $0x140] sm:$0xff]
    %v71 = vld [vmem:[%s0 + $0x148] sm:$0xff]
    %v72 = vld [vmem:[%s0 + $0x150] sm:$0xff]
    %v73 = vld [vmem:[%s0 + $0x158] sm:$0xff]
    %v74 = vld [vmem:[%s0 + $0x160] sm:$0xff]
    %v75 = vld [vmem:[%s0 + $0x168] sm:$0xff]
    %v76 = vld [vmem:[%s0 + $0x170] sm:$0xff]
    %v77 = vld [vmem:[%s0 + $0x178] sm:$0xff]
    %v78 = vld [vmem:[%s0 + $0x180] sm:$0xff]
    %v79 = vld [vmem:[%s0 + $0x188] sm:$0xff]
    %v80 = vld [vmem:[%s0 + $0x190] sm:$0xff]
    %v81 = vld [vmem:[%s0 + $0x198] sm:$0xff]
    %v82 = vld [vmem:[%s0 + $0x1a0] sm:$0xff]
    %v83 = vld [vmem:[%s0 + $0x1a8] sm:$0xff]
    %v84 = vld [vmem:[%s0 + $0x1b0] sm:$0xff]
    %v85 = vld [vmem:[%s0 + $0x1b8] sm:$0xff]
    %v86 = vld [vmem:[%s0 + $0x1c0] sm:$0xff]
    %v87 = vld [vmem:[%s0 + $0x1c8] sm:$0xff]
    %v88 = vld [vmem:[%s0 + $0x1d0] sm:$0xff]
    %v89 = vld [vmem:[%s0 + $0x1d8] sm:$0xff]
    %v90 = vld [vmem:[%s0 + $0x1e0] sm:$0xff]
    %v91 = vld [vmem:[%s0 + $0x1e8] sm:$0xff]
    %v92 = vld [vmem:[%s0 + $0x1f0] sm:$0xff]
    %v93 = vld [vmem:[%s0 + $0x1f8] sm:$0xff]
    %v94 = vld [vmem:[%s1] sm:$0xff]
    %v95 = vld [vmem:[%s1 + $0x8] sm:$0xff]
    %v96 = vld [vmem:[%s1 + $0x10] sm:$0xff]
    %v97 = vld [vmem:[%s1 + $0x18] sm:$0xff]
    %v98 = vld [vmem:[%s1 + $0x20] sm:$0xff]
    %v99 = vld [vmem:[%s1 + $0x28] sm:$0xff]
    %v100 = vld [vmem:[%s1 + $0x30] sm:$0xff]
    %v101 = vld [vmem:[%s1 + $0x38] sm:$0xff]
    %v102 = vld [vmem:[%s1 + $0x40] sm:$0xff]
    %v103 = vld [vmem:[%s2] sm:$0x1]
    %v105 = vlaneseq
    %v106 = vshrl.u32 %v105, 7
    %v107 = vsub.s32 0, %v106
    %v108 = vrot.slane %v103, %v107
    %vm110 = vcmask 588800
    %v112 = vsel %vm110, %v30, 0
    %v115 = vsel %vm110, %v31, 0
    %v118 = vsel %vm110, %v32, 0
    %v121 = vsel %vm110, %v33, 0
    %v124 = vsel %vm110, %v34, 0
    %v127 = vsel %vm110, %v35, 0
    %v130 = vsel %vm110, %v36, 0
    %v133 = vsel %vm110, %v37, 0
    %v136 = vsel %vm110, %v38, 0
    %v139 = vsel %vm110, %v39, 0
    %v142 = vsel %vm110, %v40, 0
    %v145 = vsel %vm110, %v41, 0
    %v148 = vsel %vm110, %v42, 0
    %v151 = vsel %vm110, %v43, 0
    %v154 = vsel %vm110, %v44, 0
    %v157 = vsel %vm110, %v45, 0
    %v160 = vsel %vm110, %v46, 0
    %v163 = vsel %vm110, %v47, 0
    %v166 = vsel %vm110, %v48, 0
    %v169 = vsel %vm110, %v49, 0
    %v172 = vsel %vm110, %v50, 0
    %v175 = vsel %vm110, %v51, 0
    %v178 = vsel %vm110, %v52, 0
    %v181 = vsel %vm110, %v53, 0
    %v184 = vsel %vm110, %v54, 0
    %v187 = vsel %vm110, %v55, 0
    %v190 = vsel %vm110, %v56, 0
    %v193 = vsel %vm110, %v57, 0
    %v196 = vsel %vm110, %v58, 0
    %v199 = vsel %vm110, %v59, 0
    %v202 = vsel %vm110, %v60, 0
    %v205 = vsel %vm110, %v61, 0
    %v208 = vsel %vm110, %v62, 0
    %v211 = vsel %vm110, %v63, 0
    %v214 = vsel %vm110, %v64, 0
    %v217 = vsel %vm110, %v65, 0
    %v220 = vsel %vm110, %v66, 0
    %v223 = vsel %vm110, %v67, 0
    %v226 = vsel %vm110, %v68, 0
    %v229 = vsel %vm110, %v69, 0
    %v232 = vsel %vm110, %v70, 0
    %v235 = vsel %vm110, %v71, 0
    %v238 = vsel %vm110, %v72, 0
    %v241 = vsel %vm110, %v73, 0
    %v244 = vsel %vm110, %v74, 0
    %v247 = vsel %vm110, %v75, 0
    %v250 = vsel %vm110, %v76, 0
    %v253 = vsel %vm110, %v77, 0
    %v256 = vsel %vm110, %v78, 0
    %v259 = vsel %vm110, %v79, 0
    %v262 = vsel %vm110, %v80, 0
    %v265 = vsel %vm110, %v81, 0
    %v268 = vsel %vm110, %v82, 0
    %v271 = vsel %vm110, %v83, 0
    %v274 = vsel %vm110, %v84, 0
    %v277 = vsel %vm110, %v85, 0
    %v280 = vsel %vm110, %v86, 0
    %v283 = vsel %vm110, %v87, 0
    %v286 = vsel %vm110, %v88, 0
    %v289 = vsel %vm110, %v89, 0
    %v292 = vsel %vm110, %v90, 0
    %v295 = vsel %vm110, %v91, 0
    %v298 = vsel %vm110, %v92, 0
    %v301 = vsel %vm110, %v93, 0
    %303 = vmatprep.subr.mxu0 0.0
    %304 = vmatpush1.msra.mxu0 %v94
    %305 = vmatprep.subr.mxu0 0.0
    %306 = vmatpush1.msra.mxu0 %v95
    %307 = vmatprep.subr.mxu0 0.0
    %308 = vmatpush1.msra.mxu0 %v96
    %309 = vmatprep.subr.mxu0 0.0
    %310 = vmatpush1.msra.mxu0 %v97
    %311 = vmatprep.subr.mxu0 0.0
    %312 = vmatpush1.msra.mxu0 %v98
    %313 = vmatprep.subr.mxu0 0.0
    %314 = vmatpush1.msra.mxu0 %v99
    %315 = vmatprep.subr.mxu0 0.0
    %316 = vmatpush1.msra.mxu0 %v100
    %317 = vmatprep.subr.mxu0 0.0
    %318 = vmatpush1.msra.mxu0 %v101
    %319 = vmatprep.subr.mxu0 0.0
    %320 = vmatpush1.msra.mxu0 %v102
    %321 = vmatprep.subr.mxu0 0.0
    %322 = vmatpush1.msra.mxu0 0.0
    %323 = vmatprep.subr.mxu0 0.0
    %324 = vmatpush1.msra.mxu0 0.0
    %325 = vmatprep.subr.mxu0 0.0
    %326 = vmatpush1.msra.mxu0 0.0
    %327 = vmatprep.subr.mxu0 0.0
    %328 = vmatpush1.msra.mxu0 0.0
    %329 = vmatprep.subr.mxu0 0.0
    %330 = vmatpush1.msra.mxu0 0.0
    %331 = vmatprep.subr.mxu0 0.0
    %332 = vmatpush1.msra.mxu0 0.0
    %333 = vmatprep.subr.mxu0 0.0
    %334 = vmatpush1.msra.mxu0 0.0
    %335 = vmatprep.subr.mxu0 0.0
    %336 = vmatpush1.msra.mxu0 0.0
    %337 = vmatprep.subr.mxu0 0.0
    %338 = vmatpush1.msra.mxu0 0.0
    %339 = vmatprep.subr.mxu0 0.0
    %340 = vmatpush1.msra.mxu0 0.0
    %341 = vmatprep.subr.mxu0 0.0
    %342 = vmatpush1.msra.mxu0 0.0
    %343 = vmatprep.subr.mxu0 0.0
    %344 = vmatpush1.msra.mxu0 0.0
    %345 = vmatprep.subr.mxu0 0.0
    %346 = vmatpush1.msra.mxu0 0.0
    %347 = vmatprep.subr.mxu0 0.0
    %348 = vmatpush1.msra.mxu0 0.0
    %349 = vmatprep.subr.mxu0 0.0
    %350 = vmatpush1.msra.mxu0 0.0
    %351 = vmatprep.subr.mxu0 0.0
    %352 = vmatpush1.msra.mxu0 0.0
    %353 = vmatprep.subr.mxu0 0.0
    %354 = vmatpush1.msra.mxu0 0.0
    %355 = vmatprep.subr.mxu0 0.0
    %356 = vmatpush1.msra.mxu0 0.0
    %357 = vmatprep.subr.mxu0 0.0
    %358 = vmatpush1.msra.mxu0 0.0
    %359 = vmatprep.subr.mxu0 0.0
    %360 = vmatpush1.msra.mxu0 0.0
    %361 = vmatprep.subr.mxu0 0.0
    %362 = vmatpush1.msra.mxu0 0.0
    %363 = vmatprep.subr.mxu0 0.0
    %364 = vmatpush1.msra.mxu0 0.0
    %365 = vmatprep.subr.mxu0 0.0
    %366 = vmatpush1.msra.mxu0 0.0
    %367 = vmatprep.mubr.f32.mxu0 0.0
    %368 = vmatmul.mubr.f32.gmra.mrb[0].mxu0 %v112
    %v369 = vpop.f32.mrb[0].mxu0
    %v370 = vadd.f32 %v108, %v369
    %v371 = vpop.f32.mrb[0].mxu0
    %372 = vmatprep.mubr.f32.mxu0 0.0
    %373 = vmatmul.mubr.f32.gmra.mrb[0].mxu0 %v115
    %v374 = vpop.f32.mrb[0].mxu0
    %v375 = vadd.f32 %v108, %v374
    %v376 = vpop.f32.mrb[0].mxu0
    %377 = vmatprep.mubr.f32.mxu0 0.0
    %378 = vmatmul.mubr.f32.gmra.mrb[0].mxu0 %v118
    %v379 = vpop.f32.mrb[0].mxu0
    %v380 = vadd.f32 %v108, %v379
    %v381 = vpop.f32.mrb[0].mxu0
    %382 = vmatprep.mubr.f32.mxu0 0.0
    %383 = vmatmul.mubr.f32.gmra.mrb[0].mxu0 %v121
    %v384 = vpop.f32.mrb[0].mxu0
    %v385 = vadd.f32 %v108, %v384
    %v386 = vpop.f32.mrb[0].mxu0
    %387 = vmatprep.mubr.f32.mxu0 0.0
    %388 = vmatmul.mubr.f32.gmra.mrb[0].mxu0 %v124
    %v389 = vpop.f32.mrb[0].mxu0
    %v390 = vadd.f32 %v108, %v389
    %v391 = vpop.f32.mrb[0].mxu0
    %392 = vmatprep.mubr.f32.mxu0 0.0
    %393 = vmatmul.mubr.f32.gmra.mrb[0].mxu0 %v127
    %v394 = vpop.f32.mrb[0].mxu0
    %v395 = vadd.f32 %v108, %v394
    %v396 = vpop.f32.mrb[0].mxu0
    %397 = vmatprep.mubr.f32.mxu0 0.0
    %398 = vmatmul.mubr.f32.gmra.mrb[0].mxu0 %v130
    %v399 = vpop.f32.mrb[0].mxu0
    %v400 = vadd.f32 %v108, %v399
    %v401 = vpop.f32.mrb[0].mxu0
    %402 = vmatprep.mubr.f32.mxu0 0.0
    %403 = vmatmul.mubr.f32.gmra.mrb[0].mxu0 %v133
    %v404 = vpop.f32.mrb[0].mxu0
    %v405 = vadd.f32 %v108, %v404
    %v406 = vpop.f32.mrb[0].mxu0
    %407 = vmatprep.mubr.f32.mxu0 0.0
    %408 = vmatmul.mubr.f32.gmra.mrb[0].mxu0 %v136
    %v409 = vpop.f32.mrb[0].mxu0
    %v410 = vadd.f32 %v108, %v409
    %v411 = vpop.f32.mrb[0].mxu0
    %412 = vmatprep.mubr.f32.mxu0 0.0
    %413 = vmatmul.mubr.f32.gmra.mrb[0].mxu0 %v139
    %v414 = vpop.f32.mrb[0].mxu0
    %v415 = vadd.f32 %v108, %v414
    %v416 = vpop.f32.mrb[0].mxu0
    %417 = vmatprep.mubr.f32.mxu0 0.0
    %418 = vmatmul.mubr.f32.gmra.mrb[0].mxu0 %v142
    %v419 = vpop.f32.mrb[0].mxu0
    %v420 = vadd.f32 %v108, %v419
    %v421 = vpop.f32.mrb[0].mxu0
    %422 = vmatprep.mubr.f32.mxu0 0.0
    %423 = vmatmul.mubr.f32.gmra.mrb[0].mxu0 %v145
    %v424 = vpop.f32.mrb[0].mxu0
    %v425 = vadd.f32 %v108, %v424
    %v426 = vpop.f32.mrb[0].mxu0
    %427 = vmatprep.mubr.f32.mxu0 0.0
    %428 = vmatmul.mubr.f32.gmra.mrb[0].mxu0 %v148
    %v429 = vpop.f32.mrb[0].mxu0
    %v430 = vadd.f32 %v108, %v429
    %v431 = vpop.f32.mrb[0].mxu0
    %432 = vmatprep.mubr.f32.mxu0 0.0
    %433 = vmatmul.mubr.f32.gmra.mrb[0].mxu0 %v151
    %v434 = vpop.f32.mrb[0].mxu0
    %v435 = vadd.f32 %v108, %v434
    %v436 = vpop.f32.mrb[0].mxu0
    %437 = vmatprep.mubr.f32.mxu0 0.0
    %438 = vmatmul.mubr.f32.gmra.mrb[0].mxu0 %v154
    %v439 = vpop.f32.mrb[0].mxu0
    %v440 = vadd.f32 %v108, %v439
    %v441 = vpop.f32.mrb[0].mxu0
    %442 = vmatprep.mubr.f32.mxu0 0.0
    %443 = vmatmul.mubr.f32.gmra.mrb[0].mxu0 %v157
    %v444 = vpop.f32.mrb[0].mxu0
    %v445 = vadd.f32 %v108, %v444
    %v446 = vpop.f32.mrb[0].mxu0
    %447 = vmatprep.mubr.f32.mxu0 0.0
    %448 = vmatmul.mubr.f32.gmra.mrb[0].mxu0 %v160
    %v449 = vpop.f32.mrb[0].mxu0
    %v450 = vadd.f32 %v108, %v449
    %v451 = vpop.f32.mrb[0].mxu0
    %452 = vmatprep.mubr.f32.mxu0 0.0
    %453 = vmatmul.mubr.f32.gmra.mrb[0].mxu0 %v163
    %v454 = vpop.f32.mrb[0].mxu0
    %v455 = vadd.f32 %v108, %v454
    %v456 = vpop.f32.mrb[0].mxu0
    %457 = vmatprep.mubr.f32.mxu0 0.0
    %458 = vmatmul.mubr.f32.gmra.mrb[0].mxu0 %v166
    %v459 = vpop.f32.mrb[0].mxu0
    %v460 = vadd.f32 %v108, %v459
    %v461 = vpop.f32.mrb[0].mxu0
    %462 = vmatprep.mubr.f32.mxu0 0.0
    %463 = vmatmul.mubr.f32.gmra.mrb[0].mxu0 %v169
    %v464 = vpop.f32.mrb[0].mxu0
    %v465 = vadd.f32 %v108, %v464
    %v466 = vpop.f32.mrb[0].mxu0
    %467 = vmatprep.mubr.f32.mxu0 0.0
    %468 = vmatmul.mubr.f32.gmra.mrb[0].mxu0 %v172
    %v469 = vpop.f32.mrb[0].mxu0
    %v470 = vadd.f32 %v108, %v469
    %v471 = vpop.f32.mrb[0].mxu0
    %472 = vmatprep.mubr.f32.mxu0 0.0
    %473 = vmatmul.mubr.f32.gmra.mrb[0].mxu0 %v175
    %v474 = vpop.f32.mrb[0].mxu0
    %v475 = vadd.f32 %v108, %v474
    %v476 = vpop.f32.mrb[0].mxu0
    %477 = vmatprep.mubr.f32.mxu0 0.0
    %478 = vmatmul.mubr.f32.gmra.mrb[0].mxu0 %v178
    %v479 = vpop.f32.mrb[0].mxu0
    %v480 = vadd.f32 %v108, %v479
    %v481 = vpop.f32.mrb[0].mxu0
    %482 = vmatprep.mubr.f32.mxu0 0.0
    %483 = vmatmul.mubr.f32.gmra.mrb[0].mxu0 %v181
    %v484 = vpop.f32.mrb[0].mxu0
    %v485 = vadd.f32 %v108, %v484
    %v486 = vpop.f32.mrb[0].mxu0
    %487 = vmatprep.mubr.f32.mxu0 0.0
    %488 = vmatmul.mubr.f32.gmra.mrb[0].mxu0 %v184
    %v489 = vpop.f32.mrb[0].mxu0
    %v490 = vadd.f32 %v108, %v489
    %v491 = vpop.f32.mrb[0].mxu0
    %492 = vmatprep.mubr.f32.mxu0 0.0
    %493 = vmatmul.mubr.f32.gmra.mrb[0].mxu0 %v187
    %v494 = vpop.f32.mrb[0].mxu0
    %v495 = vadd.f32 %v108, %v494
    %v496 = vpop.f32.mrb[0].mxu0
    %497 = vmatprep.mubr.f32.mxu0 0.0
    %498 = vmatmul.mubr.f32.gmra.mrb[0].mxu0 %v190
    %v499 = vpop.f32.mrb[0].mxu0
    %v500 = vadd.f32 %v108, %v499
    %v501 = vpop.f32.mrb[0].mxu0
    %502 = vmatprep.mubr.f32.mxu0 0.0
    %503 = vmatmul.mubr.f32.gmra.mrb[0].mxu0 %v193
    %v504 = vpop.f32.mrb[0].mxu0
    %v505 = vadd.f32 %v108, %v504
    %v506 = vpop.f32.mrb[0].mxu0
    %507 = vmatprep.mubr.f32.mxu0 0.0
    %508 = vmatmul.mubr.f32.gmra.mrb[0].mxu0 %v196
    %v509 = vpop.f32.mrb[0].mxu0
    %v510 = vadd.f32 %v108, %v509
    %v511 = vpop.f32.mrb[0].mxu0
    %512 = vmatprep.mubr.f32.mxu0 0.0
    %513 = vmatmul.mubr.f32.gmra.mrb[0].mxu0 %v199
    %v514 = vpop.f32.mrb[0].mxu0
    %v515 = vadd.f32 %v108, %v514
    %v516 = vpop.f32.mrb[0].mxu0
    %517 = vmatprep.mubr.f32.mxu0 0.0
    %518 = vmatmul.mubr.f32.gmra.mrb[0].mxu0 %v202
    %v519 = vpop.f32.mrb[0].mxu0
    %v520 = vadd.f32 %v108, %v519
    %v521 = vpop.f32.mrb[0].mxu0
    %522 = vmatprep.mubr.f32.mxu0 0.0
    %523 = vmatmul.mubr.f32.gmra.mrb[0].mxu0 %v205
    %v524 = vpop.f32.mrb[0].mxu0
    %v525 = vadd.f32 %v108, %v524
    %v526 = vpop.f32.mrb[0].mxu0
    %527 = vmatprep.mubr.f32.mxu0 0.0
    %528 = vmatmul.mubr.f32.gmra.mrb[0].mxu0 %v208
    %v529 = vpop.f32.mrb[0].mxu0
    %v530 = vadd.f32 %v108, %v529
    %v531 = vpop.f32.mrb[0].mxu0
    %532 = vmatprep.mubr.f32.mxu0 0.0
    %533 = vmatmul.mubr.f32.gmra.mrb[0].mxu0 %v211
    %v534 = vpop.f32.mrb[0].mxu0
    %v535 = vadd.f32 %v108, %v534
    %v536 = vpop.f32.mrb[0].mxu0
    %537 = vmatprep.mubr.f32.mxu0 0.0
    %538 = vmatmul.mubr.f32.gmra.mrb[0].mxu0 %v214
    %v539 = vpop.f32.mrb[0].mxu0
    %v540 = vadd.f32 %v108, %v539
    %v541 = vpop.f32.mrb[0].mxu0
    %542 = vmatprep.mubr.f32.mxu0 0.0
    %543 = vmatmul.mubr.f32.gmra.mrb[0].mxu0 %v217
    %v544 = vpop.f32.mrb[0].mxu0
    %v545 = vadd.f32 %v108, %v544
    %v546 = vpop.f32.mrb[0].mxu0
    %547 = vmatprep.mubr.f32.mxu0 0.0
    %548 = vmatmul.mubr.f32.gmra.mrb[0].mxu0 %v220
    %v549 = vpop.f32.mrb[0].mxu0
    %v550 = vadd.f32 %v108, %v549
    %v551 = vpop.f32.mrb[0].mxu0
    %552 = vmatprep.mubr.f32.mxu0 0.0
    %553 = vmatmul.mubr.f32.gmra.mrb[0].mxu0 %v223
    %v554 = vpop.f32.mrb[0].mxu0
    %v555 = vadd.f32 %v108, %v554
    %v556 = vpop.f32.mrb[0].mxu0
    %557 = vmatprep.mubr.f32.mxu0 0.0
    %558 = vmatmul.mubr.f32.gmra.mrb[0].mxu0 %v226
    %v559 = vpop.f32.mrb[0].mxu0
    %v560 = vadd.f32 %v108, %v559
    %v561 = vpop.f32.mrb[0].mxu0
    %562 = vmatprep.mubr.f32.mxu0 0.0
    %563 = vmatmul.mubr.f32.gmra.mrb[0].mxu0 %v229
    %v564 = vpop.f32.mrb[0].mxu0
    %v565 = vadd.f32 %v108, %v564
    %v566 = vpop.f32.mrb[0].mxu0
    %567 = vmatprep.mubr.f32.mxu0 0.0
    %568 = vmatmul.mubr.f32.gmra.mrb[0].mxu0 %v232
    %v569 = vpop.f32.mrb[0].mxu0
    %v570 = vadd.f32 %v108, %v569
    %v571 = vpop.f32.mrb[0].mxu0
    %572 = vmatprep.mubr.f32.mxu0 0.0
    %573 = vmatmul.mubr.f32.gmra.mrb[0].mxu0 %v235
    %v574 = vpop.f32.mrb[0].mxu0
    %v575 = vadd.f32 %v108, %v574
    %v576 = vpop.f32.mrb[0].mxu0
    %577 = vmatprep.mubr.f32.mxu0 0.0
    %578 = vmatmul.mubr.f32.gmra.mrb[0].mxu0 %v238
    %v579 = vpop.f32.mrb[0].mxu0
    %v580 = vadd.f32 %v108, %v579
    %v581 = vpop.f32.mrb[0].mxu0
    %582 = vmatprep.mubr.f32.mxu0 0.0
    %583 = vmatmul.mubr.f32.gmra.mrb[0].mxu0 %v241
    %v584 = vpop.f32.mrb[0].mxu0
    %v585 = vadd.f32 %v108, %v584
    %v586 = vpop.f32.mrb[0].mxu0
    %587 = vmatprep.mubr.f32.mxu0 0.0
    %588 = vmatmul.mubr.f32.gmra.mrb[0].mxu0 %v244
    %v589 = vpop.f32.mrb[0].mxu0
    %v590 = vadd.f32 %v108, %v589
    %v591 = vpop.f32.mrb[0].mxu0
    %592 = vmatprep.mubr.f32.mxu0 0.0
    %593 = vmatmul.mubr.f32.gmra.mrb[0].mxu0 %v247
    %v594 = vpop.f32.mrb[0].mxu0
    %v595 = vadd.f32 %v108, %v594
    %v596 = vpop.f32.mrb[0].mxu0
    %597 = vmatprep.mubr.f32.mxu0 0.0
    %598 = vmatmul.mubr.f32.gmra.mrb[0].mxu0 %v250
    %v599 = vpop.f32.mrb[0].mxu0
    %v600 = vadd.f32 %v108, %v599
    %v601 = vpop.f32.mrb[0].mxu0
    %602 = vmatprep.mubr.f32.mxu0 0.0
    %603 = vmatmul.mubr.f32.gmra.mrb[0].mxu0 %v253
    %v604 = vpop.f32.mrb[0].mxu0
    %v605 = vadd.f32 %v108, %v604
    %v606 = vpop.f32.mrb[0].mxu0
    %607 = vmatprep.mubr.f32.mxu0 0.0
    %608 = vmatmul.mubr.f32.gmra.mrb[0].mxu0 %v256
    %v609 = vpop.f32.mrb[0].mxu0
    %v610 = vadd.f32 %v108, %v609
    %v611 = vpop.f32.mrb[0].mxu0
    %612 = vmatprep.mubr.f32.mxu0 0.0
    %613 = vmatmul.mubr.f32.gmra.mrb[0].mxu0 %v259
    %v614 = vpop.f32.mrb[0].mxu0
    %v615 = vadd.f32 %v108, %v614
    %v616 = vpop.f32.mrb[0].mxu0
    %617 = vmatprep.mubr.f32.mxu0 0.0
    %618 = vmatmul.mubr.f32.gmra.mrb[0].mxu0 %v262
    %v619 = vpop.f32.mrb[0].mxu0
    %v620 = vadd.f32 %v108, %v619
    %v621 = vpop.f32.mrb[0].mxu0
    %622 = vmatprep.mubr.f32.mxu0 0.0
    %623 = vmatmul.mubr.f32.gmra.mrb[0].mxu0 %v265
    %v624 = vpop.f32.mrb[0].mxu0
    %v625 = vadd.f32 %v108, %v624
    %v626 = vpop.f32.mrb[0].mxu0
    %627 = vmatprep.mubr.f32.mxu0 0.0
    %628 = vmatmul.mubr.f32.gmra.mrb[0].mxu0 %v268
    %v629 = vpop.f32.mrb[0].mxu0
    %v630 = vadd.f32 %v108, %v629
    %v631 = vpop.f32.mrb[0].mxu0
    %632 = vmatprep.mubr.f32.mxu0 0.0
    %633 = vmatmul.mubr.f32.gmra.mrb[0].mxu0 %v271
    %v634 = vpop.f32.mrb[0].mxu0
    %v635 = vadd.f32 %v108, %v634
    %v636 = vpop.f32.mrb[0].mxu0
    %637 = vmatprep.mubr.f32.mxu0 0.0
    %638 = vmatmul.mubr.f32.gmra.mrb[0].mxu0 %v274
    %v639 = vpop.f32.mrb[0].mxu0
    %v640 = vadd.f32 %v108, %v639
    %v641 = vpop.f32.mrb[0].mxu0
    %642 = vmatprep.mubr.f32.mxu0 0.0
    %643 = vmatmul.mubr.f32.gmra.mrb[0].mxu0 %v277
    %v644 = vpop.f32.mrb[0].mxu0
    %v645 = vadd.f32 %v108, %v644
    %v646 = vpop.f32.mrb[0].mxu0
    %647 = vmatprep.mubr.f32.mxu0 0.0
    %648 = vmatmul.mubr.f32.gmra.mrb[0].mxu0 %v280
    %v649 = vpop.f32.mrb[0].mxu0
    %v650 = vadd.f32 %v108, %v649
    %v651 = vpop.f32.mrb[0].mxu0
    %652 = vmatprep.mubr.f32.mxu0 0.0
    %653 = vmatmul.mubr.f32.gmra.mrb[0].mxu0 %v283
    %v654 = vpop.f32.mrb[0].mxu0
    %v655 = vadd.f32 %v108, %v654
    %v656 = vpop.f32.mrb[0].mxu0
    %657 = vmatprep.mubr.f32.mxu0 0.0
    %658 = vmatmul.mubr.f32.gmra.mrb[0].mxu0 %v286
    %v659 = vpop.f32.mrb[0].mxu0
    %v660 = vadd.f32 %v108, %v659
    %v661 = vpop.f32.mrb[0].mxu0
    %662 = vmatprep.mubr.f32.mxu0 0.0
    %663 = vmatmul.mubr.f32.gmra.mrb[0].mxu0 %v289
    %v664 = vpop.f32.mrb[0].mxu0
    %v665 = vadd.f32 %v108, %v664
    %v666 = vpop.f32.mrb[0].mxu0
    %667 = vmatprep.mubr.f32.mxu0 0.0
    %668 = vmatmul.mubr.f32.gmra.mrb[0].mxu0 %v292
    %v669 = vpop.f32.mrb[0].mxu0
    %v670 = vadd.f32 %v108, %v669
    %v671 = vpop.f32.mrb[0].mxu0
    %672 = vmatprep.mubr.f32.mxu0 0.0
    %673 = vmatmul.mubr.f32.gmra.mrb[0].mxu0 %v295
    %v674 = vpop.f32.mrb[0].mxu0
    %v675 = vadd.f32 %v108, %v674
    %v676 = vpop.f32.mrb[0].mxu0
    %677 = vmatprep.mubr.f32.mxu0 0.0
    %678 = vmatmul.mubr.f32.gmra.mrb[0].mxu0 %v298
    %v679 = vpop.f32.mrb[0].mxu0
    %v680 = vadd.f32 %v108, %v679
    %v681 = vpop.f32.mrb[0].mxu0
    %682 = vmatprep.mubr.f32.mxu0 0.0
    %683 = vmatmul.mubr.f32.gmra.mrb[0].mxu0 %v301
    %v684 = vpop.f32.mrb[0].mxu0
    %v685 = vadd.f32 %v108, %v684
    %v686 = vpop.f32.mrb[0].mxu0
    %687 = vdwg.mxu0
    %v688 = vmax.f32 %v370, 0.0
    %v689 = vmax.f32 %v375, 0.0
    %v690 = vmax.f32 %v380, 0.0
    %v691 = vmax.f32 %v385, 0.0
    %v692 = vmax.f32 %v390, 0.0
    %v693 = vmax.f32 %v395, 0.0
    %v694 = vmax.f32 %v400, 0.0
    %v695 = vmax.f32 %v405, 0.0
    %v696 = vmax.f32 %v410, 0.0
    %v697 = vmax.f32 %v415, 0.0
    %v698 = vmax.f32 %v420, 0.0
    %v699 = vmax.f32 %v425, 0.0
    %v700 = vmax.f32 %v430, 0.0
    %v701 = vmax.f32 %v435, 0.0
    %v702 = vmax.f32 %v440, 0.0
    %v703 = vmax.f32 %v445, 0.0
    %v704 = vmax.f32 %v450, 0.0
    %v705 = vmax.f32 %v455, 0.0
    %v706 = vmax.f32 %v460, 0.0
    %v707 = vmax.f32 %v465, 0.0
    %v708 = vmax.f32 %v470, 0.0
    %v709 = vmax.f32 %v475, 0.0
    %v710 = vmax.f32 %v480, 0.0
    %v711 = vmax.f32 %v485, 0.0
    %v712 = vmax.f32 %v490, 0.0
    %v713 = vmax.f32 %v495, 0.0
    %v714 = vmax.f32 %v500, 0.0
    %v715 = vmax.f32 %v505, 0.0
    %v716 = vmax.f32 %v510, 0.0
    %v717 = vmax.f32 %v515, 0.0
    %v718 = vmax.f32 %v520, 0.0
    %v719 = vmax.f32 %v525, 0.0
    %v720 = vmax.f32 %v530, 0.0
    %v721 = vmax.f32 %v535, 0.0
    %v722 = vmax.f32 %v540, 0.0
    %v723 = vmax.f32 %v545, 0.0
    %v724 = vmax.f32 %v550, 0.0
    %v725 = vmax.f32 %v555, 0.0
    %v726 = vmax.f32 %v560, 0.0
    %v727 = vmax.f32 %v565, 0.0
    %v728 = vmax.f32 %v570, 0.0
    %v729 = vmax.f32 %v575, 0.0
    %v730 = vmax.f32 %v580, 0.0
    %v731 = vmax.f32 %v585, 0.0
    %v732 = vmax.f32 %v590, 0.0
    %v733 = vmax.f32 %v595, 0.0
    %v734 = vmax.f32 %v600, 0.0
    %v735 = vmax.f32 %v605, 0.0
    %v736 = vmax.f32 %v610, 0.0
    %v737 = vmax.f32 %v615, 0.0
    %v738 = vmax.f32 %v620, 0.0
    %v739 = vmax.f32 %v625, 0.0
    %v740 = vmax.f32 %v630, 0.0
    %v741 = vmax.f32 %v635, 0.0
    %v742 = vmax.f32 %v640, 0.0
    %v743 = vmax.f32 %v645, 0.0
    %v744 = vmax.f32 %v650, 0.0
    %v745 = vmax.f32 %v655, 0.0
    %v746 = vmax.f32 %v660, 0.0
    %v747 = vmax.f32 %v665, 0.0
    %v748 = vmax.f32 %v670, 0.0
    %v749 = vmax.f32 %v675, 0.0
    %v750 = vmax.f32 %v680, 0.0
    %v751 = vmax.f32 %v685, 0.0
    %v752 = vld [vmem:[%s3] sm:$0xff]
    %v753 = vld [vmem:[%s4] sm:$0x1]
    %v755 = vlaneseq
    %v756 = vshrl.u32 %v755, 7
    %v757 = vsub.s32 0, %v756
    %v758 = vrot.slane %v753, %v757
    %vm760 = vcmask 64512
    %v762 = vsel %vm760, %v688, 0
    %v765 = vsel %vm760, %v689, 0
    %v768 = vsel %vm760, %v690, 0
    %v771 = vsel %vm760, %v691, 0
    %v774 = vsel %vm760, %v692, 0
    %v777 = vsel %vm760, %v693, 0
    %v780 = vsel %vm760, %v694, 0
    %v783 = vsel %vm760, %v695, 0
    %v786 = vsel %vm760, %v696, 0
    %v789 = vsel %vm760, %v697, 0
    %v792 = vsel %vm760, %v698, 0
    %v795 = vsel %vm760, %v699, 0
    %v798 = vsel %vm760, %v700, 0
    %v801 = vsel %vm760, %v701, 0
    %v804 = vsel %vm760, %v702, 0
    %v807 = vsel %vm760, %v703, 0
    %v810 = vsel %vm760, %v704, 0
    %v813 = vsel %vm760, %v705, 0
    %v816 = vsel %vm760, %v706, 0
    %v819 = vsel %vm760, %v707, 0
    %v822 = vsel %vm760, %v708, 0
    %v825 = vsel %vm760, %v709, 0
    %v828 = vsel %vm760, %v710, 0
    %v831 = vsel %vm760, %v711, 0
    %v834 = vsel %vm760, %v712, 0
    %v837 = vsel %vm760, %v713, 0
    %v840 = vsel %vm760, %v714, 0
    %v843 = vsel %vm760, %v715, 0
    %v846 = vsel %vm760, %v716, 0
    %v849 = vsel %vm760, %v717, 0
    %v852 = vsel %vm760, %v718, 0
    %v855 = vsel %vm760, %v719, 0
    %v858 = vsel %vm760, %v720, 0
    %v861 = vsel %vm760, %v721, 0
    %v864 = vsel %vm760, %v722, 0
    %v867 = vsel %vm760, %v723, 0
    %v870 = vsel %vm760, %v724, 0
    %v873 = vsel %vm760, %v725, 0
    %v876 = vsel %vm760, %v726, 0
    %v879 = vsel %vm760, %v727, 0
    %v882 = vsel %vm760, %v728, 0
    %v885 = vsel %vm760, %v729, 0
    %v888 = vsel %vm760, %v730, 0
    %v891 = vsel %vm760, %v731, 0
    %v894 = vsel %vm760, %v732, 0
    %v897 = vsel %vm760, %v733, 0
    %v900 = vsel %vm760, %v734, 0
    %v903 = vsel %vm760, %v735, 0
    %v906 = vsel %vm760, %v736, 0
    %v909 = vsel %vm760, %v737, 0
    %v912 = vsel %vm760, %v738, 0
    %v915 = vsel %vm760, %v739, 0
    %v918 = vsel %vm760, %v740, 0
    %v921 = vsel %vm760, %v741, 0
    %v924 = vsel %vm760, %v742, 0
    %v927 = vsel %vm760, %v743, 0
    %v930 = vsel %vm760, %v744, 0
    %v933 = vsel %vm760, %v745, 0
    %v936 = vsel %vm760, %v746, 0
    %v939 = vsel %vm760, %v747, 0
    %v942 = vsel %vm760, %v748, 0
    %v945 = vsel %vm760, %v749, 0
    %v948 = vsel %vm760, %v750, 0
    %v951 = vsel %vm760, %v751, 0
    %953 = vmatprep.subr.mxu0 0.0
    %954 = vmatpush1.msra.mxu0 %v752
    %955 = vmatprep.subr.mxu0 0.0
    %956 = vmatpush1.msra.mxu0 0.0
    %957 = vmatprep.subr.mxu0 0.0
    %958 = vmatpush1.msra.mxu0 0.0
    %959 = vmatprep.subr.mxu0 0.0
    %960 = vmatpush1.msra.mxu0 0.0
    %961 = vmatprep.subr.mxu0 0.0
    %962 = vmatpush1.msra.mxu0 0.0
    %963 = vmatprep.subr.mxu0 0.0
    %964 = vmatpush1.msra.mxu0 0.0
    %965 = vmatprep.subr.mxu0 0.0
    %966 = vmatpush1.msra.mxu0 0.0
    %967 = vmatprep.subr.mxu0 0.0
    %968 = vmatpush1.msra.mxu0 0.0
    %969 = vmatprep.subr.mxu0 0.0
    %970 = vmatpush1.msra.mxu0 0.0
    %971 = vmatprep.subr.mxu0 0.0
    %972 = vmatpush1.msra.mxu0 0.0
    %973 = vmatprep.subr.mxu0 0.0
    %974 = vmatpush1.msra.mxu0 0.0
    %975 = vmatprep.subr.mxu0 0.0
    %976 = vmatpush1.msra.mxu0 0.0
    %977 = vmatprep.subr.mxu0 0.0
    %978 = vmatpush1.msra.mxu0 0.0
    %979 = vmatprep.subr.mxu0 0.0
    %980 = vmatpush1.msra.mxu0 0.0
    %981 = vmatprep.subr.mxu0 0.0
    %982 = vmatpush1.msra.mxu0 0.0
    %983 = vmatprep.subr.mxu0 0.0
    %984 = vmatpush1.msra.mxu0 0.0
    %985 = vmatprep.subr.mxu0 0.0
    %986 = vmatpush1.msra.mxu0 0.0
    %987 = vmatprep.subr.mxu0 0.0
    %988 = vmatpush1.msra.mxu0 0.0
    %989 = vmatprep.subr.mxu0 0.0
    %990 = vmatpush1.msra.mxu0 0.0
    %991 = vmatprep.subr.mxu0 0.0
    %992 = vmatpush1.msra.mxu0 0.0
    %993 = vmatprep.subr.mxu0 0.0
    %994 = vmatpush1.msra.mxu0 0.0
    %995 = vmatprep.subr.mxu0 0.0
    %996 = vmatpush1.msra.mxu0 0.0
    %997 = vmatprep.subr.mxu0 0.0
    %998 = vmatpush1.msra.mxu0 0.0
    %999 = vmatprep.subr.mxu0 0.0
    %1000 = vmatpush1.msra.mxu0 0.0
    %1001 = vmatprep.subr.mxu0 0.0
    %1002 = vmatpush1.msra.mxu0 0.0
    %1003 = vmatprep.subr.mxu0 0.0
    %1004 = vmatpush1.msra.mxu0 0.0
    %1005 = vmatprep.subr.mxu0 0.0
    %1006 = vmatpush1.msra.mxu0 0.0
    %1007 = vmatprep.subr.mxu0 0.0
    %1008 = vmatpush1.msra.mxu0 0.0
    %1009 = vmatprep.subr.mxu0 0.0
    %1010 = vmatpush1.msra.mxu0 0.0
    %1011 = vmatprep.subr.mxu0 0.0
    %1012 = vmatpush1.msra.mxu0 0.0
    %1013 = vmatprep.subr.mxu0 0.0
    %1014 = vmatpush1.msra.mxu0 0.0
    %1015 = vmatprep.subr.mxu0 0.0
    %1016 = vmatpush1.msra.mxu0 0.0
    %1017 = vmatprep.mubr.f32.mxu0 0.0
    %1018 = vmatmul.mubr.f32.gmra.mrb[0].mxu0 %v762
    %v1019 = vpop.f32.mrb[0].mxu0
    %v1020 = vadd.f32 %v758, %v1019
    %v1021 = vpop.f32.mrb[0].mxu0
    %1022 = vmatprep.mubr.f32.mxu0 0.0
    %1023 = vmatmul.mubr.f32.gmra.mrb[0].mxu0 %v765
    %v1024 = vpop.f32.mrb[0].mxu0
    %v1025 = vadd.f32 %v758, %v1024
    %v1026 = vpop.f32.mrb[0].mxu0
    %1027 = vmatprep.mubr.f32.mxu0 0.0
    %1028 = vmatmul.mubr.f32.gmra.mrb[0].mxu0 %v768
    %v1029 = vpop.f32.mrb[0].mxu0
    %v1030 = vadd.f32 %v758, %v1029
    %v1031 = vpop.f32.mrb[0].mxu0
    %1032 = vmatprep.mubr.f32.mxu0 0.0
    %1033 = vmatmul.mubr.f32.gmra.mrb[0].mxu0 %v771
    %v1034 = vpop.f32.mrb[0].mxu0
    %v1035 = vadd.f32 %v758, %v1034
    %v1036 = vpop.f32.mrb[0].mxu0
    %1037 = vmatprep.mubr.f32.mxu0 0.0
    %1038 = vmatmul.mubr.f32.gmra.mrb[0].mxu0 %v774
    %v1039 = vpop.f32.mrb[0].mxu0
    %v1040 = vadd.f32 %v758, %v1039
    %v1041 = vpop.f32.mrb[0].mxu0
    %1042 = vmatprep.mubr.f32.mxu0 0.0
    %1043 = vmatmul.mubr.f32.gmra.mrb[0].mxu0 %v777
    %v1044 = vpop.f32.mrb[0].mxu0
    %v1045 = vadd.f32 %v758, %v1044
    %v1046 = vpop.f32.mrb[0].mxu0
    %1047 = vmatprep.mubr.f32.mxu0 0.0
    %1048 = vmatmul.mubr.f32.gmra.mrb[0].mxu0 %v780
    %v1049 = vpop.f32.mrb[0].mxu0
    %v1050 = vadd.f32 %v758, %v1049
    %v1051 = vpop.f32.mrb[0].mxu0
    %1052 = vmatprep.mubr.f32.mxu0 0.0
    %1053 = vmatmul.mubr.f32.gmra.mrb[0].mxu0 %v783
    %v1054 = vpop.f32.mrb[0].mxu0
    %v1055 = vadd.f32 %v758, %v1054
    %v1056 = vpop.f32.mrb[0].mxu0
    %1057 = vmatprep.mubr.f32.mxu0 0.0
    %1058 = vmatmul.mubr.f32.gmra.mrb[0].mxu0 %v786
    %v1059 = vpop.f32.mrb[0].mxu0
    %v1060 = vadd.f32 %v758, %v1059
    %v1061 = vpop.f32.mrb[0].mxu0
    %1062 = vmatprep.mubr.f32.mxu0 0.0
    %1063 = vmatmul.mubr.f32.gmra.mrb[0].mxu0 %v789
    %v1064 = vpop.f32.mrb[0].mxu0
    %v1065 = vadd.f32 %v758, %v1064
    %v1066 = vpop.f32.mrb[0].mxu0
    %1067 = vmatprep.mubr.f32.mxu0 0.0
    %1068 = vmatmul.mubr.f32.gmra.mrb[0].mxu0 %v792
    %v1069 = vpop.f32.mrb[0].mxu0
    %v1070 = vadd.f32 %v758, %v1069
    %v1071 = vpop.f32.mrb[0].mxu0
    %1072 = vmatprep.mubr.f32.mxu0 0.0
    %1073 = vmatmul.mubr.f32.gmra.mrb[0].mxu0 %v795
    %v1074 = vpop.f32.mrb[0].mxu0
    %v1075 = vadd.f32 %v758, %v1074
    %v1076 = vpop.f32.mrb[0].mxu0
    %1077 = vmatprep.mubr.f32.mxu0 0.0
    %1078 = vmatmul.mubr.f32.gmra.mrb[0].mxu0 %v798
    %v1079 = vpop.f32.mrb[0].mxu0
    %v1080 = vadd.f32 %v758, %v1079
    %v1081 = vpop.f32.mrb[0].mxu0
    %1082 = vmatprep.mubr.f32.mxu0 0.0
    %1083 = vmatmul.mubr.f32.gmra.mrb[0].mxu0 %v801
    %v1084 = vpop.f32.mrb[0].mxu0
    %v1085 = vadd.f32 %v758, %v1084
    %v1086 = vpop.f32.mrb[0].mxu0
    %1087 = vmatprep.mubr.f32.mxu0 0.0
    %1088 = vmatmul.mubr.f32.gmra.mrb[0].mxu0 %v804
    %v1089 = vpop.f32.mrb[0].mxu0
    %v1090 = vadd.f32 %v758, %v1089
    %v1091 = vpop.f32.mrb[0].mxu0
    %1092 = vmatprep.mubr.f32.mxu0 0.0
    %1093 = vmatmul.mubr.f32.gmra.mrb[0].mxu0 %v807
    %v1094 = vpop.f32.mrb[0].mxu0
    %v1095 = vadd.f32 %v758, %v1094
    %v1096 = vpop.f32.mrb[0].mxu0
    %1097 = vmatprep.mubr.f32.mxu0 0.0
    %1098 = vmatmul.mubr.f32.gmra.mrb[0].mxu0 %v810
    %v1099 = vpop.f32.mrb[0].mxu0
    %v1100 = vadd.f32 %v758, %v1099
    %v1101 = vpop.f32.mrb[0].mxu0
    %1102 = vmatprep.mubr.f32.mxu0 0.0
    %1103 = vmatmul.mubr.f32.gmra.mrb[0].mxu0 %v813
    %v1104 = vpop.f32.mrb[0].mxu0
    %v1105 = vadd.f32 %v758, %v1104
    %v1106 = vpop.f32.mrb[0].mxu0
    %1107 = vmatprep.mubr.f32.mxu0 0.0
    %1108 = vmatmul.mubr.f32.gmra.mrb[0].mxu0 %v816
    %v1109 = vpop.f32.mrb[0].mxu0
    %v1110 = vadd.f32 %v758, %v1109
    %v1111 = vpop.f32.mrb[0].mxu0
    %1112 = vmatprep.mubr.f32.mxu0 0.0
    %1113 = vmatmul.mubr.f32.gmra.mrb[0].mxu0 %v819
    %v1114 = vpop.f32.mrb[0].mxu0
    %v1115 = vadd.f32 %v758, %v1114
    %v1116 = vpop.f32.mrb[0].mxu0
    %1117 = vmatprep.mubr.f32.mxu0 0.0
    %1118 = vmatmul.mubr.f32.gmra.mrb[0].mxu0 %v822
    %v1119 = vpop.f32.mrb[0].mxu0
    %v1120 = vadd.f32 %v758, %v1119
    %v1121 = vpop.f32.mrb[0].mxu0
    %1122 = vmatprep.mubr.f32.mxu0 0.0
    %1123 = vmatmul.mubr.f32.gmra.mrb[0].mxu0 %v825
    %v1124 = vpop.f32.mrb[0].mxu0
    %v1125 = vadd.f32 %v758, %v1124
    %v1126 = vpop.f32.mrb[0].mxu0
    %1127 = vmatprep.mubr.f32.mxu0 0.0
    %1128 = vmatmul.mubr.f32.gmra.mrb[0].mxu0 %v828
    %v1129 = vpop.f32.mrb[0].mxu0
    %v1130 = vadd.f32 %v758, %v1129
    %v1131 = vpop.f32.mrb[0].mxu0
    %1132 = vmatprep.mubr.f32.mxu0 0.0
    %1133 = vmatmul.mubr.f32.gmra.mrb[0].mxu0 %v831
    %v1134 = vpop.f32.mrb[0].mxu0
    %v1135 = vadd.f32 %v758, %v1134
    %v1136 = vpop.f32.mrb[0].mxu0
    %1137 = vmatprep.mubr.f32.mxu0 0.0
    %1138 = vmatmul.mubr.f32.gmra.mrb[0].mxu0 %v834
    %v1139 = vpop.f32.mrb[0].mxu0
    %v1140 = vadd.f32 %v758, %v1139
    %v1141 = vpop.f32.mrb[0].mxu0
    %1142 = vmatprep.mubr.f32.mxu0 0.0
    %1143 = vmatmul.mubr.f32.gmra.mrb[0].mxu0 %v837
    %v1144 = vpop.f32.mrb[0].mxu0
    %v1145 = vadd.f32 %v758, %v1144
    %v1146 = vpop.f32.mrb[0].mxu0
    %1147 = vmatprep.mubr.f32.mxu0 0.0
    %1148 = vmatmul.mubr.f32.gmra.mrb[0].mxu0 %v840
    %v1149 = vpop.f32.mrb[0].mxu0
    %v1150 = vadd.f32 %v758, %v1149
    %v1151 = vpop.f32.mrb[0].mxu0
    %1152 = vmatprep.mubr.f32.mxu0 0.0
    %1153 = vmatmul.mubr.f32.gmra.mrb[0].mxu0 %v843
    %v1154 = vpop.f32.mrb[0].mxu0
    %v1155 = vadd.f32 %v758, %v1154
    %v1156 = vpop.f32.mrb[0].mxu0
    %1157 = vmatprep.mubr.f32.mxu0 0.0
    %1158 = vmatmul.mubr.f32.gmra.mrb[0].mxu0 %v846
    %v1159 = vpop.f32.mrb[0].mxu0
    %v1160 = vadd.f32 %v758, %v1159
    %v1161 = vpop.f32.mrb[0].mxu0
    %1162 = vmatprep.mubr.f32.mxu0 0.0
    %1163 = vmatmul.mubr.f32.gmra.mrb[0].mxu0 %v849
    %v1164 = vpop.f32.mrb[0].mxu0
    %v1165 = vadd.f32 %v758, %v1164
    %v1166 = vpop.f32.mrb[0].mxu0
    %1167 = vmatprep.mubr.f32.mxu0 0.0
    %1168 = vmatmul.mubr.f32.gmra.mrb[0].mxu0 %v852
    %v1169 = vpop.f32.mrb[0].mxu0
    %v1170 = vadd.f32 %v758, %v1169
    %v1171 = vpop.f32.mrb[0].mxu0
    %1172 = vmatprep.mubr.f32.mxu0 0.0
    %1173 = vmatmul.mubr.f32.gmra.mrb[0].mxu0 %v855
    %v1174 = vpop.f32.mrb[0].mxu0
    %v1175 = vadd.f32 %v758, %v1174
    %v1176 = vpop.f32.mrb[0].mxu0
    %1177 = vmatprep.mubr.f32.mxu0 0.0
    %1178 = vmatmul.mubr.f32.gmra.mrb[0].mxu0 %v858
    %v1179 = vpop.f32.mrb[0].mxu0
    %v1180 = vadd.f32 %v758, %v1179
    %v1181 = vpop.f32.mrb[0].mxu0
    %1182 = vmatprep.mubr.f32.mxu0 0.0
    %1183 = vmatmul.mubr.f32.gmra.mrb[0].mxu0 %v861
    %v1184 = vpop.f32.mrb[0].mxu0
    %v1185 = vadd.f32 %v758, %v1184
    %v1186 = vpop.f32.mrb[0].mxu0
    %1187 = vmatprep.mubr.f32.mxu0 0.0
    %1188 = vmatmul.mubr.f32.gmra.mrb[0].mxu0 %v864
    %v1189 = vpop.f32.mrb[0].mxu0
    %v1190 = vadd.f32 %v758, %v1189
    %v1191 = vpop.f32.mrb[0].mxu0
    %1192 = vmatprep.mubr.f32.mxu0 0.0
    %1193 = vmatmul.mubr.f32.gmra.mrb[0].mxu0 %v867
    %v1194 = vpop.f32.mrb[0].mxu0
    %v1195 = vadd.f32 %v758, %v1194
    %v1196 = vpop.f32.mrb[0].mxu0
    %1197 = vmatprep.mubr.f32.mxu0 0.0
    %1198 = vmatmul.mubr.f32.gmra.mrb[0].mxu0 %v870
    %v1199 = vpop.f32.mrb[0].mxu0
    %v1200 = vadd.f32 %v758, %v1199
    %v1201 = vpop.f32.mrb[0].mxu0
    %1202 = vmatprep.mubr.f32.mxu0 0.0
    %1203 = vmatmul.mubr.f32.gmra.mrb[0].mxu0 %v873
    %v1204 = vpop.f32.mrb[0].mxu0
    %v1205 = vadd.f32 %v758, %v1204
    %v1206 = vpop.f32.mrb[0].mxu0
    %1207 = vmatprep.mubr.f32.mxu0 0.0
    %1208 = vmatmul.mubr.f32.gmra.mrb[0].mxu0 %v876
    %v1209 = vpop.f32.mrb[0].mxu0
    %v1210 = vadd.f32 %v758, %v1209
    %v1211 = vpop.f32.mrb[0].mxu0
    %1212 = vmatprep.mubr.f32.mxu0 0.0
    %1213 = vmatmul.mubr.f32.gmra.mrb[0].mxu0 %v879
    %v1214 = vpop.f32.mrb[0].mxu0
    %v1215 = vadd.f32 %v758, %v1214
    %v1216 = vpop.f32.mrb[0].mxu0
    %1217 = vmatprep.mubr.f32.mxu0 0.0
    %1218 = vmatmul.mubr.f32.gmra.mrb[0].mxu0 %v882
    %v1219 = vpop.f32.mrb[0].mxu0
    %v1220 = vadd.f32 %v758, %v1219
    %v1221 = vpop.f32.mrb[0].mxu0
    %1222 = vmatprep.mubr.f32.mxu0 0.0
    %1223 = vmatmul.mubr.f32.gmra.mrb[0].mxu0 %v885
    %v1224 = vpop.f32.mrb[0].mxu0
    %v1225 = vadd.f32 %v758, %v1224
    %v1226 = vpop.f32.mrb[0].mxu0
    %1227 = vmatprep.mubr.f32.mxu0 0.0
    %1228 = vmatmul.mubr.f32.gmra.mrb[0].mxu0 %v888
    %v1229 = vpop.f32.mrb[0].mxu0
    %v1230 = vadd.f32 %v758, %v1229
    %v1231 = vpop.f32.mrb[0].mxu0
    %1232 = vmatprep.mubr.f32.mxu0 0.0
    %1233 = vmatmul.mubr.f32.gmra.mrb[0].mxu0 %v891
    %v1234 = vpop.f32.mrb[0].mxu0
    %v1235 = vadd.f32 %v758, %v1234
    %v1236 = vpop.f32.mrb[0].mxu0
    %1237 = vmatprep.mubr.f32.mxu0 0.0
    %1238 = vmatmul.mubr.f32.gmra.mrb[0].mxu0 %v894
    %v1239 = vpop.f32.mrb[0].mxu0
    %v1240 = vadd.f32 %v758, %v1239
    %v1241 = vpop.f32.mrb[0].mxu0
    %1242 = vmatprep.mubr.f32.mxu0 0.0
    %1243 = vmatmul.mubr.f32.gmra.mrb[0].mxu0 %v897
    %v1244 = vpop.f32.mrb[0].mxu0
    %v1245 = vadd.f32 %v758, %v1244
    %v1246 = vpop.f32.mrb[0].mxu0
    %1247 = vmatprep.mubr.f32.mxu0 0.0
    %1248 = vmatmul.mubr.f32.gmra.mrb[0].mxu0 %v900
    %v1249 = vpop.f32.mrb[0].mxu0
    %v1250 = vadd.f32 %v758, %v1249
    %v1251 = vpop.f32.mrb[0].mxu0
    %1252 = vmatprep.mubr.f32.mxu0 0.0
    %1253 = vmatmul.mubr.f32.gmra.mrb[0].mxu0 %v903
    %v1254 = vpop.f32.mrb[0].mxu0
    %v1255 = vadd.f32 %v758, %v1254
    %v1256 = vpop.f32.mrb[0].mxu0
    %1257 = vmatprep.mubr.f32.mxu0 0.0
    %1258 = vmatmul.mubr.f32.gmra.mrb[0].mxu0 %v906
    %v1259 = vpop.f32.mrb[0].mxu0
    %v1260 = vadd.f32 %v758, %v1259
    %v1261 = vpop.f32.mrb[0].mxu0
    %1262 = vmatprep.mubr.f32.mxu0 0.0
    %1263 = vmatmul.mubr.f32.gmra.mrb[0].mxu0 %v909
    %v1264 = vpop.f32.mrb[0].mxu0
    %v1265 = vadd.f32 %v758, %v1264
    %v1266 = vpop.f32.mrb[0].mxu0
    %1267 = vmatprep.mubr.f32.mxu0 0.0
    %1268 = vmatmul.mubr.f32.gmra.mrb[0].mxu0 %v912
    %v1269 = vpop.f32.mrb[0].mxu0
    %v1270 = vadd.f32 %v758, %v1269
    %v1271 = vpop.f32.mrb[0].mxu0
    %1272 = vmatprep.mubr.f32.mxu0 0.0
    %1273 = vmatmul.mubr.f32.gmra.mrb[0].mxu0 %v915
    %v1274 = vpop.f32.mrb[0].mxu0
    %v1275 = vadd.f32 %v758, %v1274
    %v1276 = vpop.f32.mrb[0].mxu0
    %1277 = vmatprep.mubr.f32.mxu0 0.0
    %1278 = vmatmul.mubr.f32.gmra.mrb[0].mxu0 %v918
    %v1279 = vpop.f32.mrb[0].mxu0
    %v1280 = vadd.f32 %v758, %v1279
    %v1281 = vpop.f32.mrb[0].mxu0
    %1282 = vmatprep.mubr.f32.mxu0 0.0
    %1283 = vmatmul.mubr.f32.gmra.mrb[0].mxu0 %v921
    %v1284 = vpop.f32.mrb[0].mxu0
    %v1285 = vadd.f32 %v758, %v1284
    %v1286 = vpop.f32.mrb[0].mxu0
    %1287 = vmatprep.mubr.f32.mxu0 0.0
    %1288 = vmatmul.mubr.f32.gmra.mrb[0].mxu0 %v924
    %v1289 = vpop.f32.mrb[0].mxu0
    %v1290 = vadd.f32 %v758, %v1289
    %v1291 = vpop.f32.mrb[0].mxu0
    %1292 = vmatprep.mubr.f32.mxu0 0.0
    %1293 = vmatmul.mubr.f32.gmra.mrb[0].mxu0 %v927
    %v1294 = vpop.f32.mrb[0].mxu0
    %v1295 = vadd.f32 %v758, %v1294
    %v1296 = vpop.f32.mrb[0].mxu0
    %1297 = vmatprep.mubr.f32.mxu0 0.0
    %1298 = vmatmul.mubr.f32.gmra.mrb[0].mxu0 %v930
    %v1299 = vpop.f32.mrb[0].mxu0
    %v1300 = vadd.f32 %v758, %v1299
    %v1301 = vpop.f32.mrb[0].mxu0
    %1302 = vmatprep.mubr.f32.mxu0 0.0
    %1303 = vmatmul.mubr.f32.gmra.mrb[0].mxu0 %v933
    %v1304 = vpop.f32.mrb[0].mxu0
    %v1305 = vadd.f32 %v758, %v1304
    %v1306 = vpop.f32.mrb[0].mxu0
    %1307 = vmatprep.mubr.f32.mxu0 0.0
    %1308 = vmatmul.mubr.f32.gmra.mrb[0].mxu0 %v936
    %v1309 = vpop.f32.mrb[0].mxu0
    %v1310 = vadd.f32 %v758, %v1309
    %v1311 = vpop.f32.mrb[0].mxu0
    %1312 = vmatprep.mubr.f32.mxu0 0.0
    %1313 = vmatmul.mubr.f32.gmra.mrb[0].mxu0 %v939
    %v1314 = vpop.f32.mrb[0].mxu0
    %v1315 = vadd.f32 %v758, %v1314
    %v1316 = vpop.f32.mrb[0].mxu0
    %1317 = vmatprep.mubr.f32.mxu0 0.0
    %1318 = vmatmul.mubr.f32.gmra.mrb[0].mxu0 %v942
    %v1319 = vpop.f32.mrb[0].mxu0
    %v1320 = vadd.f32 %v758, %v1319
    %v1321 = vpop.f32.mrb[0].mxu0
    %1322 = vmatprep.mubr.f32.mxu0 0.0
    %1323 = vmatmul.mubr.f32.gmra.mrb[0].mxu0 %v945
    %v1324 = vpop.f32.mrb[0].mxu0
    %v1325 = vadd.f32 %v758, %v1324
    %v1326 = vpop.f32.mrb[0].mxu0
    %1327 = vmatprep.mubr.f32.mxu0 0.0
    %1328 = vmatmul.mubr.f32.gmra.mrb[0].mxu0 %v948
    %v1329 = vpop.f32.mrb[0].mxu0
    %v1330 = vadd.f32 %v758, %v1329
    %v1331 = vpop.f32.mrb[0].mxu0
    %1332 = vmatprep.mubr.f32.mxu0 0.0
    %1333 = vmatmul.mubr.f32.gmra.mrb[0].mxu0 %v951
    %v1334 = vpop.f32.mrb[0].mxu0
    %v1335 = vadd.f32 %v758, %v1334
    %v1336 = vpop.f32.mrb[0].mxu0
    %1337 = vdwg.mxu0
    %v1338 = vld [vmem:[%s5] sm:$0xff]
    %v1339 = vld [vmem:[%s5 + $0x8] sm:$0xff]
    %v1340 = vld [vmem:[%s5 + $0x10] sm:$0xff]
    %v1341 = vld [vmem:[%s5 + $0x18] sm:$0xff]
    %v1342 = vld [vmem:[%s5 + $0x20] sm:$0xff]
    %v1343 = vld [vmem:[%s5 + $0x28] sm:$0xff]
    %v1344 = vld [vmem:[%s5 + $0x30] sm:$0xff]
    %v1345 = vld [vmem:[%s5 + $0x38] sm:$0xff]
    %v1346 = vld [vmem:[%s5 + $0x40] sm:$0xff]
    %v1347 = vld [vmem:[%s5 + $0x48] sm:$0xff]
    %v1348 = vld [vmem:[%s5 + $0x50] sm:$0xff]
    %v1349 = vld [vmem:[%s5 + $0x58] sm:$0xff]
    %v1350 = vld [vmem:[%s5 + $0x60] sm:$0xff]
    %v1351 = vld [vmem:[%s5 + $0x68] sm:$0xff]
    %v1352 = vld [vmem:[%s5 + $0x70] sm:$0xff]
    %v1353 = vld [vmem:[%s5 + $0x78] sm:$0xff]
    %v1354 = vld [vmem:[%s5 + $0x80] sm:$0xff]
    %v1355 = vld [vmem:[%s5 + $0x88] sm:$0xff]
    %v1356 = vld [vmem:[%s5 + $0x90] sm:$0xff]
    %v1357 = vld [vmem:[%s5 + $0x98] sm:$0xff]
    %v1358 = vld [vmem:[%s5 + $0xa0] sm:$0xff]
    %v1359 = vld [vmem:[%s5 + $0xa8] sm:$0xff]
    %v1360 = vld [vmem:[%s5 + $0xb0] sm:$0xff]
    %v1361 = vld [vmem:[%s5 + $0xb8] sm:$0xff]
    %v1362 = vld [vmem:[%s5 + $0xc0] sm:$0xff]
    %v1363 = vld [vmem:[%s5 + $0xc8] sm:$0xff]
    %v1364 = vld [vmem:[%s5 + $0xd0] sm:$0xff]
    %v1365 = vld [vmem:[%s5 + $0xd8] sm:$0xff]
    %v1366 = vld [vmem:[%s5 + $0xe0] sm:$0xff]
    %v1367 = vld [vmem:[%s5 + $0xe8] sm:$0xff]
    %v1368 = vld [vmem:[%s5 + $0xf0] sm:$0xff]
    %v1369 = vld [vmem:[%s5 + $0xf8] sm:$0xff]
    %v1370 = vld [vmem:[%s5 + $0x100] sm:$0xff]
    %v1371 = vld [vmem:[%s5 + $0x108] sm:$0xff]
    %v1372 = vld [vmem:[%s5 + $0x110] sm:$0xff]
    %v1373 = vld [vmem:[%s5 + $0x118] sm:$0xff]
    %v1374 = vld [vmem:[%s5 + $0x120] sm:$0xff]
    %v1375 = vld [vmem:[%s5 + $0x128] sm:$0xff]
    %v1376 = vld [vmem:[%s5 + $0x130] sm:$0xff]
    %v1377 = vld [vmem:[%s5 + $0x138] sm:$0xff]
    %v1378 = vld [vmem:[%s5 + $0x140] sm:$0xff]
    %v1379 = vld [vmem:[%s5 + $0x148] sm:$0xff]
    %v1380 = vld [vmem:[%s5 + $0x150] sm:$0xff]
    %v1381 = vld [vmem:[%s5 + $0x158] sm:$0xff]
    %v1382 = vld [vmem:[%s5 + $0x160] sm:$0xff]
    %v1383 = vld [vmem:[%s5 + $0x168] sm:$0xff]
    %v1384 = vld [vmem:[%s5 + $0x170] sm:$0xff]
    %v1385 = vld [vmem:[%s5 + $0x178] sm:$0xff]
    %v1386 = vld [vmem:[%s5 + $0x180] sm:$0xff]
    %v1387 = vld [vmem:[%s5 + $0x188] sm:$0xff]
    %v1388 = vld [vmem:[%s5 + $0x190] sm:$0xff]
    %v1389 = vld [vmem:[%s5 + $0x198] sm:$0xff]
    %v1390 = vld [vmem:[%s5 + $0x1a0] sm:$0xff]
    %v1391 = vld [vmem:[%s5 + $0x1a8] sm:$0xff]
    %v1392 = vld [vmem:[%s5 + $0x1b0] sm:$0xff]
    %v1393 = vld [vmem:[%s5 + $0x1b8] sm:$0xff]
    %v1394 = vld [vmem:[%s5 + $0x1c0] sm:$0xff]
    %v1395 = vld [vmem:[%s5 + $0x1c8] sm:$0xff]
    %v1396 = vld [vmem:[%s5 + $0x1d0] sm:$0xff]
    %v1397 = vld [vmem:[%s5 + $0x1d8] sm:$0xff]
    %v1398 = vld [vmem:[%s5 + $0x1e0] sm:$0xff]
    %v1399 = vld [vmem:[%s5 + $0x1e8] sm:$0xff]
    %v1400 = vld [vmem:[%s5 + $0x1f0] sm:$0xff]
    %v1401 = vld [vmem:[%s5 + $0x1f8] sm:$0xff]
    %v1402 = vld [vmem:[%s6] sm:$0xff]
    %v1403 = vld [vmem:[%s6 + $0x8] sm:$0xff]
    %v1404 = vld [vmem:[%s7] sm:$0x1]
    %v1406 = vlaneseq
    %v1407 = vshrl.u32 %v1406, 7
    %v1408 = vsub.s32 0, %v1407
    %v1409 = vrot.slane %v1404, %v1408
    %vm1411 = vcmask 130048
    %v1413 = vsel %vm1411, %v1338, 0
    %v1416 = vsel %vm1411, %v1339, 0
    %v1419 = vsel %vm1411, %v1340, 0
    %v1422 = vsel %vm1411, %v1341, 0
    %v1425 = vsel %vm1411, %v1342, 0
    %v1428 = vsel %vm1411, %v1343, 0
    %v1431 = vsel %vm1411, %v1344, 0
    %v1434 = vsel %vm1411, %v1345, 0
    %v1437 = vsel %vm1411, %v1346, 0
    %v1440 = vsel %vm1411, %v1347, 0
    %v1443 = vsel %vm1411, %v1348, 0
    %v1446 = vsel %vm1411, %v1349, 0
    %v1449 = vsel %vm1411, %v1350, 0
    %v1452 = vsel %vm1411, %v1351, 0
    %v1455 = vsel %vm1411, %v1352, 0
    %v1458 = vsel %vm1411, %v1353, 0
    %v1461 = vsel %vm1411, %v1354, 0
    %v1464 = vsel %vm1411, %v1355, 0
    %v1467 = vsel %vm1411, %v1356, 0
    %v1470 = vsel %vm1411, %v1357, 0
    %v1473 = vsel %vm1411, %v1358, 0
    %v1476 = vsel %vm1411, %v1359, 0
    %v1479 = vsel %vm1411, %v1360, 0
    %v1482 = vsel %vm1411, %v1361, 0
    %v1485 = vsel %vm1411, %v1362, 0
    %v1488 = vsel %vm1411, %v1363, 0
    %v1491 = vsel %vm1411, %v1364, 0
    %v1494 = vsel %vm1411, %v1365, 0
    %v1497 = vsel %vm1411, %v1366, 0
    %v1500 = vsel %vm1411, %v1367, 0
    %v1503 = vsel %vm1411, %v1368, 0
    %v1506 = vsel %vm1411, %v1369, 0
    %v1509 = vsel %vm1411, %v1370, 0
    %v1512 = vsel %vm1411, %v1371, 0
    %v1515 = vsel %vm1411, %v1372, 0
    %v1518 = vsel %vm1411, %v1373, 0
    %v1521 = vsel %vm1411, %v1374, 0
    %v1524 = vsel %vm1411, %v1375, 0
    %v1527 = vsel %vm1411, %v1376, 0
    %v1530 = vsel %vm1411, %v1377, 0
    %v1533 = vsel %vm1411, %v1378, 0
    %v1536 = vsel %vm1411, %v1379, 0
    %v1539 = vsel %vm1411, %v1380, 0
    %v1542 = vsel %vm1411, %v1381, 0
    %v1545 = vsel %vm1411, %v1382, 0
    %v1548 = vsel %vm1411, %v1383, 0
    %v1551 = vsel %vm1411, %v1384, 0
    %v1554 = vsel %vm1411, %v1385, 0
    %v1557 = vsel %vm1411, %v1386, 0
    %v1560 = vsel %vm1411, %v1387, 0
    %v1563 = vsel %vm1411, %v1388, 0
    %v1566 = vsel %vm1411, %v1389, 0
    %v1569 = vsel %vm1411, %v1390, 0
    %v1572 = vsel %vm1411, %v1391, 0
    %v1575 = vsel %vm1411, %v1392, 0
    %v1578 = vsel %vm1411, %v1393, 0
    %v1581 = vsel %vm1411, %v1394, 0
    %v1584 = vsel %vm1411, %v1395, 0
    %v1587 = vsel %vm1411, %v1396, 0
    %v1590 = vsel %vm1411, %v1397, 0
    %v1593 = vsel %vm1411, %v1398, 0
    %v1596 = vsel %vm1411, %v1399, 0
    %v1599 = vsel %vm1411, %v1400, 0
    %v1602 = vsel %vm1411, %v1401, 0
    %1604 = vmatprep.subr.mxu0 0.0
    %1605 = vmatpush1.msra.mxu0 %v1402
    %1606 = vmatprep.subr.mxu0 0.0
    %1607 = vmatpush1.msra.mxu0 %v1403
    %1608 = vmatprep.subr.mxu0 0.0
    %1609 = vmatpush1.msra.mxu0 0.0
    %1610 = vmatprep.subr.mxu0 0.0
    %1611 = vmatpush1.msra.mxu0 0.0
    %1612 = vmatprep.subr.mxu0 0.0
    %1613 = vmatpush1.msra.mxu0 0.0
    %1614 = vmatprep.subr.mxu0 0.0
    %1615 = vmatpush1.msra.mxu0 0.0
    %1616 = vmatprep.subr.mxu0 0.0
    %1617 = vmatpush1.msra.mxu0 0.0
    %1618 = vmatprep.subr.mxu0 0.0
    %1619 = vmatpush1.msra.mxu0 0.0
    %1620 = vmatprep.subr.mxu0 0.0
    %1621 = vmatpush1.msra.mxu0 0.0
    %1622 = vmatprep.subr.mxu0 0.0
    %1623 = vmatpush1.msra.mxu0 0.0
    %1624 = vmatprep.subr.mxu0 0.0
    %1625 = vmatpush1.msra.mxu0 0.0
    %1626 = vmatprep.subr.mxu0 0.0
    %1627 = vmatpush1.msra.mxu0 0.0
    %1628 = vmatprep.subr.mxu0 0.0
    %1629 = vmatpush1.msra.mxu0 0.0
    %1630 = vmatprep.subr.mxu0 0.0
    %1631 = vmatpush1.msra.mxu0 0.0
    %1632 = vmatprep.subr.mxu0 0.0
    %1633 = vmatpush1.msra.mxu0 0.0
    %1634 = vmatprep.subr.mxu0 0.0
    %1635 = vmatpush1.msra.mxu0 0.0
    %1636 = vmatprep.subr.mxu0 0.0
    %1637 = vmatpush1.msra.mxu0 0.0
    %1638 = vmatprep.subr.mxu0 0.0
    %1639 = vmatpush1.msra.mxu0 0.0
    %1640 = vmatprep.subr.mxu0 0.0
    %1641 = vmatpush1.msra.mxu0 0.0
    %1642 = vmatprep.subr.mxu0 0.0
    %1643 = vmatpush1.msra.mxu0 0.0
    %1644 = vmatprep.subr.mxu0 0.0
    %1645 = vmatpush1.msra.mxu0 0.0
    %1646 = vmatprep.subr.mxu0 0.0
    %1647 = vmatpush1.msra.mxu0 0.0
    %1648 = vmatprep.subr.mxu0 0.0
    %1649 = vmatpush1.msra.mxu0 0.0
    %1650 = vmatprep.subr.mxu0 0.0
    %1651 = vmatpush1.msra.mxu0 0.0
    %1652 = vmatprep.subr.mxu0 0.0
    %1653 = vmatpush1.msra.mxu0 0.0
    %1654 = vmatprep.subr.mxu0 0.0
    %1655 = vmatpush1.msra.mxu0 0.0
    %1656 = vmatprep.subr.mxu0 0.0
    %1657 = vmatpush1.msra.mxu0 0.0
    %1658 = vmatprep.subr.mxu0 0.0
    %1659 = vmatpush1.msra.mxu0 0.0
    %1660 = vmatprep.subr.mxu0 0.0
    %1661 = vmatpush1.msra.mxu0 0.0
    %1662 = vmatprep.subr.mxu0 0.0
    %1663 = vmatpush1.msra.mxu0 0.0
    %1664 = vmatprep.subr.mxu0 0.0
    %1665 = vmatpush1.msra.mxu0 0.0
    %1666 = vmatprep.subr.mxu0 0.0
    %1667 = vmatpush1.msra.mxu0 0.0
    %1668 = vmatprep.mubr.f32.mxu0 0.0
    %1669 = vmatmul.mubr.f32.gmra.mrb[0].mxu0 %v1413
    %v1670 = vpop.f32.mrb[0].mxu0
    %v1671 = vadd.f32 %v1409, %v1670
    %v1672 = vpop.f32.mrb[0].mxu0
    %1673 = vmatprep.mubr.f32.mxu0 0.0
    %1674 = vmatmul.mubr.f32.gmra.mrb[0].mxu0 %v1416
    %v1675 = vpop.f32.mrb[0].mxu0
    %v1676 = vadd.f32 %v1409, %v1675
    %v1677 = vpop.f32.mrb[0].mxu0
    %1678 = vmatprep.mubr.f32.mxu0 0.0
    %1679 = vmatmul.mubr.f32.gmra.mrb[0].mxu0 %v1419
    %v1680 = vpop.f32.mrb[0].mxu0
    %v1681 = vadd.f32 %v1409, %v1680
    %v1682 = vpop.f32.mrb[0].mxu0
    %1683 = vmatprep.mubr.f32.mxu0 0.0
    %1684 = vmatmul.mubr.f32.gmra.mrb[0].mxu0 %v1422
    %v1685 = vpop.f32.mrb[0].mxu0
    %v1686 = vadd.f32 %v1409, %v1685
    %v1687 = vpop.f32.mrb[0].mxu0
    %1688 = vmatprep.mubr.f32.mxu0 0.0
    %1689 = vmatmul.mubr.f32.gmra.mrb[0].mxu0 %v1425
    %v1690 = vpop.f32.mrb[0].mxu0
    %v1691 = vadd.f32 %v1409, %v1690
    %v1692 = vpop.f32.mrb[0].mxu0
    %1693 = vmatprep.mubr.f32.mxu0 0.0
    %1694 = vmatmul.mubr.f32.gmra.mrb[0].mxu0 %v1428
    %v1695 = vpop.f32.mrb[0].mxu0
    %v1696 = vadd.f32 %v1409, %v1695
    %v1697 = vpop.f32.mrb[0].mxu0
    %1698 = vmatprep.mubr.f32.mxu0 0.0
    %1699 = vmatmul.mubr.f32.gmra.mrb[0].mxu0 %v1431
    %v1700 = vpop.f32.mrb[0].mxu0
    %v1701 = vadd.f32 %v1409, %v1700
    %v1702 = vpop.f32.mrb[0].mxu0
    %1703 = vmatprep.mubr.f32.mxu0 0.0
    %1704 = vmatmul.mubr.f32.gmra.mrb[0].mxu0 %v1434
    %v1705 = vpop.f32.mrb[0].mxu0
    %v1706 = vadd.f32 %v1409, %v1705
    %v1707 = vpop.f32.mrb[0].mxu0
    %1708 = vmatprep.mubr.f32.mxu0 0.0
    %1709 = vmatmul.mubr.f32.gmra.mrb[0].mxu0 %v1437
    %v1710 = vpop.f32.mrb[0].mxu0
    %v1711 = vadd.f32 %v1409, %v1710
    %v1712 = vpop.f32.mrb[0].mxu0
    %1713 = vmatprep.mubr.f32.mxu0 0.0
    %1714 = vmatmul.mubr.f32.gmra.mrb[0].mxu0 %v1440
    %v1715 = vpop.f32.mrb[0].mxu0
    %v1716 = vadd.f32 %v1409, %v1715
    %v1717 = vpop.f32.mrb[0].mxu0
    %1718 = vmatprep.mubr.f32.mxu0 0.0
    %1719 = vmatmul.mubr.f32.gmra.mrb[0].mxu0 %v1443
    %v1720 = vpop.f32.mrb[0].mxu0
    %v1721 = vadd.f32 %v1409, %v1720
    %v1722 = vpop.f32.mrb[0].mxu0
    %1723 = vmatprep.mubr.f32.mxu0 0.0
    %1724 = vmatmul.mubr.f32.gmra.mrb[0].mxu0 %v1446
    %v1725 = vpop.f32.mrb[0].mxu0
    %v1726 = vadd.f32 %v1409, %v1725
    %v1727 = vpop.f32.mrb[0].mxu0
    %1728 = vmatprep.mubr.f32.mxu0 0.0
    %1729 = vmatmul.mubr.f32.gmra.mrb[0].mxu0 %v1449
    %v1730 = vpop.f32.mrb[0].mxu0
    %v1731 = vadd.f32 %v1409, %v1730
    %v1732 = vpop.f32.mrb[0].mxu0
    %1733 = vmatprep.mubr.f32.mxu0 0.0
    %1734 = vmatmul.mubr.f32.gmra.mrb[0].mxu0 %v1452
    %v1735 = vpop.f32.mrb[0].mxu0
    %v1736 = vadd.f32 %v1409, %v1735
    %v1737 = vpop.f32.mrb[0].mxu0
    %1738 = vmatprep.mubr.f32.mxu0 0.0
    %1739 = vmatmul.mubr.f32.gmra.mrb[0].mxu0 %v1455
    %v1740 = vpop.f32.mrb[0].mxu0
    %v1741 = vadd.f32 %v1409, %v1740
    %v1742 = vpop.f32.mrb[0].mxu0
    %1743 = vmatprep.mubr.f32.mxu0 0.0
    %1744 = vmatmul.mubr.f32.gmra.mrb[0].mxu0 %v1458
    %v1745 = vpop.f32.mrb[0].mxu0
    %v1746 = vadd.f32 %v1409, %v1745
    %v1747 = vpop.f32.mrb[0].mxu0
    %1748 = vmatprep.mubr.f32.mxu0 0.0
    %1749 = vmatmul.mubr.f32.gmra.mrb[0].mxu0 %v1461
    %v1750 = vpop.f32.mrb[0].mxu0
    %v1751 = vadd.f32 %v1409, %v1750
    %v1752 = vpop.f32.mrb[0].mxu0
    %1753 = vmatprep.mubr.f32.mxu0 0.0
    %1754 = vmatmul.mubr.f32.gmra.mrb[0].mxu0 %v1464
    %v1755 = vpop.f32.mrb[0].mxu0
    %v1756 = vadd.f32 %v1409, %v1755
    %v1757 = vpop.f32.mrb[0].mxu0
    %1758 = vmatprep.mubr.f32.mxu0 0.0
    %1759 = vmatmul.mubr.f32.gmra.mrb[0].mxu0 %v1467
    %v1760 = vpop.f32.mrb[0].mxu0
    %v1761 = vadd.f32 %v1409, %v1760
    %v1762 = vpop.f32.mrb[0].mxu0
    %1763 = vmatprep.mubr.f32.mxu0 0.0
    %1764 = vmatmul.mubr.f32.gmra.mrb[0].mxu0 %v1470
    %v1765 = vpop.f32.mrb[0].mxu0
    %v1766 = vadd.f32 %v1409, %v1765
    %v1767 = vpop.f32.mrb[0].mxu0
    %1768 = vmatprep.mubr.f32.mxu0 0.0
    %1769 = vmatmul.mubr.f32.gmra.mrb[0].mxu0 %v1473
    %v1770 = vpop.f32.mrb[0].mxu0
    %v1771 = vadd.f32 %v1409, %v1770
    %v1772 = vpop.f32.mrb[0].mxu0
    %1773 = vmatprep.mubr.f32.mxu0 0.0
    %1774 = vmatmul.mubr.f32.gmra.mrb[0].mxu0 %v1476
    %v1775 = vpop.f32.mrb[0].mxu0
    %v1776 = vadd.f32 %v1409, %v1775
    %v1777 = vpop.f32.mrb[0].mxu0
    %1778 = vmatprep.mubr.f32.mxu0 0.0
    %1779 = vmatmul.mubr.f32.gmra.mrb[0].mxu0 %v1479
    %v1780 = vpop.f32.mrb[0].mxu0
    %v1781 = vadd.f32 %v1409, %v1780
    %v1782 = vpop.f32.mrb[0].mxu0
    %1783 = vmatprep.mubr.f32.mxu0 0.0
    %1784 = vmatmul.mubr.f32.gmra.mrb[0].mxu0 %v1482
    %v1785 = vpop.f32.mrb[0].mxu0
    %v1786 = vadd.f32 %v1409, %v1785
    %v1787 = vpop.f32.mrb[0].mxu0
    %1788 = vmatprep.mubr.f32.mxu0 0.0
    %1789 = vmatmul.mubr.f32.gmra.mrb[0].mxu0 %v1485
    %v1790 = vpop.f32.mrb[0].mxu0
    %v1791 = vadd.f32 %v1409, %v1790
    %v1792 = vpop.f32.mrb[0].mxu0
    %1793 = vmatprep.mubr.f32.mxu0 0.0
    %1794 = vmatmul.mubr.f32.gmra.mrb[0].mxu0 %v1488
    %v1795 = vpop.f32.mrb[0].mxu0
    %v1796 = vadd.f32 %v1409, %v1795
    %v1797 = vpop.f32.mrb[0].mxu0
    %1798 = vmatprep.mubr.f32.mxu0 0.0
    %1799 = vmatmul.mubr.f32.gmra.mrb[0].mxu0 %v1491
    %v1800 = vpop.f32.mrb[0].mxu0
    %v1801 = vadd.f32 %v1409, %v1800
    %v1802 = vpop.f32.mrb[0].mxu0
    %1803 = vmatprep.mubr.f32.mxu0 0.0
    %1804 = vmatmul.mubr.f32.gmra.mrb[0].mxu0 %v1494
    %v1805 = vpop.f32.mrb[0].mxu0
    %v1806 = vadd.f32 %v1409, %v1805
    %v1807 = vpop.f32.mrb[0].mxu0
    %1808 = vmatprep.mubr.f32.mxu0 0.0
    %1809 = vmatmul.mubr.f32.gmra.mrb[0].mxu0 %v1497
    %v1810 = vpop.f32.mrb[0].mxu0
    %v1811 = vadd.f32 %v1409, %v1810
    %v1812 = vpop.f32.mrb[0].mxu0
    %1813 = vmatprep.mubr.f32.mxu0 0.0
    %1814 = vmatmul.mubr.f32.gmra.mrb[0].mxu0 %v1500
    %v1815 = vpop.f32.mrb[0].mxu0
    %v1816 = vadd.f32 %v1409, %v1815
    %v1817 = vpop.f32.mrb[0].mxu0
    %1818 = vmatprep.mubr.f32.mxu0 0.0
    %1819 = vmatmul.mubr.f32.gmra.mrb[0].mxu0 %v1503
    %v1820 = vpop.f32.mrb[0].mxu0
    %v1821 = vadd.f32 %v1409, %v1820
    %v1822 = vpop.f32.mrb[0].mxu0
    %1823 = vmatprep.mubr.f32.mxu0 0.0
    %1824 = vmatmul.mubr.f32.gmra.mrb[0].mxu0 %v1506
    %v1825 = vpop.f32.mrb[0].mxu0
    %v1826 = vadd.f32 %v1409, %v1825
    %v1827 = vpop.f32.mrb[0].mxu0
    %1828 = vmatprep.mubr.f32.mxu0 0.0
    %1829 = vmatmul.mubr.f32.gmra.mrb[0].mxu0 %v1509
    %v1830 = vpop.f32.mrb[0].mxu0
    %v1831 = vadd.f32 %v1409, %v1830
    %v1832 = vpop.f32.mrb[0].mxu0
    %1833 = vmatprep.mubr.f32.mxu0 0.0
    %1834 = vmatmul.mubr.f32.gmra.mrb[0].mxu0 %v1512
    %v1835 = vpop.f32.mrb[0].mxu0
    %v1836 = vadd.f32 %v1409, %v1835
    %v1837 = vpop.f32.mrb[0].mxu0
    %1838 = vmatprep.mubr.f32.mxu0 0.0
    %1839 = vmatmul.mubr.f32.gmra.mrb[0].mxu0 %v1515
    %v1840 = vpop.f32.mrb[0].mxu0
    %v1841 = vadd.f32 %v1409, %v1840
    %v1842 = vpop.f32.mrb[0].mxu0
    %1843 = vmatprep.mubr.f32.mxu0 0.0
    %1844 = vmatmul.mubr.f32.gmra.mrb[0].mxu0 %v1518
    %v1845 = vpop.f32.mrb[0].mxu0
    %v1846 = vadd.f32 %v1409, %v1845
    %v1847 = vpop.f32.mrb[0].mxu0
    %1848 = vmatprep.mubr.f32.mxu0 0.0
    %1849 = vmatmul.mubr.f32.gmra.mrb[0].mxu0 %v1521
    %v1850 = vpop.f32.mrb[0].mxu0
    %v1851 = vadd.f32 %v1409, %v1850
    %v1852 = vpop.f32.mrb[0].mxu0
    %1853 = vmatprep.mubr.f32.mxu0 0.0
    %1854 = vmatmul.mubr.f32.gmra.mrb[0].mxu0 %v1524
    %v1855 = vpop.f32.mrb[0].mxu0
    %v1856 = vadd.f32 %v1409, %v1855
    %v1857 = vpop.f32.mrb[0].mxu0
    %1858 = vmatprep.mubr.f32.mxu0 0.0
    %1859 = vmatmul.mubr.f32.gmra.mrb[0].mxu0 %v1527
    %v1860 = vpop.f32.mrb[0].mxu0
    %v1861 = vadd.f32 %v1409, %v1860
    %v1862 = vpop.f32.mrb[0].mxu0
    %1863 = vmatprep.mubr.f32.mxu0 0.0
    %1864 = vmatmul.mubr.f32.gmra.mrb[0].mxu0 %v1530
    %v1865 = vpop.f32.mrb[0].mxu0
    %v1866 = vadd.f32 %v1409, %v1865
    %v1867 = vpop.f32.mrb[0].mxu0
    %1868 = vmatprep.mubr.f32.mxu0 0.0
    %1869 = vmatmul.mubr.f32.gmra.mrb[0].mxu0 %v1533
    %v1870 = vpop.f32.mrb[0].mxu0
    %v1871 = vadd.f32 %v1409, %v1870
    %v1872 = vpop.f32.mrb[0].mxu0
    %1873 = vmatprep.mubr.f32.mxu0 0.0
    %1874 = vmatmul.mubr.f32.gmra.mrb[0].mxu0 %v1536
    %v1875 = vpop.f32.mrb[0].mxu0
    %v1876 = vadd.f32 %v1409, %v1875
    %v1877 = vpop.f32.mrb[0].mxu0
    %1878 = vmatprep.mubr.f32.mxu0 0.0
    %1879 = vmatmul.mubr.f32.gmra.mrb[0].mxu0 %v1539
    %v1880 = vpop.f32.mrb[0].mxu0
    %v1881 = vadd.f32 %v1409, %v1880
    %v1882 = vpop.f32.mrb[0].mxu0
    %1883 = vmatprep.mubr.f32.mxu0 0.0
    %1884 = vmatmul.mubr.f32.gmra.mrb[0].mxu0 %v1542
    %v1885 = vpop.f32.mrb[0].mxu0
    %v1886 = vadd.f32 %v1409, %v1885
    %v1887 = vpop.f32.mrb[0].mxu0
    %1888 = vmatprep.mubr.f32.mxu0 0.0
    %1889 = vmatmul.mubr.f32.gmra.mrb[0].mxu0 %v1545
    %v1890 = vpop.f32.mrb[0].mxu0
    %v1891 = vadd.f32 %v1409, %v1890
    %v1892 = vpop.f32.mrb[0].mxu0
    %1893 = vmatprep.mubr.f32.mxu0 0.0
    %1894 = vmatmul.mubr.f32.gmra.mrb[0].mxu0 %v1548
    %v1895 = vpop.f32.mrb[0].mxu0
    %v1896 = vadd.f32 %v1409, %v1895
    %v1897 = vpop.f32.mrb[0].mxu0
    %1898 = vmatprep.mubr.f32.mxu0 0.0
    %1899 = vmatmul.mubr.f32.gmra.mrb[0].mxu0 %v1551
    %v1900 = vpop.f32.mrb[0].mxu0
    %v1901 = vadd.f32 %v1409, %v1900
    %v1902 = vpop.f32.mrb[0].mxu0
    %1903 = vmatprep.mubr.f32.mxu0 0.0
    %1904 = vmatmul.mubr.f32.gmra.mrb[0].mxu0 %v1554
    %v1905 = vpop.f32.mrb[0].mxu0
    %v1906 = vadd.f32 %v1409, %v1905
    %v1907 = vpop.f32.mrb[0].mxu0
    %1908 = vmatprep.mubr.f32.mxu0 0.0
    %1909 = vmatmul.mubr.f32.gmra.mrb[0].mxu0 %v1557
    %v1910 = vpop.f32.mrb[0].mxu0
    %v1911 = vadd.f32 %v1409, %v1910
    %v1912 = vpop.f32.mrb[0].mxu0
    %1913 = vmatprep.mubr.f32.mxu0 0.0
    %1914 = vmatmul.mubr.f32.gmra.mrb[0].mxu0 %v1560
    %v1915 = vpop.f32.mrb[0].mxu0
    %v1916 = vadd.f32 %v1409, %v1915
    %v1917 = vpop.f32.mrb[0].mxu0
    %1918 = vmatprep.mubr.f32.mxu0 0.0
    %1919 = vmatmul.mubr.f32.gmra.mrb[0].mxu0 %v1563
    %v1920 = vpop.f32.mrb[0].mxu0
    %v1921 = vadd.f32 %v1409, %v1920
    %v1922 = vpop.f32.mrb[0].mxu0
    %1923 = vmatprep.mubr.f32.mxu0 0.0
    %1924 = vmatmul.mubr.f32.gmra.mrb[0].mxu0 %v1566
    %v1925 = vpop.f32.mrb[0].mxu0
    %v1926 = vadd.f32 %v1409, %v1925
    %v1927 = vpop.f32.mrb[0].mxu0
    %1928 = vmatprep.mubr.f32.mxu0 0.0
    %1929 = vmatmul.mubr.f32.gmra.mrb[0].mxu0 %v1569
    %v1930 = vpop.f32.mrb[0].mxu0
    %v1931 = vadd.f32 %v1409, %v1930
    %v1932 = vpop.f32.mrb[0].mxu0
    %1933 = vmatprep.mubr.f32.mxu0 0.0
    %1934 = vmatmul.mubr.f32.gmra.mrb[0].mxu0 %v1572
    %v1935 = vpop.f32.mrb[0].mxu0
    %v1936 = vadd.f32 %v1409, %v1935
    %v1937 = vpop.f32.mrb[0].mxu0
    %1938 = vmatprep.mubr.f32.mxu0 0.0
    %1939 = vmatmul.mubr.f32.gmra.mrb[0].mxu0 %v1575
    %v1940 = vpop.f32.mrb[0].mxu0
    %v1941 = vadd.f32 %v1409, %v1940
    %v1942 = vpop.f32.mrb[0].mxu0
    %1943 = vmatprep.mubr.f32.mxu0 0.0
    %1944 = vmatmul.mubr.f32.gmra.mrb[0].mxu0 %v1578
    %v1945 = vpop.f32.mrb[0].mxu0
    %v1946 = vadd.f32 %v1409, %v1945
    %v1947 = vpop.f32.mrb[0].mxu0
    %1948 = vmatprep.mubr.f32.mxu0 0.0
    %1949 = vmatmul.mubr.f32.gmra.mrb[0].mxu0 %v1581
    %v1950 = vpop.f32.mrb[0].mxu0
    %v1951 = vadd.f32 %v1409, %v1950
    %v1952 = vpop.f32.mrb[0].mxu0
    %1953 = vmatprep.mubr.f32.mxu0 0.0
    %1954 = vmatmul.mubr.f32.gmra.mrb[0].mxu0 %v1584
    %v1955 = vpop.f32.mrb[0].mxu0
    %v1956 = vadd.f32 %v1409, %v1955
    %v1957 = vpop.f32.mrb[0].mxu0
    %1958 = vmatprep.mubr.f32.mxu0 0.0
    %1959 = vmatmul.mubr.f32.gmra.mrb[0].mxu0 %v1587
    %v1960 = vpop.f32.mrb[0].mxu0
    %v1961 = vadd.f32 %v1409, %v1960
    %v1962 = vpop.f32.mrb[0].mxu0
    %1963 = vmatprep.mubr.f32.mxu0 0.0
    %1964 = vmatmul.mubr.f32.gmra.mrb[0].mxu0 %v1590
    %v1965 = vpop.f32.mrb[0].mxu0
    %v1966 = vadd.f32 %v1409, %v1965
    %v1967 = vpop.f32.mrb[0].mxu0
    %1968 = vmatprep.mubr.f32.mxu0 0.0
    %1969 = vmatmul.mubr.f32.gmra.mrb[0].mxu0 %v1593
    %v1970 = vpop.f32.mrb[0].mxu0
    %v1971 = vadd.f32 %v1409, %v1970
    %v1972 = vpop.f32.mrb[0].mxu0
    %1973 = vmatprep.mubr.f32.mxu0 0.0
    %1974 = vmatmul.mubr.f32.gmra.mrb[0].mxu0 %v1596
    %v1975 = vpop.f32.mrb[0].mxu0
    %v1976 = vadd.f32 %v1409, %v1975
    %v1977 = vpop.f32.mrb[0].mxu0
    %1978 = vmatprep.mubr.f32.mxu0 0.0
    %1979 = vmatmul.mubr.f32.gmra.mrb[0].mxu0 %v1599
    %v1980 = vpop.f32.mrb[0].mxu0
    %v1981 = vadd.f32 %v1409, %v1980
    %v1982 = vpop.f32.mrb[0].mxu0
    %1983 = vmatprep.mubr.f32.mxu0 0.0
    %1984 = vmatmul.mubr.f32.gmra.mrb[0].mxu0 %v1602
    %v1985 = vpop.f32.mrb[0].mxu0
    %v1986 = vadd.f32 %v1409, %v1985
    %v1987 = vpop.f32.mrb[0].mxu0
    %1988 = vdwg.mxu0
    %v1989 = vadd.f32 %v1020, %v1671
    %v1990 = vadd.f32 %v1025, %v1676
    %v1991 = vadd.f32 %v1030, %v1681
    %v1992 = vadd.f32 %v1035, %v1686
    %v1993 = vadd.f32 %v1040, %v1691
    %v1994 = vadd.f32 %v1045, %v1696
    %v1995 = vadd.f32 %v1050, %v1701
    %v1996 = vadd.f32 %v1055, %v1706
    %v1997 = vadd.f32 %v1060, %v1711
    %v1998 = vadd.f32 %v1065, %v1716
    %v1999 = vadd.f32 %v1070, %v1721
    %v2000 = vadd.f32 %v1075, %v1726
    %v2001 = vadd.f32 %v1080, %v1731
    %v2002 = vadd.f32 %v1085, %v1736
    %v2003 = vadd.f32 %v1090, %v1741
    %v2004 = vadd.f32 %v1095, %v1746
    %v2005 = vadd.f32 %v1100, %v1751
    %v2006 = vadd.f32 %v1105, %v1756
    %v2007 = vadd.f32 %v1110, %v1761
    %v2008 = vadd.f32 %v1115, %v1766
    %v2009 = vadd.f32 %v1120, %v1771
    %v2010 = vadd.f32 %v1125, %v1776
    %v2011 = vadd.f32 %v1130, %v1781
    %v2012 = vadd.f32 %v1135, %v1786
    %v2013 = vadd.f32 %v1140, %v1791
    %v2014 = vadd.f32 %v1145, %v1796
    %v2015 = vadd.f32 %v1150, %v1801
    %v2016 = vadd.f32 %v1155, %v1806
    %v2017 = vadd.f32 %v1160, %v1811
    %v2018 = vadd.f32 %v1165, %v1816
    %v2019 = vadd.f32 %v1170, %v1821
    %v2020 = vadd.f32 %v1175, %v1826
    %v2021 = vadd.f32 %v1180, %v1831
    %v2022 = vadd.f32 %v1185, %v1836
    %v2023 = vadd.f32 %v1190, %v1841
    %v2024 = vadd.f32 %v1195, %v1846
    %v2025 = vadd.f32 %v1200, %v1851
    %v2026 = vadd.f32 %v1205, %v1856
    %v2027 = vadd.f32 %v1210, %v1861
    %v2028 = vadd.f32 %v1215, %v1866
    %v2029 = vadd.f32 %v1220, %v1871
    %v2030 = vadd.f32 %v1225, %v1876
    %v2031 = vadd.f32 %v1230, %v1881
    %v2032 = vadd.f32 %v1235, %v1886
    %v2033 = vadd.f32 %v1240, %v1891
    %v2034 = vadd.f32 %v1245, %v1896
    %v2035 = vadd.f32 %v1250, %v1901
    %v2036 = vadd.f32 %v1255, %v1906
    %v2037 = vadd.f32 %v1260, %v1911
    %v2038 = vadd.f32 %v1265, %v1916
    %v2039 = vadd.f32 %v1270, %v1921
    %v2040 = vadd.f32 %v1275, %v1926
    %v2041 = vadd.f32 %v1280, %v1931
    %v2042 = vadd.f32 %v1285, %v1936
    %v2043 = vadd.f32 %v1290, %v1941
    %v2044 = vadd.f32 %v1295, %v1946
    %v2045 = vadd.f32 %v1300, %v1951
    %v2046 = vadd.f32 %v1305, %v1956
    %v2047 = vadd.f32 %v1310, %v1961
    %v2048 = vadd.f32 %v1315, %v1966
    %v2049 = vadd.f32 %v1320, %v1971
    %v2050 = vadd.f32 %v1325, %v1976
    %v2051 = vadd.f32 %v1330, %v1981
    %v2052 = vadd.f32 %v1335, %v1986
    %v2053 = vmax.f32 %v1989, 0.0
    %v2054 = vmax.f32 %v1990, 0.0
    %v2055 = vmax.f32 %v1991, 0.0
    %v2056 = vmax.f32 %v1992, 0.0
    %v2057 = vmax.f32 %v1993, 0.0
    %v2058 = vmax.f32 %v1994, 0.0
    %v2059 = vmax.f32 %v1995, 0.0
    %v2060 = vmax.f32 %v1996, 0.0
    %v2061 = vmax.f32 %v1997, 0.0
    %v2062 = vmax.f32 %v1998, 0.0
    %v2063 = vmax.f32 %v1999, 0.0
    %v2064 = vmax.f32 %v2000, 0.0
    %v2065 = vmax.f32 %v2001, 0.0
    %v2066 = vmax.f32 %v2002, 0.0
    %v2067 = vmax.f32 %v2003, 0.0
    %v2068 = vmax.f32 %v2004, 0.0
    %v2069 = vmax.f32 %v2005, 0.0
    %v2070 = vmax.f32 %v2006, 0.0
    %v2071 = vmax.f32 %v2007, 0.0
    %v2072 = vmax.f32 %v2008, 0.0
    %v2073 = vmax.f32 %v2009, 0.0
    %v2074 = vmax.f32 %v2010, 0.0
    %v2075 = vmax.f32 %v2011, 0.0
    %v2076 = vmax.f32 %v2012, 0.0
    %v2077 = vmax.f32 %v2013, 0.0
    %v2078 = vmax.f32 %v2014, 0.0
    %v2079 = vmax.f32 %v2015, 0.0
    %v2080 = vmax.f32 %v2016, 0.0
    %v2081 = vmax.f32 %v2017, 0.0
    %v2082 = vmax.f32 %v2018, 0.0
    %v2083 = vmax.f32 %v2019, 0.0
    %v2084 = vmax.f32 %v2020, 0.0
    %v2085 = vmax.f32 %v2021, 0.0
    %v2086 = vmax.f32 %v2022, 0.0
    %v2087 = vmax.f32 %v2023, 0.0
    %v2088 = vmax.f32 %v2024, 0.0
    %v2089 = vmax.f32 %v2025, 0.0
    %v2090 = vmax.f32 %v2026, 0.0
    %v2091 = vmax.f32 %v2027, 0.0
    %v2092 = vmax.f32 %v2028, 0.0
    %v2093 = vmax.f32 %v2029, 0.0
    %v2094 = vmax.f32 %v2030, 0.0
    %v2095 = vmax.f32 %v2031, 0.0
    %v2096 = vmax.f32 %v2032, 0.0
    %v2097 = vmax.f32 %v2033, 0.0
    %v2098 = vmax.f32 %v2034, 0.0
    %v2099 = vmax.f32 %v2035, 0.0
    %v2100 = vmax.f32 %v2036, 0.0
    %v2101 = vmax.f32 %v2037, 0.0
    %v2102 = vmax.f32 %v2038, 0.0
    %v2103 = vmax.f32 %v2039, 0.0
    %v2104 = vmax.f32 %v2040, 0.0
    %v2105 = vmax.f32 %v2041, 0.0
    %v2106 = vmax.f32 %v2042, 0.0
    %v2107 = vmax.f32 %v2043, 0.0
    %v2108 = vmax.f32 %v2044, 0.0
    %v2109 = vmax.f32 %v2045, 0.0
    %v2110 = vmax.f32 %v2046, 0.0
    %v2111 = vmax.f32 %v2047, 0.0
    %v2112 = vmax.f32 %v2048, 0.0
    %v2113 = vmax.f32 %v2049, 0.0
    %v2114 = vmax.f32 %v2050, 0.0
    %v2115 = vmax.f32 %v2051, 0.0
    %v2116 = vmax.f32 %v2052, 0.0
    %vm2117 = vcmask 261120
    %2118 = vst.msk [vmem:[#allocation2] sm:$0xff] %vm2117, %v2053
    %2119 = vst.msk [vmem:[#allocation2 + $0x8] sm:$0xff] %vm2117, %v2054
    %2120 = vst.msk [vmem:[#allocation2 + $0x10] sm:$0xff] %vm2117, %v2055
    %2121 = vst.msk [vmem:[#allocation2 + $0x18] sm:$0xff] %vm2117, %v2056
    %2122 = vst.msk [vmem:[#allocation2 + $0x20] sm:$0xff] %vm2117, %v2057
    %2123 = vst.msk [vmem:[#allocation2 + $0x28] sm:$0xff] %vm2117, %v2058
    %2124 = vst.msk [vmem:[#allocation2 + $0x30] sm:$0xff] %vm2117, %v2059
    %2125 = vst.msk [vmem:[#allocation2 + $0x38] sm:$0xff] %vm2117, %v2060
    %2126 = vst.msk [vmem:[#allocation2 + $0x40] sm:$0xff] %vm2117, %v2061
    %2127 = vst.msk [vmem:[#allocation2 + $0x48] sm:$0xff] %vm2117, %v2062
    %2128 = vst.msk [vmem:[#allocation2 + $0x50] sm:$0xff] %vm2117, %v2063
    %2129 = vst.msk [vmem:[#allocation2 + $0x58] sm:$0xff] %vm2117, %v2064
    %2130 = vst.msk [vmem:[#allocation2 + $0x60] sm:$0xff] %vm2117, %v2065
    %2131 = vst.msk [vmem:[#allocation2 + $0x68] sm:$0xff] %vm2117, %v2066
    %2132 = vst.msk [vmem:[#allocation2 + $0x70] sm:$0xff] %vm2117, %v2067
    %2133 = vst.msk [vmem:[#allocation2 + $0x78] sm:$0xff] %vm2117, %v2068
    %2134 = vst.msk [vmem:[#allocation2 + $0x80] sm:$0xff] %vm2117, %v2069
    %2135 = vst.msk [vmem:[#allocation2 + $0x88] sm:$0xff] %vm2117, %v2070
    %2136 = vst.msk [vmem:[#allocation2 + $0x90] sm:$0xff] %vm2117, %v2071
    %2137 = vst.msk [vmem:[#allocation2 + $0x98] sm:$0xff] %vm2117, %v2072
    %2138 = vst.msk [vmem:[#allocation2 + $0xa0] sm:$0xff] %vm2117, %v2073
    %2139 = vst.msk [vmem:[#allocation2 + $0xa8] sm:$0xff] %vm2117, %v2074
    %2140 = vst.msk [vmem:[#allocation2 + $0xb0] sm:$0xff] %vm2117, %v2075
    %2141 = vst.msk [vmem:[#allocation2 + $0xb8] sm:$0xff] %vm2117, %v2076
    %2142 = vst.msk [vmem:[#allocation2 + $0xc0] sm:$0xff] %vm2117, %v2077
    %2143 = vst.msk [vmem:[#allocation2 + $0xc8] sm:$0xff] %vm2117, %v2078
    %2144 = vst.msk [vmem:[#allocation2 + $0xd0] sm:$0xff] %vm2117, %v2079
    %2145 = vst.msk [vmem:[#allocation2 + $0xd8] sm:$0xff] %vm2117, %v2080
    %2146 = vst.msk [vmem:[#allocation2 + $0xe0] sm:$0xff] %vm2117, %v2081
    %2147 = vst.msk [vmem:[#allocation2 + $0xe8] sm:$0xff] %vm2117, %v2082
    %2148 = vst.msk [vmem:[#allocation2 + $0xf0] sm:$0xff] %vm2117, %v2083
    %2149 = vst.msk [vmem:[#allocation2 + $0xf8] sm:$0xff] %vm2117, %v2084
    %2150 = vst.msk [vmem:[#allocation2 + $0x100] sm:$0xff] %vm2117, %v2085
    %2151 = vst.msk [vmem:[#allocation2 + $0x108] sm:$0xff] %vm2117, %v2086
    %2152 = vst.msk [vmem:[#allocation2 + $0x110] sm:$0xff] %vm2117, %v2087
    %2153 = vst.msk [vmem:[#allocation2 + $0x118] sm:$0xff] %vm2117, %v2088
    %2154 = vst.msk [vmem:[#allocation2 + $0x120] sm:$0xff] %vm2117, %v2089
    %2155 = vst.msk [vmem:[#allocation2 + $0x128] sm:$0xff] %vm2117, %v2090
    %2156 = vst.msk [vmem:[#allocation2 + $0x130] sm:$0xff] %vm2117, %v2091
    %2157 = vst.msk [vmem:[#allocation2 + $0x138] sm:$0xff] %vm2117, %v2092
    %2158 = vst.msk [vmem:[#allocation2 + $0x140] sm:$0xff] %vm2117, %v2093
    %2159 = vst.msk [vmem:[#allocation2 + $0x148] sm:$0xff] %vm2117, %v2094
    %2160 = vst.msk [vmem:[#allocation2 + $0x150] sm:$0xff] %vm2117, %v2095
    %2161 = vst.msk [vmem:[#allocation2 + $0x158] sm:$0xff] %vm2117, %v2096
    %2162 = vst.msk [vmem:[#allocation2 + $0x160] sm:$0xff] %vm2117, %v2097
    %2163 = vst.msk [vmem:[#allocation2 + $0x168] sm:$0xff] %vm2117, %v2098
    %2164 = vst.msk [vmem:[#allocation2 + $0x170] sm:$0xff] %vm2117, %v2099
    %2165 = vst.msk [vmem:[#allocation2 + $0x178] sm:$0xff] %vm2117, %v2100
    %2166 = vst.msk [vmem:[#allocation2 + $0x180] sm:$0xff] %vm2117, %v2101
    %2167 = vst.msk [vmem:[#allocation2 + $0x188] sm:$0xff] %vm2117, %v2102
    %2168 = vst.msk [vmem:[#allocation2 + $0x190] sm:$0xff] %vm2117, %v2103
    %2169 = vst.msk [vmem:[#allocation2 + $0x198] sm:$0xff] %vm2117, %v2104
    %2170 = vst.msk [vmem:[#allocation2 + $0x1a0] sm:$0xff] %vm2117, %v2105
    %2171 = vst.msk [vmem:[#allocation2 + $0x1a8] sm:$0xff] %vm2117, %v2106
    %2172 = vst.msk [vmem:[#allocation2 + $0x1b0] sm:$0xff] %vm2117, %v2107
    %2173 = vst.msk [vmem:[#allocation2 + $0x1b8] sm:$0xff] %vm2117, %v2108
    %2174 = vst.msk [vmem:[#allocation2 + $0x1c0] sm:$0xff] %vm2117, %v2109
    %2175 = vst.msk [vmem:[#allocation2 + $0x1c8] sm:$0xff] %vm2117, %v2110
    %2176 = vst.msk [vmem:[#allocation2 + $0x1d0] sm:$0xff] %vm2117, %v2111
    %2177 = vst.msk [vmem:[#allocation2 + $0x1d8] sm:$0xff] %vm2117, %v2112
    %2178 = vst.msk [vmem:[#allocation2 + $0x1e0] sm:$0xff] %vm2117, %v2113
    %2179 = vst.msk [vmem:[#allocation2 + $0x1e8] sm:$0xff] %vm2117, %v2114
    %2180 = vst.msk [vmem:[#allocation2 + $0x1f0] sm:$0xff] %vm2117, %v2115
    %2181 = vst.msk [vmem:[#allocation2 + $0x1f8] sm:$0xff] %vm2117, %v2116
    // Predicated region
    $region34: #{bottleneck_pallas.3} parent=1 // pred_check
      _
    $region35: #{bottleneck_pallas.3} parent=1 // pred_check_branch
      %2183 = sbr.rel (0) target = $region37
    $region36: #{bottleneck_pallas.3} parent=1 // pred_region
      %s2185 = ssub.s32 8192, 8192
      %2186 = vsyncadd [#allocation3], %s2185
      %s2187 = sshll.u32 [#allocation2], 4
      %s2188 = int_to_ptr.vmem [resolvable:$true] %s2187
      %2193 = dma.vmem_to_hbm [thread:$0]  %s2188, 8192, %s8, [#allocation3], 128, 128, 8
    $region37: #{bottleneck_pallas.3} parent=1 // pred_fallthru
      _
    // Predicated region
    $region38: #{bottleneck_pallas.3} parent=1 // pred_check
      _
    $region39: #{bottleneck_pallas.3} parent=1 // pred_check_branch
      %2195 = sbr.rel (0) target = $region41
    $region40: #{bottleneck_pallas.3} parent=1 // pred_region
      %2196 = dma.done [#allocation3], 8192
    $region41: #{bottleneck_pallas.3} parent=1 // pred_fallthru
      _
    %2197 = vsyncpa [#allocation3], 1

</llo_original>
